<compile_context>
chip_gen: v7x
topology: tpu7x:2x2x1
jax: 0.10.0
libtpu: 0.0.40
codegen_flags: <defaults>
</compile_context>

<pallas_src>
import functools

import jax
import jax.numpy as jnp
from jax.experimental import pallas as pl
from jax.experimental.pallas import tpu as pltpu


# --------------------------------------------------------------------------
# Kernel
# --------------------------------------------------------------------------
def encoder_kernel(x_ref,                     # (R, 6)   f32,  R = TG * N
                   w1_ref, b1_ref,            # (6,128) bf16 , (1,128) f32
                   w2_ref,                    # (128,256) bf16      (b2 folded)
                   w3g_ref, w3f_ref, b3_ref,  # (256,512)x2 bf16 , (1,512) f32
                   w4_ref, b4_ref,            # (512,C) bf16 , (1,C) f32
                   out_ref,                   # (TG, C) f32
                   *, n):
    r = x_ref.shape[0]
    tg = r // n
    bf16 = jnp.bfloat16

    # All TG groups share the pointwise (1x1-conv) layers -> one big matmul.
    x = x_ref[...].astype(bf16)                                          # (R,6)

    # first_conv: Conv1d(6,128,1) + BN (folded) + ReLU, fused with the bf16
    # downcast so only the bf16 activation stays live.
    h = jnp.dot(x, w1_ref[...], preferred_element_type=jnp.float32)
    h = jnp.maximum(h + b1_ref[...], 0.0).astype(bf16)                   # (R,128)

    # Conv1d(128,256,1); its bias b2 is folded into b3' on the host (it
    # commutes through the per-group max and the split matmul).
    feat = jnp.dot(h, w2_ref[...], preferred_element_type=jnp.float32)   # (R,256)

    # per-group max over points -> global feature (without b2, see above)
    feat_g = jnp.max(feat.reshape(tg, n, feat.shape[-1]), axis=1)        # (TG,256)
    feat_b = feat.astype(bf16)                                           # (R,256)

    # second_conv layer 1 with split weights (replaces concat + 512x512 GEMM):
    #   cat([global, feat]) @ w3  ==  feat_g @ w3[:256]  +  feat @ w3[256:]
    g_term = jnp.dot(feat_g.astype(bf16), w3g_ref[...],
                     preferred_element_type=jnp.float32) + b3_ref[...]   # (TG,512)
    f_term = jnp.dot(feat_b, w3f_ref[...],
                     preferred_element_type=jnp.float32)                 # (R,512)
    h2 = jnp.maximum(f_term.reshape(tg, n, -1) + g_term[:, None, :],
                     0.0).astype(bf16)                                   # (TG,N,512)

    # Conv1d(512,C,1); b4 is added after the max (commutes with per-point max)
    o = jnp.dot(h2.reshape(r, h2.shape[-1]), w4_ref[...],
                preferred_element_type=jnp.float32)                      # (R,C)
    out_ref[...] = jnp.max(o.reshape(tg, n, -1), axis=1) + b4_ref[...]   # (TG,C)


# --------------------------------------------------------------------------
# Tiling / VMEM budgeting
# --------------------------------------------------------------------------
def _tpu_budget():
    """(target rows per grid step, vmem_limit_bytes) per TPU generation.

    Default is v7x-safe (64 MiB physical VMEM): ~2048 rows, 48 MiB scoped
    limit.  If the chip reports a large VMEM (v5e/v6e: 128 MiB) go bigger."""
    target_rows, vmem_limit = 2048, 48 * 1024 * 1024
    try:
        cap = getattr(pltpu.get_tpu_info(), "vmem_capacity_bytes", 0) or 0
        if cap >= 100 * 1024 * 1024:
            target_rows, vmem_limit = 4096, 80 * 1024 * 1024
    except Exception:
        pass
    return target_rows, vmem_limit


def _choose_group_tile(n, bg, target_rows):
    """Groups per grid step: ~target_rows matmul rows (amortizes the ~0.35us
    per-step pipeline overhead, keeps MXU rows full), always a multiple of 8
    (sublane-dense (TG, C) stores / non-ragged x block), and capped at
    ceil(BG/2) rounded up to 8 so there are >= 2 grid steps when there is
    enough work (v7x megacore sharding over its 2 TensorCores)."""
    tg = max(8, (target_rows // max(n, 1)) // 8 * 8)
    half = -(-bg // 2)                       # ceil(bg / 2)
    half8 = ((half + 7) // 8) * 8
    return max(8, min(tg, half8))


# --------------------------------------------------------------------------
# Wrapper
# --------------------------------------------------------------------------
def encoder_forward(point_groups, params, encoder_channel, group_tile=None):
    """point_groups: (B, G, N, 6) float32 -> (B, G, encoder_channel) float32."""
    bs, g, n, c_in = point_groups.shape
    assert c_in == 6
    C = encoder_channel
    bg = bs * g
    eps = 1e-5

    (w1, b1, g1, be1, m1, v1, w2, b2,
     w3, b3, g2, be2, m2, v2, w4, b4) = params

    # ---- host-side folding (eval-mode BN; exact algebra) ----
    s1 = g1 / jnp.sqrt(v1 + eps)
    t1 = be1 - m1 * s1
    w1f = w1 * s1[None, :]                       # (6,128)
    b1f = (b1 * s1 + t1).reshape(1, -1)          # (1,128)

    s2 = g2 / jnp.sqrt(v2 + eps)
    t2 = be2 - m2 * s2
    w3s = w3 * s2[None, :]                       # (512,512)
    w3g_, w3f_ = w3s[:256], w3s[256:]            # global / per-point halves
    # fold b2 through the max + split matmul, and BN into b3:
    b3f = (b3 * s2 + t2 + b2 @ w3g_ + b2 @ w3f_).reshape(1, -1)   # (1,512)
    b4r = b4.reshape(1, -1)                      # (1,C), added after the max

    # bf16 weights for the MXU (f32 accumulation inside the kernel)
    bf16 = jnp.bfloat16
    w1b, w2b, w3gb, w3fb, w4b = (w1f.astype(bf16), w2.astype(bf16),
                                 w3g_.astype(bf16), w3f_.astype(bf16),
                                 w4.astype(bf16))

    # ---- group tiling ----
    target_rows, vmem_limit = _tpu_budget()
    tg = (group_tile if group_tile is not None
          else _choose_group_tile(n, bg, target_rows))
    grid = pl.cdiv(bg, tg)
    bg_pad = grid * tg

    # x as a flat 2-D (rows, 6) array: no host-side 6->8 channel pad / copy.
    # Padded groups (only when BG % TG != 0) are independent and sliced off,
    # so no -inf handling is needed.
    x = point_groups.reshape(bg * n, 6)
    if bg_pad != bg:
        x = jnp.pad(x, ((0, (bg_pad - bg) * n), (0, 0)))

    const = lambda i: (0, 0)        # weights/biases: same block every step
    once = pl.Buffered(1)           # constant-index inputs: single buffer

    kernel = functools.partial(encoder_kernel, n=n)

    out = pl.pallas_call(
        kernel,
        out_shape=jax.ShapeDtypeStruct((bg_pad, C), jnp.float32),
        grid_spec=pltpu.PrefetchScalarGridSpec(
            num_scalar_prefetch=0,
            grid=(grid,),
            in_specs=[
                pl.BlockSpec((tg * n, 6), lambda i: (i, 0)),            # x
                pl.BlockSpec((6, 128), const, pipeline_mode=once),      # w1
                pl.BlockSpec((1, 128), const, pipeline_mode=once),      # b1
                pl.BlockSpec((128, 256), const, pipeline_mode=once),    # w2
                pl.BlockSpec((256, 512), const, pipeline_mode=once),    # w3g
                pl.BlockSpec((256, 512), const, pipeline_mode=once),    # w3f
                pl.BlockSpec((1, 512), const, pipeline_mode=once),      # b3
                pl.BlockSpec((512, C), const, pipeline_mode=once),      # w4
                pl.BlockSpec((1, C), const, pipeline_mode=once),        # b4
            ],
            out_specs=pl.BlockSpec((tg, C), lambda i: (i, 0)),
        ),
        compiler_params=pltpu.CompilerParams(
            dimension_semantics=("parallel",),
            vmem_limit_bytes=vmem_limit),
    )(x, w1b, b1f, w2b, w3gb, w3fb, b3f, w4b, b4r)

    return out[:bg].reshape(bs, g, C)


# --------------------------------------------------------------------------
# Synthetic parameters + pure-JAX reference (mirrors the PyTorch module)
# --------------------------------------------------------------------------
def make_params(key, encoder_channel):
    """Raw parameters matching the nn.Module shapes (Conv1d weights stored as
    (ci, co) so conv(kernel=1) == x @ W); BatchNorm stored as gamma/beta/
    running_mean/running_var (non-trivial values to exercise the folding)."""
    C = encoder_channel
    ks = jax.random.split(key, 10)

    def conv_w(k, ci, co):
        return jax.random.normal(k, (ci, co), jnp.float32) * (1.0 / ci) ** 0.5

    def conv_b(k, co):
        return jax.random.normal(k, (co,), jnp.float32) * 0.02

    def bn(k, co):
        kg, kb, km, kv = jax.random.split(k, 4)
        gamma = 1.0 + 0.1 * jax.random.normal(kg, (co,), jnp.float32)
        beta = 0.1 * jax.random.normal(kb, (co,), jnp.float32)
        mean = 0.1 * jax.random.normal(km, (co,), jnp.float32)
        var = jax.random.uniform(kv, (co,), jnp.float32, minval=0.5, maxval=1.5)
        return gamma, beta, mean, var

    w1, b1 = conv_w(ks[0], 6, 128), conv_b(ks[1], 128)
    g1, be1, m1, v1 = bn(ks[2], 128)
    w2, b2 = conv_w(ks[3], 128, 256), conv_b(ks[4], 256)
    w3, b3 = conv_w(ks[5], 512, 512), conv_b(ks[6], 512)
    g2, be2, m2, v2 = bn(ks[7], 512)
    w4, b4 = conv_w(ks[8], 512, C), conv_b(ks[9], C)
    return (w1, b1, g1, be1, m1, v1, w2, b2,
            w3, b3, g2, be2, m2, v2, w4, b4)


def encoder_reference(point_groups, params, encoder_channel):
    """Pure-JAX f32 reference mirroring the PyTorch forward (eval-mode BN)."""
    (w1, b1, g1, be1, m1, v1, w2, b2,
     w3, b3, g2, be2, m2, v2, w4, b4) = params
    eps = 1e-5
    bs, g, n, _ = point_groups.shape
    x = point_groups.reshape(bs * g, n, 6)
    h = x @ w1 + b1
    h = (h - m1) * (g1 / jnp.sqrt(v1 + eps)) + be1
    h = jnp.maximum(h, 0.0)
    f = h @ w2 + b2                                   # (BG, N, 256)
    fg = jnp.max(f, axis=1, keepdims=True)            # (BG, 1, 256)
    cat = jnp.concatenate([jnp.broadcast_to(fg, f.shape), f], axis=-1)
    h2 = cat @ w3 + b3
    h2 = (h2 - m2) * (g2 / jnp.sqrt(v2 + eps)) + be2
    h2 = jnp.maximum(h2, 0.0)
    o = h2 @ w4 + b4                                  # (BG, N, C)
    return jnp.max(o, axis=1).reshape(bs, g, encoder_channel)


# --------------------------------------------------------------------------
if __name__ == "__main__":
    B, G, N = 2, 4, 32
    ENCODER_CHANNEL = 128

    key = jax.random.PRNGKey(0)
    k_x, k_p = jax.random.split(key)
    point_groups = jax.random.normal(k_x, (B, G, N, 6), jnp.float32)
    params = make_params(k_p, ENCODER_CHANNEL)

    out = encoder_forward(point_groups, params, ENCODER_CHANNEL)
    out = jax.block_until_ready(out)

    ref = encoder_reference(point_groups, params, ENCODER_CHANNEL)
    assert out.shape == (B, G, ENCODER_CHANNEL)
    # bf16 matmuls (f32 accumulation) vs f32 reference -> ~1e-2 relative error
    max_err = float(jnp.max(jnp.abs(out - ref)))
    assert jnp.allclose(out, ref, atol=3e-2, rtol=3e-2), (
        f"mismatch vs reference: max abs err {max_err:.4e}")

    print("KERNEL_OK")
</pallas_src>

<mosaic_0001>
module attributes {stable_mosaic.version = 11 : i64} {
  func.func @encoder_kernel(%arg0: i32, %arg1: memref<256x6xf32, #tpu.memory_space<vmem>>, %arg2: memref<6x128xbf16, #tpu.memory_space<vmem>>, %arg3: memref<1x128xf32, #tpu.memory_space<vmem>>, %arg4: memref<128x256xbf16, #tpu.memory_space<vmem>>, %arg5: memref<256x512xbf16, #tpu.memory_space<vmem>>, %arg6: memref<256x512xbf16, #tpu.memory_space<vmem>>, %arg7: memref<1x512xf32, #tpu.memory_space<vmem>>, %arg8: memref<512x128xbf16, #tpu.memory_space<vmem>>, %arg9: memref<1x128xf32, #tpu.memory_space<vmem>>, %arg10: memref<8x128xf32, #tpu.memory_space<vmem>>) attributes {dimension_semantics = [#tpu.dimension_semantics<parallel>], iteration_bounds = array<i64: 1>, scalar_prefetch = 0 : i64, scratch_operands = 0 : i64, tpu.core_type = #tpu.core_type<tc>, window_params = [{transform_indices = @transform_0, window_bounds = array<i64: 256, 6>}, {pipeline_mode = #tpu.pipeline_mode<synchronous>, transform_indices = @transform_1, window_bounds = array<i64: 6, 128>}, {pipeline_mode = #tpu.pipeline_mode<synchronous>, transform_indices = @transform_2, window_bounds = array<i64: 1, 128>}, {pipeline_mode = #tpu.pipeline_mode<synchronous>, transform_indices = @transform_3, window_bounds = array<i64: 128, 256>}, {pipeline_mode = #tpu.pipeline_mode<synchronous>, transform_indices = @transform_4, window_bounds = array<i64: 256, 512>}, {pipeline_mode = #tpu.pipeline_mode<synchronous>, transform_indices = @transform_5, window_bounds = array<i64: 256, 512>}, {pipeline_mode = #tpu.pipeline_mode<synchronous>, transform_indices = @transform_6, window_bounds = array<i64: 1, 512>}, {pipeline_mode = #tpu.pipeline_mode<synchronous>, transform_indices = @transform_7, window_bounds = array<i64: 512, 128>}, {pipeline_mode = #tpu.pipeline_mode<synchronous>, transform_indices = @transform_8, window_bounds = array<i64: 1, 128>}, {transform_indices = @transform_9, window_bounds = array<i64: 8, 128>}]} {
    %c0 = arith.constant 0 : index
    %c0_0 = arith.constant 0 : index
    %0 = vector.load %arg1[%c0, %c0_0] : memref<256x6xf32, #tpu.memory_space<vmem>>, vector<256x6xf32>
    %1 = arith.truncf %0 : vector<256x6xf32> to vector<256x6xbf16>
    %c0_1 = arith.constant 0 : index
    %c0_2 = arith.constant 0 : index
    %2 = vector.load %arg2[%c0_1, %c0_2] : memref<6x128xbf16, #tpu.memory_space<vmem>>, vector<6x128xbf16>
    %cst = arith.constant dense<0.000000e+00> : vector<256x128xf32>
    %3 = tpu.matmul %1, %2, %cst {dimension_numbers = #tpu.dot_dimension_numbers<[1], [0], [0], [1], [0, 0, 1, 1], [], []>} : vector<256x6xbf16>, vector<6x128xbf16>, vector<256x128xf32> -> vector<256x128xf32>
    %c0_3 = arith.constant 0 : index
    %c0_4 = arith.constant 0 : index
    %4 = vector.load %arg3[%c0_3, %c0_4] : memref<1x128xf32, #tpu.memory_space<vmem>>, vector<1x128xf32>
    %5 = vector.broadcast %4 : vector<1x128xf32> to vector<256x128xf32>
    %6 = arith.addf %3, %5 : vector<256x128xf32>
    %cst_5 = arith.constant 0.000000e+00 : f32
    %7 = vector.broadcast %cst_5 : f32 to vector<256x128xf32>
    %8 = arith.maximumf %6, %7 : vector<256x128xf32>
    %9 = arith.truncf %8 : vector<256x128xf32> to vector<256x128xbf16>
    %c0_6 = arith.constant 0 : index
    %c0_7 = arith.constant 0 : index
    %10 = vector.load %arg4[%c0_6, %c0_7] : memref<128x256xbf16, #tpu.memory_space<vmem>>, vector<128x256xbf16>
    %cst_8 = arith.constant dense<0.000000e+00> : vector<256x256xf32>
    %11 = tpu.matmul %9, %10, %cst_8 {dimension_numbers = #tpu.dot_dimension_numbers<[1], [0], [0], [1], [0, 0, 1, 1], [], []>} : vector<256x128xbf16>, vector<128x256xbf16>, vector<256x256xf32> -> vector<256x256xf32>
    %12 = vector.shape_cast %11 : vector<256x256xf32> to vector<8x32x256xf32>
    %cst_9 = arith.constant dense<0xFF800000> : vector<8x256xf32>
    %13 = vector.multi_reduction <maximumf>, %12, %cst_9 [1] : vector<8x32x256xf32> to vector<8x256xf32>
    %14 = arith.truncf %11 : vector<256x256xf32> to vector<256x256xbf16>
    %15 = arith.truncf %13 : vector<8x256xf32> to vector<8x256xbf16>
    %c0_10 = arith.constant 0 : index
    %c0_11 = arith.constant 0 : index
    %16 = vector.load %arg5[%c0_10, %c0_11] : memref<256x512xbf16, #tpu.memory_space<vmem>>, vector<256x512xbf16>
    %cst_12 = arith.constant dense<0.000000e+00> : vector<8x512xf32>
    %17 = tpu.matmul %15, %16, %cst_12 {dimension_numbers = #tpu.dot_dimension_numbers<[1], [0], [0], [1], [0, 0, 1, 1], [], []>} : vector<8x256xbf16>, vector<256x512xbf16>, vector<8x512xf32> -> vector<8x512xf32>
    %c0_13 = arith.constant 0 : index
    %c0_14 = arith.constant 0 : index
    %18 = vector.load %arg7[%c0_13, %c0_14] : memref<1x512xf32, #tpu.memory_space<vmem>>, vector<1x512xf32>
    %19 = vector.broadcast %18 : vector<1x512xf32> to vector<8x512xf32>
    %20 = arith.addf %17, %19 : vector<8x512xf32>
    %c0_15 = arith.constant 0 : index
    %c0_16 = arith.constant 0 : index
    %21 = vector.load %arg6[%c0_15, %c0_16] : memref<256x512xbf16, #tpu.memory_space<vmem>>, vector<256x512xbf16>
    %cst_17 = arith.constant dense<0.000000e+00> : vector<256x512xf32>
    %22 = tpu.matmul %14, %21, %cst_17 {dimension_numbers = #tpu.dot_dimension_numbers<[1], [0], [0], [1], [0, 0, 1, 1], [], []>} : vector<256x256xbf16>, vector<256x512xbf16>, vector<256x512xf32> -> vector<256x512xf32>
    %23 = vector.shape_cast %22 : vector<256x512xf32> to vector<8x32x512xf32>
    %24 = vector.shape_cast %20 : vector<8x512xf32> to vector<8x1x512xf32>
    %25 = vector.broadcast %24 : vector<8x1x512xf32> to vector<8x32x512xf32>
    %26 = arith.addf %23, %25 : vector<8x32x512xf32>
    %cst_18 = arith.constant 0.000000e+00 : f32
    %27 = vector.broadcast %cst_18 : f32 to vector<8x32x512xf32>
    %28 = arith.maximumf %26, %27 : vector<8x32x512xf32>
    %29 = arith.truncf %28 : vector<8x32x512xf32> to vector<8x32x512xbf16>
    %30 = vector.shape_cast %29 : vector<8x32x512xbf16> to vector<256x512xbf16>
    %c0_19 = arith.constant 0 : index
    %c0_20 = arith.constant 0 : index
    %31 = vector.load %arg8[%c0_19, %c0_20] : memref<512x128xbf16, #tpu.memory_space<vmem>>, vector<512x128xbf16>
    %cst_21 = arith.constant dense<0.000000e+00> : vector<256x128xf32>
    %32 = tpu.matmul %30, %31, %cst_21 {dimension_numbers = #tpu.dot_dimension_numbers<[1], [0], [0], [1], [0, 0, 1, 1], [], []>} : vector<256x512xbf16>, vector<512x128xbf16>, vector<256x128xf32> -> vector<256x128xf32>
    %33 = vector.shape_cast %32 : vector<256x128xf32> to vector<8x32x128xf32>
    %cst_22 = arith.constant dense<0xFF800000> : vector<8x128xf32>
    %34 = vector.multi_reduction <maximumf>, %33, %cst_22 [1] : vector<8x32x128xf32> to vector<8x128xf32>
    %c0_23 = arith.constant 0 : index
    %c0_24 = arith.constant 0 : index
    %35 = vector.load %arg9[%c0_23, %c0_24] : memref<1x128xf32, #tpu.memory_space<vmem>>, vector<1x128xf32>
    %36 = vector.broadcast %35 : vector<1x128xf32> to vector<8x128xf32>
    %37 = arith.addf %34, %36 : vector<8x128xf32>
    %c0_25 = arith.constant 0 : index
    %c0_26 = arith.constant 0 : index
    %38 = vector.load %arg10[%c0_25, %c0_26] : memref<8x128xf32, #tpu.memory_space<vmem>>, vector<8x128xf32>
    tpu.vector_store %arg10[%c0_25, %c0_26], %37 {strides = array<i32>} : memref<8x128xf32, #tpu.memory_space<vmem>>, vector<8x128xf32>,
    return
  }
  func.func @transform_0(%arg0: i32) -> (i32, i32) {
    %c0_i32 = arith.constant 0 : i32
    %c0_i32_0 = arith.constant 0 : i32
    return %arg0, %c0_i32 : i32, i32
  }
  func.func @transform_1(%arg0: i32) -> (i32, i32) {
    %c0_i32 = arith.constant 0 : i32
    %c0_i32_0 = arith.constant 0 : i32
    %c0_i32_1 = arith.constant 0 : i32
    return %c0_i32, %c0_i32_0 : i32, i32
  }
  func.func @transform_2(%arg0: i32) -> (i32, i32) {
    %c0_i32 = arith.constant 0 : i32
    %c0_i32_0 = arith.constant 0 : i32
    %c0_i32_1 = arith.constant 0 : i32
    return %c0_i32, %c0_i32_0 : i32, i32
  }
  func.func @transform_3(%arg0: i32) -> (i32, i32) {
    %c0_i32 = arith.constant 0 : i32
    %c0_i32_0 = arith.constant 0 : i32
    %c0_i32_1 = arith.constant 0 : i32
    return %c0_i32, %c0_i32_0 : i32, i32
  }
  func.func @transform_4(%arg0: i32) -> (i32, i32) {
    %c0_i32 = arith.constant 0 : i32
    %c0_i32_0 = arith.constant 0 : i32
    %c0_i32_1 = arith.constant 0 : i32
    return %c0_i32, %c0_i32_0 : i32, i32
  }
  func.func @transform_5(%arg0: i32) -> (i32, i32) {
    %c0_i32 = arith.constant 0 : i32
    %c0_i32_0 = arith.constant 0 : i32
    %c0_i32_1 = arith.constant 0 : i32
    return %c0_i32, %c0_i32_0 : i32, i32
  }
  func.func @transform_6(%arg0: i32) -> (i32, i32) {
    %c0_i32 = arith.constant 0 : i32
    %c0_i32_0 = arith.constant 0 : i32
    %c0_i32_1 = arith.constant 0 : i32
    return %c0_i32, %c0_i32_0 : i32, i32
  }
  func.func @transform_7(%arg0: i32) -> (i32, i32) {
    %c0_i32 = arith.constant 0 : i32
    %c0_i32_0 = arith.constant 0 : i32
    %c0_i32_1 = arith.constant 0 : i32
    return %c0_i32, %c0_i32_0 : i32, i32
  }
  func.func @transform_8(%arg0: i32) -> (i32, i32) {
    %c0_i32 = arith.constant 0 : i32
    %c0_i32_0 = arith.constant 0 : i32
    %c0_i32_1 = arith.constant 0 : i32
    return %c0_i32, %c0_i32_0 : i32, i32
  }
  func.func @transform_9(%arg0: i32) -> (i32, i32) {
    %c0_i32 = arith.constant 0 : i32
    %c0_i32_0 = arith.constant 0 : i32
    return %arg0, %c0_i32 : i32, i32
  }
}

</mosaic_0001>

<llo_original>
// kernel: tpu_custom_call.1
$region0: #{tpu_custom_call.1}
  #allocation0 [shape = 'u32[]', space=smem, size = 0x4, offset = 0x4, fixed_abs, tag = 'smem constant byte address 0x4 - core index']
  #allocation1 [shape = 'u32[144,128]{1,0:T(1,128)}', space=vmem, size = 0x12000, scoped, tag = 'internal scratch']
  %s0 = inlined_call_operand.vmem [shape: f32[256,6], index: 0, kind: input, shape index: {}]
  %s1 = inlined_call_operand.vmem [shape: bf16[6,128], index: 1, kind: input, shape index: {}]
  %s2 = inlined_call_operand.vmem [shape: f32[1,128], index: 2, kind: input, shape index: {}]
  %s3 = inlined_call_operand.hbm [shape: bf16[128,256], index: 3, kind: input, shape index: {}]
  %s4 = inlined_call_operand.hbm [shape: bf16[256,512], index: 4, kind: input, shape index: {}]
  %s5 = inlined_call_operand.hbm [shape: bf16[256,512], index: 5, kind: input, shape index: {}]
  %s6 = inlined_call_operand.vmem [shape: f32[1,512], index: 6, kind: input, shape index: {}]
  %s7 = inlined_call_operand.vmem [shape: bf16[512,128], index: 7, kind: input, shape index: {}]
  %s8 = inlined_call_operand.vmem [shape: f32[1,128], index: 8, kind: input, shape index: {}]
  %s9 = inlined_call_operand.hbm [shape: f32[8,128], index: 9, kind: output, shape index: {}]
  %s10 = sld [smem:[#allocation0]]
  $region58: #{tpu_custom_call.1} parent=0
    _
  %s12 = ssub.s32 1, %s10
  %s13 = scalar_select 0, %s12, %s10
  $region1: #{tpu_custom_call.1} parent=0
    #allocation2 [shape = 'u8[65536]{0}', space=vmem, size = 0x10000, scoped, tag = 'input window, operand 3, single buffered']
    #allocation3 [shape = 's32[1]{0}', space=sflag, size = 0x4, scoped, tag = 'scoped memory for tpu_custom_call.1']
    #allocation4 [shape = 's32[1]{0}', space=sflag, size = 0x4, scoped, tag = 'scoped memory for tpu_custom_call.1']
    #allocation5 [shape = 'u8[262144]{0}', space=vmem, size = 0x40000, scoped, tag = 'input window, operand 4, single buffered']
    #allocation6 [shape = 's32[1]{0}', space=sflag, size = 0x4, scoped, tag = 'scoped memory for tpu_custom_call.1']
    #allocation7 [shape = 'u8[262144]{0}', space=vmem, size = 0x40000, scoped, tag = 'input window, operand 5, single buffered']
    #allocation8 [shape = 'u8[4096]{0}', space=vmem, size = 0x1000, scoped, tag = 'output window, operand 0, single buffered']
    %14 = vsyncpa [#allocation3], 0
    %15 = vsyncpa [#allocation6], 0
    %16 = vsyncpa [#allocation4], 0
    // Predicated region
    $region2: #{tpu_custom_call.1} parent=1 // pred_check
      _
    $region3: #{tpu_custom_call.1} parent=1 // pred_check_branch
      %18 = sbr.rel (0) target = $region5
    $region4: #{tpu_custom_call.1} parent=1 // pred_region
      _
    $region5: #{tpu_custom_call.1} parent=1 // pred_fallthru
      _
    // Predicated region
    $region6: #{tpu_custom_call.1} parent=1 // pred_check
      _
    $region7: #{tpu_custom_call.1} parent=1 // pred_check_branch
      %20 = sbr.rel (0) target = $region9
    $region8: #{tpu_custom_call.1} parent=1 // pred_region
      _
    $region9: #{tpu_custom_call.1} parent=1 // pred_fallthru
      _
    // Predicated region
    $region10: #{tpu_custom_call.1} parent=1 // pred_check
      _
    $region11: #{tpu_custom_call.1} parent=1 // pred_check_branch
      %22 = sbr.rel (0) target = $region13
    $region12: #{tpu_custom_call.1} parent=1 // pred_region
      _
    $region13: #{tpu_custom_call.1} parent=1 // pred_fallthru
      _
    // Predicated region
    $region14: #{tpu_custom_call.1} parent=1 // pred_check
      _
    $region15: #{tpu_custom_call.1} parent=1 // pred_check_branch
      %24 = sbr.rel (0) target = $region17
    $region16: #{tpu_custom_call.1} parent=1 // pred_region
      %s26 = ssub.s32 2048, 2048
      %27 = vsyncadd [#allocation3], %s26
      %s28 = sshll.u32 [#allocation2], 4
      %s29 = int_to_ptr.vmem [resolvable:$true] %s28
      %34 = dma.hbm_to_vmem [thread:$0]  %s3, 2048, %s29, [#allocation3], 128, 128, 8
    $region17: #{tpu_custom_call.1} parent=1 // pred_fallthru
      _
    // Predicated region
    $region18: #{tpu_custom_call.1} parent=1 // pred_check
      _
    $region19: #{tpu_custom_call.1} parent=1 // pred_check_branch
      %36 = sbr.rel (0) target = $region21
    $region20: #{tpu_custom_call.1} parent=1 // pred_region
      %s38 = ssub.s32 8192, 8192
      %39 = vsyncadd [#allocation6], %s38
      %s40 = sshll.u32 [#allocation5], 4
      %s41 = int_to_ptr.vmem [resolvable:$true] %s40
      %46 = dma.hbm_to_vmem [thread:$0]  %s4, 8192, %s41, [#allocation6], 256, 256, 16
    $region21: #{tpu_custom_call.1} parent=1 // pred_fallthru
      _
    // Predicated region
    $region22: #{tpu_custom_call.1} parent=1 // pred_check
      _
    $region23: #{tpu_custom_call.1} parent=1 // pred_check_branch
      %48 = sbr.rel (0) target = $region25
    $region24: #{tpu_custom_call.1} parent=1 // pred_region
      %s50 = ssub.s32 8192, 8192
      %51 = vsyncadd [#allocation6], %s50
      %s52 = sshll.u32 [#allocation7], 4
      %s53 = int_to_ptr.vmem [resolvable:$true] %s52
      %58 = dma.hbm_to_vmem [thread:$0]  %s5, 8192, %s53, [#allocation6], 256, 256, 16
    $region25: #{tpu_custom_call.1} parent=1 // pred_fallthru
      _
    // Predicated region
    $region26: #{tpu_custom_call.1} parent=1 // pred_check
      _
    $region27: #{tpu_custom_call.1} parent=1 // pred_check_branch
      %60 = sbr.rel (0) target = $region29
    $region28: #{tpu_custom_call.1} parent=1 // pred_region
      _
    $region29: #{tpu_custom_call.1} parent=1 // pred_fallthru
      _
    // Predicated region
    $region30: #{tpu_custom_call.1} parent=1 // pred_check
      _
    $region31: #{tpu_custom_call.1} parent=1 // pred_check_branch
      %62 = sbr.rel (0) target = $region33
    $region32: #{tpu_custom_call.1} parent=1 // pred_region
      _
    $region33: #{tpu_custom_call.1} parent=1 // pred_fallthru
      _
    // Predicated region
    $region34: #{tpu_custom_call.1} parent=1 // pred_check
      _
    $region35: #{tpu_custom_call.1} parent=1 // pred_check_branch
      %64 = sbr.rel (0) target = $region37
    $region36: #{tpu_custom_call.1} parent=1 // pred_region
      _
    $region37: #{tpu_custom_call.1} parent=1 // pred_fallthru
      _
    // Predicated region
    $region38: #{tpu_custom_call.1} parent=1 // pred_check
      _
    $region39: #{tpu_custom_call.1} parent=1 // pred_check_branch
      %66 = sbr.rel (0) target = $region41
    $region40: #{tpu_custom_call.1} parent=1 // pred_region
      %67 = dma.done [#allocation3], 2048
    $region41: #{tpu_custom_call.1} parent=1 // pred_fallthru
      _
    // Predicated region
    $region42: #{tpu_custom_call.1} parent=1 // pred_check
      _
    $region43: #{tpu_custom_call.1} parent=1 // pred_check_branch
      %69 = sbr.rel (0) target = $region45
    $region44: #{tpu_custom_call.1} parent=1 // pred_region
      %70 = dma.done [#allocation6], 8192
    $region45: #{tpu_custom_call.1} parent=1 // pred_fallthru
      _
    // Predicated region
    $region46: #{tpu_custom_call.1} parent=1 // pred_check
      _
    $region47: #{tpu_custom_call.1} parent=1 // pred_check_branch
      %72 = sbr.rel (0) target = $region49
    $region48: #{tpu_custom_call.1} parent=1 // pred_region
      %73 = dma.done [#allocation6], 8192
    $region49: #{tpu_custom_call.1} parent=1 // pred_fallthru
      _
    %v75 = vld [vmem:[%s0] sm:$0xff]
    %v76 = vld [vmem:[%s0 + $0x8] sm:$0xff]
    %v77 = vld [vmem:[%s0 + $0x10] sm:$0xff]
    %v78 = vld [vmem:[%s0 + $0x18] sm:$0xff]
    %v79 = vld [vmem:[%s0 + $0x20] sm:$0xff]
    %v80 = vld [vmem:[%s0 + $0x28] sm:$0xff]
    %v81 = vld [vmem:[%s0 + $0x30] sm:$0xff]
    %v82 = vld [vmem:[%s0 + $0x38] sm:$0xff]
    %v83 = vld [vmem:[%s0 + $0x40] sm:$0xff]
    %v84 = vld [vmem:[%s0 + $0x48] sm:$0xff]
    %v85 = vld [vmem:[%s0 + $0x50] sm:$0xff]
    %v86 = vld [vmem:[%s0 + $0x58] sm:$0xff]
    %v87 = vld [vmem:[%s0 + $0x60] sm:$0xff]
    %v88 = vld [vmem:[%s0 + $0x68] sm:$0xff]
    %v89 = vld [vmem:[%s0 + $0x70] sm:$0xff]
    %v90 = vld [vmem:[%s0 + $0x78] sm:$0xff]
    %v91 = vld [vmem:[%s0 + $0x80] sm:$0xff]
    %v92 = vld [vmem:[%s0 + $0x88] sm:$0xff]
    %v93 = vld [vmem:[%s0 + $0x90] sm:$0xff]
    %v94 = vld [vmem:[%s0 + $0x98] sm:$0xff]
    %v95 = vld [vmem:[%s0 + $0xa0] sm:$0xff]
    %v96 = vld [vmem:[%s0 + $0xa8] sm:$0xff]
    %v97 = vld [vmem:[%s0 + $0xb0] sm:$0xff]
    %v98 = vld [vmem:[%s0 + $0xb8] sm:$0xff]
    %v99 = vld [vmem:[%s0 + $0xc0] sm:$0xff]
    %v100 = vld [vmem:[%s0 + $0xc8] sm:$0xff]
    %v101 = vld [vmem:[%s0 + $0xd0] sm:$0xff]
    %v102 = vld [vmem:[%s0 + $0xd8] sm:$0xff]
    %v103 = vld [vmem:[%s0 + $0xe0] sm:$0xff]
    %v104 = vld [vmem:[%s0 + $0xe8] sm:$0xff]
    %v105 = vld [vmem:[%s0 + $0xf0] sm:$0xff]
    %v106 = vld [vmem:[%s0 + $0xf8] sm:$0xff]
    %v107 = vpack.c.bf16 %v76, %v75
    %v108 = vpack.c.bf16 %v78, %v77
    %v109 = vpack.c.bf16 %v80, %v79
    %v110 = vpack.c.bf16 %v82, %v81
    %v111 = vpack.c.bf16 %v84, %v83
    %v112 = vpack.c.bf16 %v86, %v85
    %v113 = vpack.c.bf16 %v88, %v87
    %v114 = vpack.c.bf16 %v90, %v89
    %v115 = vpack.c.bf16 %v92, %v91
    %v116 = vpack.c.bf16 %v94, %v93
    %v117 = vpack.c.bf16 %v96, %v95
    %v118 = vpack.c.bf16 %v98, %v97
    %v119 = vpack.c.bf16 %v100, %v99
    %v120 = vpack.c.bf16 %v102, %v101
    %v121 = vpack.c.bf16 %v104, %v103
    %v122 = vpack.c.bf16 %v106, %v105
    %v123 = vld [vmem:[%s1] sm:$0x7]
    %v124 = vld [vmem:[%s2] sm:$0x1]
    %v126 = vlaneseq
    %v127 = vshrl.u32 %v126, 7
    %v128 = vsub.s32 0, %v127
    %v129 = vrot.slane %v124, %v128
    %vm131 = vcmask 48128
    %v133 = vsel %vm131, %v107, 0
    %v136 = vsel %vm131, %v108, 0
    %v139 = vsel %vm131, %v109, 0
    %v142 = vsel %vm131, %v110, 0
    %v145 = vsel %vm131, %v111, 0
    %v148 = vsel %vm131, %v112, 0
    %v151 = vsel %vm131, %v113, 0
    %v154 = vsel %vm131, %v114, 0
    %v157 = vsel %vm131, %v115, 0
    %v160 = vsel %vm131, %v116, 0
    %v163 = vsel %vm131, %v117, 0
    %v166 = vsel %vm131, %v118, 0
    %v169 = vsel %vm131, %v119, 0
    %v172 = vsel %vm131, %v120, 0
    %v175 = vsel %vm131, %v121, 0
    %v178 = vsel %vm131, %v122, 0
    %vm180 = vcmask 1042432
    %v182 = vsel %vm180, %v123, 0
    %184 = vmatprep.subr.bf16.mxu0 0
    %185 = vmatpush1.bf16.msra.mxu0 %v182
    %186 = vmatprep.subr.bf16.mxu0 0
    %187 = vmatpush1.bf16.msra.mxu0 0
    %188 = vmatprep.subr.bf16.mxu0 0
    %189 = vmatpush1.bf16.msra.mxu0 0
    %190 = vmatprep.subr.bf16.mxu0 0
    %191 = vmatpush1.bf16.msra.mxu0 0
    %192 = vmatprep.subr.bf16.mxu0 0
    %193 = vmatpush1.bf16.msra.mxu0 0
    %194 = vmatprep.subr.bf16.mxu0 0
    %195 = vmatpush1.bf16.msra.mxu0 0
    %196 = vmatprep.subr.bf16.mxu0 0
    %197 = vmatpush1.bf16.msra.mxu0 0
    %198 = vmatprep.subr.bf16.mxu0 0
    %199 = vmatpush1.bf16.msra.mxu0 0
    %200 = vmatprep.subr.bf16.mxu0 0
    %201 = vmatpush1.bf16.msra.mxu0 0
    %202 = vmatprep.subr.bf16.mxu0 0
    %203 = vmatpush1.bf16.msra.mxu0 0
    %204 = vmatprep.subr.bf16.mxu0 0
    %205 = vmatpush1.bf16.msra.mxu0 0
    %206 = vmatprep.subr.bf16.mxu0 0
    %207 = vmatpush1.bf16.msra.mxu0 0
    %208 = vmatprep.subr.bf16.mxu0 0
    %209 = vmatpush1.bf16.msra.mxu0 0
    %210 = vmatprep.subr.bf16.mxu0 0
    %211 = vmatpush1.bf16.msra.mxu0 0
    %212 = vmatprep.subr.bf16.mxu0 0
    %213 = vmatpush1.bf16.msra.mxu0 0
    %214 = vmatprep.subr.bf16.mxu0 0
    %215 = vmatpush1.bf16.msra.mxu0 0
    %216 = vmatprep.mubr.bf16.mxu0 0
    %217 = vmatmul.mubr.bf16.gmra.mrb[0].mxu0 %v133
    %v218 = vpop.f32.mrb[0].mxu0
    %v219 = vadd.f32 %v129, %v218
    %v220 = vpop.f32.mrb[0].mxu0
    %v221 = vpop.f32.mrb[0].mxu0
    %v222 = vadd.f32 %v129, %v221
    %v223 = vpop.f32.mrb[0].mxu0
    %224 = vmatprep.mubr.bf16.mxu0 0
    %225 = vmatmul.mubr.bf16.gmra.mrb[0].mxu0 %v136
    %v226 = vpop.f32.mrb[0].mxu0
    %v227 = vadd.f32 %v129, %v226
    %v228 = vpop.f32.mrb[0].mxu0
    %v229 = vpop.f32.mrb[0].mxu0
    %v230 = vadd.f32 %v129, %v229
    %v231 = vpop.f32.mrb[0].mxu0
    %232 = vmatprep.mubr.bf16.mxu0 0
    %233 = vmatmul.mubr.bf16.gmra.mrb[0].mxu0 %v139
    %v234 = vpop.f32.mrb[0].mxu0
    %v235 = vadd.f32 %v129, %v234
    %v236 = vpop.f32.mrb[0].mxu0
    %v237 = vpop.f32.mrb[0].mxu0
    %v238 = vadd.f32 %v129, %v237
    %v239 = vpop.f32.mrb[0].mxu0
    %240 = vmatprep.mubr.bf16.mxu0 0
    %241 = vmatmul.mubr.bf16.gmra.mrb[0].mxu0 %v142
    %v242 = vpop.f32.mrb[0].mxu0
    %v243 = vadd.f32 %v129, %v242
    %v244 = vpop.f32.mrb[0].mxu0
    %v245 = vpop.f32.mrb[0].mxu0
    %v246 = vadd.f32 %v129, %v245
    %v247 = vpop.f32.mrb[0].mxu0
    %248 = vmatprep.mubr.bf16.mxu0 0
    %249 = vmatmul.mubr.bf16.gmra.mrb[0].mxu0 %v145
    %v250 = vpop.f32.mrb[0].mxu0
    %v251 = vadd.f32 %v129, %v250
    %v252 = vpop.f32.mrb[0].mxu0
    %v253 = vpop.f32.mrb[0].mxu0
    %v254 = vadd.f32 %v129, %v253
    %v255 = vpop.f32.mrb[0].mxu0
    %256 = vmatprep.mubr.bf16.mxu0 0
    %257 = vmatmul.mubr.bf16.gmra.mrb[0].mxu0 %v148
    %v258 = vpop.f32.mrb[0].mxu0
    %v259 = vadd.f32 %v129, %v258
    %v260 = vpop.f32.mrb[0].mxu0
    %v261 = vpop.f32.mrb[0].mxu0
    %v262 = vadd.f32 %v129, %v261
    %v263 = vpop.f32.mrb[0].mxu0
    %264 = vmatprep.mubr.bf16.mxu0 0
    %265 = vmatmul.mubr.bf16.gmra.mrb[0].mxu0 %v151
    %v266 = vpop.f32.mrb[0].mxu0
    %v267 = vadd.f32 %v129, %v266
    %v268 = vpop.f32.mrb[0].mxu0
    %v269 = vpop.f32.mrb[0].mxu0
    %v270 = vadd.f32 %v129, %v269
    %v271 = vpop.f32.mrb[0].mxu0
    %272 = vmatprep.mubr.bf16.mxu0 0
    %273 = vmatmul.mubr.bf16.gmra.mrb[0].mxu0 %v154
    %v274 = vpop.f32.mrb[0].mxu0
    %v275 = vadd.f32 %v129, %v274
    %v276 = vpop.f32.mrb[0].mxu0
    %v277 = vpop.f32.mrb[0].mxu0
    %v278 = vadd.f32 %v129, %v277
    %v279 = vpop.f32.mrb[0].mxu0
    %280 = vmatprep.mubr.bf16.mxu0 0
    %281 = vmatmul.mubr.bf16.gmra.mrb[0].mxu0 %v157
    %v282 = vpop.f32.mrb[0].mxu0
    %v283 = vadd.f32 %v129, %v282
    %v284 = vpop.f32.mrb[0].mxu0
    %v285 = vpop.f32.mrb[0].mxu0
    %v286 = vadd.f32 %v129, %v285
    %v287 = vpop.f32.mrb[0].mxu0
    %288 = vmatprep.mubr.bf16.mxu0 0
    %289 = vmatmul.mubr.bf16.gmra.mrb[0].mxu0 %v160
    %v290 = vpop.f32.mrb[0].mxu0
    %v291 = vadd.f32 %v129, %v290
    %v292 = vpop.f32.mrb[0].mxu0
    %v293 = vpop.f32.mrb[0].mxu0
    %v294 = vadd.f32 %v129, %v293
    %v295 = vpop.f32.mrb[0].mxu0
    %296 = vmatprep.mubr.bf16.mxu0 0
    %297 = vmatmul.mubr.bf16.gmra.mrb[0].mxu0 %v163
    %v298 = vpop.f32.mrb[0].mxu0
    %v299 = vadd.f32 %v129, %v298
    %v300 = vpop.f32.mrb[0].mxu0
    %v301 = vpop.f32.mrb[0].mxu0
    %v302 = vadd.f32 %v129, %v301
    %v303 = vpop.f32.mrb[0].mxu0
    %304 = vmatprep.mubr.bf16.mxu0 0
    %305 = vmatmul.mubr.bf16.gmra.mrb[0].mxu0 %v166
    %v306 = vpop.f32.mrb[0].mxu0
    %v307 = vadd.f32 %v129, %v306
    %v308 = vpop.f32.mrb[0].mxu0
    %v309 = vpop.f32.mrb[0].mxu0
    %v310 = vadd.f32 %v129, %v309
    %v311 = vpop.f32.mrb[0].mxu0
    %312 = vmatprep.mubr.bf16.mxu0 0
    %313 = vmatmul.mubr.bf16.gmra.mrb[0].mxu0 %v169
    %v314 = vpop.f32.mrb[0].mxu0
    %v315 = vadd.f32 %v129, %v314
    %v316 = vpop.f32.mrb[0].mxu0
    %v317 = vpop.f32.mrb[0].mxu0
    %v318 = vadd.f32 %v129, %v317
    %v319 = vpop.f32.mrb[0].mxu0
    %320 = vmatprep.mubr.bf16.mxu0 0
    %321 = vmatmul.mubr.bf16.gmra.mrb[0].mxu0 %v172
    %v322 = vpop.f32.mrb[0].mxu0
    %v323 = vadd.f32 %v129, %v322
    %v324 = vpop.f32.mrb[0].mxu0
    %v325 = vpop.f32.mrb[0].mxu0
    %v326 = vadd.f32 %v129, %v325
    %v327 = vpop.f32.mrb[0].mxu0
    %328 = vmatprep.mubr.bf16.mxu0 0
    %329 = vmatmul.mubr.bf16.gmra.mrb[0].mxu0 %v175
    %v330 = vpop.f32.mrb[0].mxu0
    %v331 = vadd.f32 %v129, %v330
    %v332 = vpop.f32.mrb[0].mxu0
    %v333 = vpop.f32.mrb[0].mxu0
    %v334 = vadd.f32 %v129, %v333
    %v335 = vpop.f32.mrb[0].mxu0
    %336 = vmatprep.mubr.bf16.mxu0 0
    %337 = vmatmul.mubr.bf16.gmra.mrb[0].mxu0 %v178
    %v338 = vpop.f32.mrb[0].mxu0
    %v339 = vadd.f32 %v129, %v338
    %v340 = vpop.f32.mrb[0].mxu0
    %v341 = vpop.f32.mrb[0].mxu0
    %v342 = vadd.f32 %v129, %v341
    %v343 = vpop.f32.mrb[0].mxu0
    %344 = vdwg.mxu0
    %v345 = vmax.f32 %v219, 0.0
    %v346 = vmax.f32 %v222, 0.0
    %v347 = vmax.f32 %v227, 0.0
    %v348 = vmax.f32 %v230, 0.0
    %v349 = vmax.f32 %v235, 0.0
    %v350 = vmax.f32 %v238, 0.0
    %v351 = vmax.f32 %v243, 0.0
    %v352 = vmax.f32 %v246, 0.0
    %v353 = vmax.f32 %v251, 0.0
    %v354 = vmax.f32 %v254, 0.0
    %v355 = vmax.f32 %v259, 0.0
    %v356 = vmax.f32 %v262, 0.0
    %v357 = vmax.f32 %v267, 0.0
    %v358 = vmax.f32 %v270, 0.0
    %v359 = vmax.f32 %v275, 0.0
    %v360 = vmax.f32 %v278, 0.0
    %v361 = vmax.f32 %v283, 0.0
    %v362 = vmax.f32 %v286, 0.0
    %v363 = vmax.f32 %v291, 0.0
    %v364 = vmax.f32 %v294, 0.0
    %v365 = vmax.f32 %v299, 0.0
    %v366 = vmax.f32 %v302, 0.0
    %v367 = vmax.f32 %v307, 0.0
    %v368 = vmax.f32 %v310, 0.0
    %v369 = vmax.f32 %v315, 0.0
    %v370 = vmax.f32 %v318, 0.0
    %v371 = vmax.f32 %v323, 0.0
    %v372 = vmax.f32 %v326, 0.0
    %v373 = vmax.f32 %v331, 0.0
    %v374 = vmax.f32 %v334, 0.0
    %v375 = vmax.f32 %v339, 0.0
    %v376 = vmax.f32 %v342, 0.0
    %v377 = vpack.c.bf16 %v346, %v345
    %v378 = vpack.c.bf16 %v348, %v347
    %v379 = vpack.c.bf16 %v350, %v349
    %v380 = vpack.c.bf16 %v352, %v351
    %v381 = vpack.c.bf16 %v354, %v353
    %v382 = vpack.c.bf16 %v356, %v355
    %v383 = vpack.c.bf16 %v358, %v357
    %v384 = vpack.c.bf16 %v360, %v359
    %v385 = vpack.c.bf16 %v362, %v361
    %v386 = vpack.c.bf16 %v364, %v363
    %v387 = vpack.c.bf16 %v366, %v365
    %v388 = vpack.c.bf16 %v368, %v367
    %v389 = vpack.c.bf16 %v370, %v369
    %v390 = vpack.c.bf16 %v372, %v371
    %v391 = vpack.c.bf16 %v374, %v373
    %v392 = vpack.c.bf16 %v376, %v375
    %v393 = vld [vmem:[#allocation2] sm:$0xff]
    %v394 = vld [vmem:[#allocation2 + $0x8] sm:$0xff]
    %v395 = vld [vmem:[#allocation2 + $0x10] sm:$0xff]
    %v396 = vld [vmem:[#allocation2 + $0x18] sm:$0xff]
    %v397 = vld [vmem:[#allocation2 + $0x20] sm:$0xff]
    %v398 = vld [vmem:[#allocation2 + $0x28] sm:$0xff]
    %v399 = vld [vmem:[#allocation2 + $0x30] sm:$0xff]
    %v400 = vld [vmem:[#allocation2 + $0x38] sm:$0xff]
    %v401 = vld [vmem:[#allocation2 + $0x40] sm:$0xff]
    %v402 = vld [vmem:[#allocation2 + $0x48] sm:$0xff]
    %v403 = vld [vmem:[#allocation2 + $0x50] sm:$0xff]
    %v404 = vld [vmem:[#allocation2 + $0x58] sm:$0xff]
    %v405 = vld [vmem:[#allocation2 + $0x60] sm:$0xff]
    %v406 = vld [vmem:[#allocation2 + $0x68] sm:$0xff]
    %v407 = vld [vmem:[#allocation2 + $0x70] sm:$0xff]
    %v408 = vld [vmem:[#allocation2 + $0x78] sm:$0xff]
    %v425 = vunpack.c.l.b16 %v393
    %v426 = vunpack.c.h.b16 %v393
    %v427 = vunpack.c.l.b16 %v394
    %v428 = vunpack.c.h.b16 %v394
    %v429 = vunpack.c.l.b16 %v395
    %v430 = vunpack.c.h.b16 %v395
    %v431 = vunpack.c.l.b16 %v396
    %v432 = vunpack.c.h.b16 %v396
    %v433 = vunpack.c.l.b16 %v397
    %v434 = vunpack.c.h.b16 %v397
    %v435 = vunpack.c.l.b16 %v398
    %v436 = vunpack.c.h.b16 %v398
    %v437 = vunpack.c.l.b16 %v399
    %v438 = vunpack.c.h.b16 %v399
    %v439 = vunpack.c.l.b16 %v400
    %v440 = vunpack.c.h.b16 %v400
    %v441 = vunpack.c.l.b16 %v401
    %v442 = vunpack.c.h.b16 %v401
    %v443 = vunpack.c.l.b16 %v402
    %v444 = vunpack.c.h.b16 %v402
    %v445 = vunpack.c.l.b16 %v403
    %v446 = vunpack.c.h.b16 %v403
    %v447 = vunpack.c.l.b16 %v404
    %v448 = vunpack.c.h.b16 %v404
    %v449 = vunpack.c.l.b16 %v405
    %v450 = vunpack.c.h.b16 %v405
    %v451 = vunpack.c.l.b16 %v406
    %v452 = vunpack.c.h.b16 %v406
    %v453 = vunpack.c.l.b16 %v407
    %v454 = vunpack.c.h.b16 %v407
    %v455 = vunpack.c.l.b16 %v408
    %v456 = vunpack.c.h.b16 %v408
    %v457 = vpack.c.b16 %v427, %v425
    %v458 = vpack.c.b16 %v428, %v426
    %v459 = vpack.c.b16 %v431, %v429
    %v460 = vpack.c.b16 %v432, %v430
    %v461 = vpack.c.b16 %v435, %v433
    %v462 = vpack.c.b16 %v436, %v434
    %v463 = vpack.c.b16 %v439, %v437
    %v464 = vpack.c.b16 %v440, %v438
    %v465 = vpack.c.b16 %v443, %v441
    %v466 = vpack.c.b16 %v444, %v442
    %v467 = vpack.c.b16 %v447, %v445
    %v468 = vpack.c.b16 %v448, %v446
    %v469 = vpack.c.b16 %v451, %v449
    %v470 = vpack.c.b16 %v452, %v450
    %v471 = vpack.c.b16 %v455, %v453
    %v472 = vpack.c.b16 %v456, %v454
    %489 = vmatprep.subr.bf16.mxu0 %v458
    %490 = vmatpush1.bf16.msra.mxu0 %v457
    %491 = vmatprep.subr.bf16.mxu0 %v460
    %492 = vmatpush1.bf16.msra.mxu0 %v459
    %493 = vmatprep.subr.bf16.mxu0 %v462
    %494 = vmatpush1.bf16.msra.mxu0 %v461
    %495 = vmatprep.subr.bf16.mxu0 %v464
    %496 = vmatpush1.bf16.msra.mxu0 %v463
    %497 = vmatprep.subr.bf16.mxu0 %v466
    %498 = vmatpush1.bf16.msra.mxu0 %v465
    %499 = vmatprep.subr.bf16.mxu0 %v468
    %500 = vmatpush1.bf16.msra.mxu0 %v467
    %501 = vmatprep.subr.bf16.mxu0 %v470
    %502 = vmatpush1.bf16.msra.mxu0 %v469
    %503 = vmatprep.subr.bf16.mxu0 %v472
    %504 = vmatpush1.bf16.msra.mxu0 %v471
    %505 = vmatprep.subr.bf16.mxu0 0
    %506 = vmatpush1.bf16.msra.mxu0 0
    %507 = vmatprep.subr.bf16.mxu0 0
    %508 = vmatpush1.bf16.msra.mxu0 0
    %509 = vmatprep.subr.bf16.mxu0 0
    %510 = vmatpush1.bf16.msra.mxu0 0
    %511 = vmatprep.subr.bf16.mxu0 0
    %512 = vmatpush1.bf16.msra.mxu0 0
    %513 = vmatprep.subr.bf16.mxu0 0
    %514 = vmatpush1.bf16.msra.mxu0 0
    %515 = vmatprep.subr.bf16.mxu0 0
    %516 = vmatpush1.bf16.msra.mxu0 0
    %517 = vmatprep.subr.bf16.mxu0 0
    %518 = vmatpush1.bf16.msra.mxu0 0
    %519 = vmatprep.subr.bf16.mxu0 0
    %520 = vmatpush1.bf16.msra.mxu0 0
    %521 = vmatprep.mubr.bf16.mxu0 0
    %522 = vmatmul.mubr.bf16.gmra.mrb[0].mxu0 %v377
    %v523 = vpop.f32.mrb[0].mxu0
    %v524 = vadd.f32 0.0, %v523
    %v525 = vpop.f32.mrb[0].mxu0
    %v526 = vadd.f32 0.0, %v525
    %v527 = vpop.f32.mrb[0].mxu0
    %v528 = vadd.f32 0.0, %v527
    %v529 = vpop.f32.mrb[0].mxu0
    %v530 = vadd.f32 0.0, %v529
    %531 = vmatprep.mubr.bf16.mxu0 0
    %532 = vmatmul.mubr.bf16.gmra.mrb[0].mxu0 %v378
    %v533 = vpop.f32.mrb[0].mxu0
    %v534 = vadd.f32 0.0, %v533
    %v535 = vpop.f32.mrb[0].mxu0
    %v536 = vadd.f32 0.0, %v535
    %v537 = vpop.f32.mrb[0].mxu0
    %v538 = vadd.f32 0.0, %v537
    %v539 = vpop.f32.mrb[0].mxu0
    %v540 = vadd.f32 0.0, %v539
    %541 = vmatprep.mubr.bf16.mxu0 0
    %542 = vmatmul.mubr.bf16.gmra.mrb[0].mxu0 %v379
    %v543 = vpop.f32.mrb[0].mxu0
    %v544 = vadd.f32 0.0, %v543
    %v545 = vpop.f32.mrb[0].mxu0
    %v546 = vadd.f32 0.0, %v545
    %v547 = vpop.f32.mrb[0].mxu0
    %v548 = vadd.f32 0.0, %v547
    %v549 = vpop.f32.mrb[0].mxu0
    %v550 = vadd.f32 0.0, %v549
    %551 = vmatprep.mubr.bf16.mxu0 0
    %552 = vmatmul.mubr.bf16.gmra.mrb[0].mxu0 %v380
    %v553 = vpop.f32.mrb[0].mxu0
    %v554 = vadd.f32 0.0, %v553
    %v555 = vpop.f32.mrb[0].mxu0
    %v556 = vadd.f32 0.0, %v555
    %v557 = vpop.f32.mrb[0].mxu0
    %v558 = vadd.f32 0.0, %v557
    %v559 = vpop.f32.mrb[0].mxu0
    %v560 = vadd.f32 0.0, %v559
    %561 = vmatprep.mubr.bf16.mxu0 0
    %562 = vmatmul.mubr.bf16.gmra.mrb[0].mxu0 %v381
    %v563 = vpop.f32.mrb[0].mxu0
    %v564 = vadd.f32 0.0, %v563
    %v565 = vpop.f32.mrb[0].mxu0
    %v566 = vadd.f32 0.0, %v565
    %v567 = vpop.f32.mrb[0].mxu0
    %v568 = vadd.f32 0.0, %v567
    %v569 = vpop.f32.mrb[0].mxu0
    %v570 = vadd.f32 0.0, %v569
    %571 = vmatprep.mubr.bf16.mxu0 0
    %572 = vmatmul.mubr.bf16.gmra.mrb[0].mxu0 %v382
    %v573 = vpop.f32.mrb[0].mxu0
    %v574 = vadd.f32 0.0, %v573
    %v575 = vpop.f32.mrb[0].mxu0
    %v576 = vadd.f32 0.0, %v575
    %v577 = vpop.f32.mrb[0].mxu0
    %v578 = vadd.f32 0.0, %v577
    %v579 = vpop.f32.mrb[0].mxu0
    %v580 = vadd.f32 0.0, %v579
    %581 = vmatprep.mubr.bf16.mxu0 0
    %582 = vmatmul.mubr.bf16.gmra.mrb[0].mxu0 %v383
    %v583 = vpop.f32.mrb[0].mxu0
    %v584 = vadd.f32 0.0, %v583
    %v585 = vpop.f32.mrb[0].mxu0
    %v586 = vadd.f32 0.0, %v585
    %v587 = vpop.f32.mrb[0].mxu0
    %v588 = vadd.f32 0.0, %v587
    %v589 = vpop.f32.mrb[0].mxu0
    %v590 = vadd.f32 0.0, %v589
    %591 = vmatprep.mubr.bf16.mxu0 0
    %592 = vmatmul.mubr.bf16.gmra.mrb[0].mxu0 %v384
    %v593 = vpop.f32.mrb[0].mxu0
    %v594 = vadd.f32 0.0, %v593
    %v595 = vpop.f32.mrb[0].mxu0
    %v596 = vadd.f32 0.0, %v595
    %v597 = vpop.f32.mrb[0].mxu0
    %v598 = vadd.f32 0.0, %v597
    %v599 = vpop.f32.mrb[0].mxu0
    %v600 = vadd.f32 0.0, %v599
    %601 = vmatprep.mubr.bf16.mxu0 0
    %602 = vmatmul.mubr.bf16.gmra.mrb[0].mxu0 %v385
    %v603 = vpop.f32.mrb[0].mxu0
    %v604 = vadd.f32 0.0, %v603
    %v605 = vpop.f32.mrb[0].mxu0
    %v606 = vadd.f32 0.0, %v605
    %v607 = vpop.f32.mrb[0].mxu0
    %v608 = vadd.f32 0.0, %v607
    %v609 = vpop.f32.mrb[0].mxu0
    %v610 = vadd.f32 0.0, %v609
    %611 = vmatprep.mubr.bf16.mxu0 0
    %612 = vmatmul.mubr.bf16.gmra.mrb[0].mxu0 %v386
    %v613 = vpop.f32.mrb[0].mxu0
    %v614 = vadd.f32 0.0, %v613
    %v615 = vpop.f32.mrb[0].mxu0
    %v616 = vadd.f32 0.0, %v615
    %v617 = vpop.f32.mrb[0].mxu0
    %v618 = vadd.f32 0.0, %v617
    %v619 = vpop.f32.mrb[0].mxu0
    %v620 = vadd.f32 0.0, %v619
    %621 = vmatprep.mubr.bf16.mxu0 0
    %622 = vmatmul.mubr.bf16.gmra.mrb[0].mxu0 %v387
    %v623 = vpop.f32.mrb[0].mxu0
    %v624 = vadd.f32 0.0, %v623
    %v625 = vpop.f32.mrb[0].mxu0
    %v626 = vadd.f32 0.0, %v625
    %v627 = vpop.f32.mrb[0].mxu0
    %v628 = vadd.f32 0.0, %v627
    %v629 = vpop.f32.mrb[0].mxu0
    %v630 = vadd.f32 0.0, %v629
    %631 = vmatprep.mubr.bf16.mxu0 0
    %632 = vmatmul.mubr.bf16.gmra.mrb[0].mxu0 %v388
    %v633 = vpop.f32.mrb[0].mxu0
    %v634 = vadd.f32 0.0, %v633
    %v635 = vpop.f32.mrb[0].mxu0
    %v636 = vadd.f32 0.0, %v635
    %v637 = vpop.f32.mrb[0].mxu0
    %v638 = vadd.f32 0.0, %v637
    %v639 = vpop.f32.mrb[0].mxu0
    %v640 = vadd.f32 0.0, %v639
    %641 = vmatprep.mubr.bf16.mxu0 0
    %642 = vmatmul.mubr.bf16.gmra.mrb[0].mxu0 %v389
    %v643 = vpop.f32.mrb[0].mxu0
    %v644 = vadd.f32 0.0, %v643
    %v645 = vpop.f32.mrb[0].mxu0
    %v646 = vadd.f32 0.0, %v645
    %v647 = vpop.f32.mrb[0].mxu0
    %v648 = vadd.f32 0.0, %v647
    %v649 = vpop.f32.mrb[0].mxu0
    %v650 = vadd.f32 0.0, %v649
    %651 = vmatprep.mubr.bf16.mxu0 0
    %652 = vmatmul.mubr.bf16.gmra.mrb[0].mxu0 %v390
    %v653 = vpop.f32.mrb[0].mxu0
    %v654 = vadd.f32 0.0, %v653
    %v655 = vpop.f32.mrb[0].mxu0
    %v656 = vadd.f32 0.0, %v655
    %v657 = vpop.f32.mrb[0].mxu0
    %v658 = vadd.f32 0.0, %v657
    %v659 = vpop.f32.mrb[0].mxu0
    %v660 = vadd.f32 0.0, %v659
    %661 = vmatprep.mubr.bf16.mxu0 0
    %662 = vmatmul.mubr.bf16.gmra.mrb[0].mxu0 %v391
    %v663 = vpop.f32.mrb[0].mxu0
    %v664 = vadd.f32 0.0, %v663
    %v665 = vpop.f32.mrb[0].mxu0
    %v666 = vadd.f32 0.0, %v665
    %v667 = vpop.f32.mrb[0].mxu0
    %v668 = vadd.f32 0.0, %v667
    %v669 = vpop.f32.mrb[0].mxu0
    %v670 = vadd.f32 0.0, %v669
    %671 = vmatprep.mubr.bf16.mxu0 0
    %672 = vmatmul.mubr.bf16.gmra.mrb[0].mxu0 %v392
    %v673 = vpop.f32.mrb[0].mxu0
    %v674 = vadd.f32 0.0, %v673
    %v675 = vpop.f32.mrb[0].mxu0
    %v676 = vadd.f32 0.0, %v675
    %v677 = vpop.f32.mrb[0].mxu0
    %v678 = vadd.f32 0.0, %v677
    %v679 = vpop.f32.mrb[0].mxu0
    %v680 = vadd.f32 0.0, %v679
    %681 = vdwg.mxu0
    %v682 = vmax.f32 %v524, %v528
    %v683 = vmax.f32 %v682, %v534
    %v684 = vmax.f32 %v683, %v538
    %v685 = vrot.slane %v684, 4
    %v686 = vmax.f32 %v684, %v685
    %v687 = vrot.slane %v686, 2
    %v688 = vmax.f32 %v686, %v687
    %v689 = vrot.slane %v688, 1
    %v690 = vmax.f32 %v688, %v689
    %v691 = vmax.f32 %v526, %v530
    %v692 = vmax.f32 %v691, %v536
    %v693 = vmax.f32 %v692, %v540
    %v694 = vrot.slane %v693, 4
    %v695 = vmax.f32 %v693, %v694
    %v696 = vrot.slane %v695, 2
    %v697 = vmax.f32 %v695, %v696
    %v698 = vrot.slane %v697, 1
    %v699 = vmax.f32 %v697, %v698
    %v700 = vmax.f32 %v544, %v548
    %v701 = vmax.f32 %v700, %v554
    %v702 = vmax.f32 %v701, %v558
    %v703 = vrot.slane %v702, 4
    %v704 = vmax.f32 %v702, %v703
    %v705 = vrot.slane %v704, 2
    %v706 = vmax.f32 %v704, %v705
    %v707 = vrot.slane %v706, 1
    %v708 = vmax.f32 %v706, %v707
    %v709 = vmax.f32 %v546, %v550
    %v710 = vmax.f32 %v709, %v556
    %v711 = vmax.f32 %v710, %v560
    %v712 = vrot.slane %v711, 4
    %v713 = vmax.f32 %v711, %v712
    %v714 = vrot.slane %v713, 2
    %v715 = vmax.f32 %v713, %v714
    %v716 = vrot.slane %v715, 1
    %v717 = vmax.f32 %v715, %v716
    %v718 = vmax.f32 %v564, %v568
    %v719 = vmax.f32 %v718, %v574
    %v720 = vmax.f32 %v719, %v578
    %v721 = vrot.slane %v720, 4
    %v722 = vmax.f32 %v720, %v721
    %v723 = vrot.slane %v722, 2
    %v724 = vmax.f32 %v722, %v723
    %v725 = vrot.slane %v724, 1
    %v726 = vmax.f32 %v724, %v725
    %v727 = vmax.f32 %v566, %v570
    %v728 = vmax.f32 %v727, %v576
    %v729 = vmax.f32 %v728, %v580
    %v730 = vrot.slane %v729, 4
    %v731 = vmax.f32 %v729, %v730
    %v732 = vrot.slane %v731, 2
    %v733 = vmax.f32 %v731, %v732
    %v734 = vrot.slane %v733, 1
    %v735 = vmax.f32 %v733, %v734
    %v736 = vmax.f32 %v584, %v588
    %v737 = vmax.f32 %v736, %v594
    %v738 = vmax.f32 %v737, %v598
    %v739 = vrot.slane %v738, 4
    %v740 = vmax.f32 %v738, %v739
    %v741 = vrot.slane %v740, 2
    %v742 = vmax.f32 %v740, %v741
    %v743 = vrot.slane %v742, 1
    %v744 = vmax.f32 %v742, %v743
    %v745 = vmax.f32 %v586, %v590
    %v746 = vmax.f32 %v745, %v596
    %v747 = vmax.f32 %v746, %v600
    %v748 = vrot.slane %v747, 4
    %v749 = vmax.f32 %v747, %v748
    %v750 = vrot.slane %v749, 2
    %v751 = vmax.f32 %v749, %v750
    %v752 = vrot.slane %v751, 1
    %v753 = vmax.f32 %v751, %v752
    %v754 = vmax.f32 %v604, %v608
    %v755 = vmax.f32 %v754, %v614
    %v756 = vmax.f32 %v755, %v618
    %v757 = vrot.slane %v756, 4
    %v758 = vmax.f32 %v756, %v757
    %v759 = vrot.slane %v758, 2
    %v760 = vmax.f32 %v758, %v759
    %v761 = vrot.slane %v760, 1
    %v762 = vmax.f32 %v760, %v761
    %v763 = vmax.f32 %v606, %v610
    %v764 = vmax.f32 %v763, %v616
    %v765 = vmax.f32 %v764, %v620
    %v766 = vrot.slane %v765, 4
    %v767 = vmax.f32 %v765, %v766
    %v768 = vrot.slane %v767, 2
    %v769 = vmax.f32 %v767, %v768
    %v770 = vrot.slane %v769, 1
    %v771 = vmax.f32 %v769, %v770
    %v772 = vmax.f32 %v624, %v628
    %v773 = vmax.f32 %v772, %v634
    %v774 = vmax.f32 %v773, %v638
    %v775 = vrot.slane %v774, 4
    %v776 = vmax.f32 %v774, %v775
    %v777 = vrot.slane %v776, 2
    %v778 = vmax.f32 %v776, %v777
    %v779 = vrot.slane %v778, 1
    %v780 = vmax.f32 %v778, %v779
    %v781 = vmax.f32 %v626, %v630
    %v782 = vmax.f32 %v781, %v636
    %v783 = vmax.f32 %v782, %v640
    %v784 = vrot.slane %v783, 4
    %v785 = vmax.f32 %v783, %v784
    %v786 = vrot.slane %v785, 2
    %v787 = vmax.f32 %v785, %v786
    %v788 = vrot.slane %v787, 1
    %v789 = vmax.f32 %v787, %v788
    %v790 = vmax.f32 %v644, %v648
    %v791 = vmax.f32 %v790, %v654
    %v792 = vmax.f32 %v791, %v658
    %v793 = vrot.slane %v792, 4
    %v794 = vmax.f32 %v792, %v793
    %v795 = vrot.slane %v794, 2
    %v796 = vmax.f32 %v794, %v795
    %v797 = vrot.slane %v796, 1
    %v798 = vmax.f32 %v796, %v797
    %v799 = vmax.f32 %v646, %v650
    %v800 = vmax.f32 %v799, %v656
    %v801 = vmax.f32 %v800, %v660
    %v802 = vrot.slane %v801, 4
    %v803 = vmax.f32 %v801, %v802
    %v804 = vrot.slane %v803, 2
    %v805 = vmax.f32 %v803, %v804
    %v806 = vrot.slane %v805, 1
    %v807 = vmax.f32 %v805, %v806
    %v808 = vmax.f32 %v664, %v668
    %v809 = vmax.f32 %v808, %v674
    %v810 = vmax.f32 %v809, %v678
    %v811 = vrot.slane %v810, 4
    %v812 = vmax.f32 %v810, %v811
    %v813 = vrot.slane %v812, 2
    %v814 = vmax.f32 %v812, %v813
    %v815 = vrot.slane %v814, 1
    %v816 = vmax.f32 %v814, %v815
    %v817 = vmax.f32 %v666, %v670
    %v818 = vmax.f32 %v817, %v676
    %v819 = vmax.f32 %v818, %v680
    %v820 = vrot.slane %v819, 4
    %v821 = vmax.f32 %v819, %v820
    %v822 = vrot.slane %v821, 2
    %v823 = vmax.f32 %v821, %v822
    %v824 = vrot.slane %v823, 1
    %v825 = vmax.f32 %v823, %v824
    %v826 = vpack.c.bf16 %v528, %v524
    %v827 = vpack.c.bf16 %v530, %v526
    %v828 = vpack.c.bf16 %v538, %v534
    %v829 = vpack.c.bf16 %v540, %v536
    %v830 = vpack.c.bf16 %v548, %v544
    %v831 = vpack.c.bf16 %v550, %v546
    %v832 = vpack.c.bf16 %v558, %v554
    %v833 = vpack.c.bf16 %v560, %v556
    %v834 = vpack.c.bf16 %v568, %v564
    %v835 = vpack.c.bf16 %v570, %v566
    %v836 = vpack.c.bf16 %v578, %v574
    %v837 = vpack.c.bf16 %v580, %v576
    %v838 = vpack.c.bf16 %v588, %v584
    %v839 = vpack.c.bf16 %v590, %v586
    %v840 = vpack.c.bf16 %v598, %v594
    %v841 = vpack.c.bf16 %v600, %v596
    %v842 = vpack.c.bf16 %v608, %v604
    %v843 = vpack.c.bf16 %v610, %v606
    %v844 = vpack.c.bf16 %v618, %v614
    %v845 = vpack.c.bf16 %v620, %v616
    %v846 = vpack.c.bf16 %v628, %v624
    %v847 = vpack.c.bf16 %v630, %v626
    %v848 = vpack.c.bf16 %v638, %v634
    %v849 = vpack.c.bf16 %v640, %v636
    %v850 = vpack.c.bf16 %v648, %v644
    %v851 = vpack.c.bf16 %v650, %v646
    %v852 = vpack.c.bf16 %v658, %v654
    %v853 = vpack.c.bf16 %v660, %v656
    %v854 = vpack.c.bf16 %v668, %v664
    %v855 = vpack.c.bf16 %v670, %v666
    %v856 = vpack.c.bf16 %v678, %v674
    %v857 = vpack.c.bf16 %v680, %v676
    %v858 = vpack.c.bf16 %v690, %v690
    %v859 = vpack.c.bf16 %v699, %v699
    %v860 = vpack.c.bf16 %v708, %v708
    %v861 = vpack.c.bf16 %v717, %v717
    %v862 = vpack.c.bf16 %v726, %v726
    %v863 = vpack.c.bf16 %v735, %v735
    %v864 = vpack.c.bf16 %v744, %v744
    %v865 = vpack.c.bf16 %v753, %v753
    %v866 = vpack.c.bf16 %v762, %v762
    %v867 = vpack.c.bf16 %v771, %v771
    %v868 = vpack.c.bf16 %v780, %v780
    %v869 = vpack.c.bf16 %v789, %v789
    %v870 = vpack.c.bf16 %v798, %v798
    %v871 = vpack.c.bf16 %v807, %v807
    %v872 = vpack.c.bf16 %v816, %v816
    %v873 = vpack.c.bf16 %v825, %v825
    %v874 = vld [vmem:[#allocation5] sm:$0xff]
    %v875 = vld [vmem:[#allocation5 + $0x8] sm:$0xff]
    %v876 = vld [vmem:[#allocation5 + $0x10] sm:$0xff]
    %v877 = vld [vmem:[#allocation5 + $0x18] sm:$0xff]
    %v878 = vld [vmem:[#allocation5 + $0x20] sm:$0xff]
    %v879 = vld [vmem:[#allocation5 + $0x28] sm:$0xff]
    %v880 = vld [vmem:[#allocation5 + $0x30] sm:$0xff]
    %v881 = vld [vmem:[#allocation5 + $0x38] sm:$0xff]
    %v882 = vld [vmem:[#allocation5 + $0x40] sm:$0xff]
    %v883 = vld [vmem:[#allocation5 + $0x48] sm:$0xff]
    %v884 = vld [vmem:[#allocation5 + $0x50] sm:$0xff]
    %v885 = vld [vmem:[#allocation5 + $0x58] sm:$0xff]
    %v886 = vld [vmem:[#allocation5 + $0x60] sm:$0xff]
    %v887 = vld [vmem:[#allocation5 + $0x68] sm:$0xff]
    %v888 = vld [vmem:[#allocation5 + $0x70] sm:$0xff]
    %v889 = vld [vmem:[#allocation5 + $0x78] sm:$0xff]
    %v890 = vld [vmem:[#allocation5 + $0x80] sm:$0xff]
    %v891 = vld [vmem:[#allocation5 + $0x88] sm:$0xff]
    %v892 = vld [vmem:[#allocation5 + $0x90] sm:$0xff]
    %v893 = vld [vmem:[#allocation5 + $0x98] sm:$0xff]
    %v894 = vld [vmem:[#allocation5 + $0xa0] sm:$0xff]
    %v895 = vld [vmem:[#allocation5 + $0xa8] sm:$0xff]
    %v896 = vld [vmem:[#allocation5 + $0xb0] sm:$0xff]
    %v897 = vld [vmem:[#allocation5 + $0xb8] sm:$0xff]
    %v898 = vld [vmem:[#allocation5 + $0xc0] sm:$0xff]
    %v899 = vld [vmem:[#allocation5 + $0xc8] sm:$0xff]
    %v900 = vld [vmem:[#allocation5 + $0xd0] sm:$0xff]
    %v901 = vld [vmem:[#allocation5 + $0xd8] sm:$0xff]
    %v902 = vld [vmem:[#allocation5 + $0xe0] sm:$0xff]
    %v903 = vld [vmem:[#allocation5 + $0xe8] sm:$0xff]
    %v904 = vld [vmem:[#allocation5 + $0xf0] sm:$0xff]
    %v905 = vld [vmem:[#allocation5 + $0xf8] sm:$0xff]
    %v906 = vld [vmem:[#allocation5 + $0x100] sm:$0xff]
    %v907 = vld [vmem:[#allocation5 + $0x108] sm:$0xff]
    %v908 = vld [vmem:[#allocation5 + $0x110] sm:$0xff]
    %v909 = vld [vmem:[#allocation5 + $0x118] sm:$0xff]
    %v910 = vld [vmem:[#allocation5 + $0x120] sm:$0xff]
    %v911 = vld [vmem:[#allocation5 + $0x128] sm:$0xff]
    %v912 = vld [vmem:[#allocation5 + $0x130] sm:$0xff]
    %v913 = vld [vmem:[#allocation5 + $0x138] sm:$0xff]
    %v914 = vld [vmem:[#allocation5 + $0x140] sm:$0xff]
    %v915 = vld [vmem:[#allocation5 + $0x148] sm:$0xff]
    %v916 = vld [vmem:[#allocation5 + $0x150] sm:$0xff]
    %v917 = vld [vmem:[#allocation5 + $0x158] sm:$0xff]
    %v918 = vld [vmem:[#allocation5 + $0x160] sm:$0xff]
    %v919 = vld [vmem:[#allocation5 + $0x168] sm:$0xff]
    %v920 = vld [vmem:[#allocation5 + $0x170] sm:$0xff]
    %v921 = vld [vmem:[#allocation5 + $0x178] sm:$0xff]
    %v922 = vld [vmem:[#allocation5 + $0x180] sm:$0xff]
    %v923 = vld [vmem:[#allocation5 + $0x188] sm:$0xff]
    %v924 = vld [vmem:[#allocation5 + $0x190] sm:$0xff]
    %v925 = vld [vmem:[#allocation5 + $0x198] sm:$0xff]
    %v926 = vld [vmem:[#allocation5 + $0x1a0] sm:$0xff]
    %v927 = vld [vmem:[#allocation5 + $0x1a8] sm:$0xff]
    %v928 = vld [vmem:[#allocation5 + $0x1b0] sm:$0xff]
    %v929 = vld [vmem:[#allocation5 + $0x1b8] sm:$0xff]
    %v930 = vld [vmem:[#allocation5 + $0x1c0] sm:$0xff]
    %v931 = vld [vmem:[#allocation5 + $0x1c8] sm:$0xff]
    %v932 = vld [vmem:[#allocation5 + $0x1d0] sm:$0xff]
    %v933 = vld [vmem:[#allocation5 + $0x1d8] sm:$0xff]
    %v934 = vld [vmem:[#allocation5 + $0x1e0] sm:$0xff]
    %v935 = vld [vmem:[#allocation5 + $0x1e8] sm:$0xff]
    %v936 = vld [vmem:[#allocation5 + $0x1f0] sm:$0xff]
    %v937 = vld [vmem:[#allocation5 + $0x1f8] sm:$0xff]
    %v938 = vld [vmem:[%s6] sm:$0xf]
    %v940 = vlaneseq
    %v941 = vshrl.u32 %v940, 7
    %v942 = vsub.s32 0, %v941
    %v943 = vrot.slane %v938, %v942
    %v944 = vlaneseq
    %v945 = vshrl.u32 %v944, 7
    %v946 = vsub.s32 1, %v945
    %v947 = vrot.slane %v938, %v946
    %v948 = vlaneseq
    %v949 = vshrl.u32 %v948, 7
    %v950 = vsub.s32 2, %v949
    %v951 = vrot.slane %v938, %v950
    %v952 = vlaneseq
    %v953 = vshrl.u32 %v952, 7
    %v954 = vsub.s32 3, %v953
    %v955 = vrot.slane %v938, %v954
    %v976 = vunpack.c.l.b16 %v858
    %v977 = vunpack.c.l.b16 %v859
    %v978 = vunpack.c.l.b16 %v860
    %v979 = vunpack.c.l.b16 %v861
    %v980 = vunpack.c.l.b16 %v862
    %v981 = vunpack.c.l.b16 %v863
    %v982 = vunpack.c.l.b16 %v864
    %v983 = vunpack.c.l.b16 %v865
    %v984 = vunpack.c.l.b16 %v866
    %v985 = vunpack.c.l.b16 %v867
    %v986 = vunpack.c.l.b16 %v868
    %v987 = vunpack.c.l.b16 %v869
    %v988 = vunpack.c.l.b16 %v870
    %v989 = vunpack.c.l.b16 %v871
    %v990 = vunpack.c.l.b16 %v872
    %v991 = vunpack.c.l.b16 %v873
    %vm992 = vcmask 1041409
    %v993 = vsel %vm992, %v978, %v976
    %vm994 = vcmask 1042434
    %v995 = vsel %vm994, %v980, %v993
    %vm996 = vcmask 1043459
    %v997 = vsel %vm996, %v982, %v995
    %vm998 = vcmask 1044484
    %v999 = vsel %vm998, %v984, %v997
    %vm1000 = vcmask 1045509
    %v1001 = vsel %vm1000, %v986, %v999
    %vm1002 = vcmask 1046534
    %v1003 = vsel %vm1002, %v988, %v1001
    %vm1004 = vcmask 1047559
    %v1005 = vsel %vm1004, %v990, %v1003
    %v1006 = vsel %vm992, %v979, %v977
    %v1007 = vsel %vm994, %v981, %v1006
    %v1008 = vsel %vm996, %v983, %v1007
    %v1009 = vsel %vm998, %v985, %v1008
    %v1010 = vsel %vm1000, %v987, %v1009
    %v1011 = vsel %vm1002, %v989, %v1010
    %v1012 = vsel %vm1004, %v991, %v1011
    %v1013 = vpack.c.b16 %v1005, %v1005
    %v1014 = vpack.c.b16 %v1012, %v1012
    %v1081 = vunpack.c.l.b16 %v874
    %v1082 = vunpack.c.h.b16 %v874
    %v1083 = vunpack.c.l.b16 %v875
    %v1084 = vunpack.c.h.b16 %v875
    %v1085 = vunpack.c.l.b16 %v876
    %v1086 = vunpack.c.h.b16 %v876
    %v1087 = vunpack.c.l.b16 %v877
    %v1088 = vunpack.c.h.b16 %v877
    %v1089 = vunpack.c.l.b16 %v878
    %v1090 = vunpack.c.h.b16 %v878
    %v1091 = vunpack.c.l.b16 %v879
    %v1092 = vunpack.c.h.b16 %v879
    %v1093 = vunpack.c.l.b16 %v880
    %v1094 = vunpack.c.h.b16 %v880
    %v1095 = vunpack.c.l.b16 %v881
    %v1096 = vunpack.c.h.b16 %v881
    %v1097 = vunpack.c.l.b16 %v882
    %v1098 = vunpack.c.h.b16 %v882
    %v1099 = vunpack.c.l.b16 %v883
    %v1100 = vunpack.c.h.b16 %v883
    %v1101 = vunpack.c.l.b16 %v884
    %v1102 = vunpack.c.h.b16 %v884
    %v1103 = vunpack.c.l.b16 %v885
    %v1104 = vunpack.c.h.b16 %v885
    %v1105 = vunpack.c.l.b16 %v886
    %v1106 = vunpack.c.h.b16 %v886
    %v1107 = vunpack.c.l.b16 %v887
    %v1108 = vunpack.c.h.b16 %v887
    %v1109 = vunpack.c.l.b16 %v888
    %v1110 = vunpack.c.h.b16 %v888
    %v1111 = vunpack.c.l.b16 %v889
    %v1112 = vunpack.c.h.b16 %v889
    %v1113 = vunpack.c.l.b16 %v890
    %v1114 = vunpack.c.h.b16 %v890
    %v1115 = vunpack.c.l.b16 %v891
    %v1116 = vunpack.c.h.b16 %v891
    %v1117 = vunpack.c.l.b16 %v892
    %v1118 = vunpack.c.h.b16 %v892
    %v1119 = vunpack.c.l.b16 %v893
    %v1120 = vunpack.c.h.b16 %v893
    %v1121 = vunpack.c.l.b16 %v894
    %v1122 = vunpack.c.h.b16 %v894
    %v1123 = vunpack.c.l.b16 %v895
    %v1124 = vunpack.c.h.b16 %v895
    %v1125 = vunpack.c.l.b16 %v896
    %v1126 = vunpack.c.h.b16 %v896
    %v1127 = vunpack.c.l.b16 %v897
    %v1128 = vunpack.c.h.b16 %v897
    %v1129 = vunpack.c.l.b16 %v898
    %v1130 = vunpack.c.h.b16 %v898
    %v1131 = vunpack.c.l.b16 %v899
    %v1132 = vunpack.c.h.b16 %v899
    %v1133 = vunpack.c.l.b16 %v900
    %v1134 = vunpack.c.h.b16 %v900
    %v1135 = vunpack.c.l.b16 %v901
    %v1136 = vunpack.c.h.b16 %v901
    %v1137 = vunpack.c.l.b16 %v902
    %v1138 = vunpack.c.h.b16 %v902
    %v1139 = vunpack.c.l.b16 %v903
    %v1140 = vunpack.c.h.b16 %v903
    %v1141 = vunpack.c.l.b16 %v904
    %v1142 = vunpack.c.h.b16 %v904
    %v1143 = vunpack.c.l.b16 %v905
    %v1144 = vunpack.c.h.b16 %v905
    %v1145 = vunpack.c.l.b16 %v906
    %v1146 = vunpack.c.h.b16 %v906
    %v1147 = vunpack.c.l.b16 %v907
    %v1148 = vunpack.c.h.b16 %v907
    %v1149 = vunpack.c.l.b16 %v908
    %v1150 = vunpack.c.h.b16 %v908
    %v1151 = vunpack.c.l.b16 %v909
    %v1152 = vunpack.c.h.b16 %v909
    %v1153 = vunpack.c.l.b16 %v910
    %v1154 = vunpack.c.h.b16 %v910
    %v1155 = vunpack.c.l.b16 %v911
    %v1156 = vunpack.c.h.b16 %v911
    %v1157 = vunpack.c.l.b16 %v912
    %v1158 = vunpack.c.h.b16 %v912
    %v1159 = vunpack.c.l.b16 %v913
    %v1160 = vunpack.c.h.b16 %v913
    %v1161 = vunpack.c.l.b16 %v914
    %v1162 = vunpack.c.h.b16 %v914
    %v1163 = vunpack.c.l.b16 %v915
    %v1164 = vunpack.c.h.b16 %v915
    %v1165 = vunpack.c.l.b16 %v916
    %v1166 = vunpack.c.h.b16 %v916
    %v1167 = vunpack.c.l.b16 %v917
    %v1168 = vunpack.c.h.b16 %v917
    %v1169 = vunpack.c.l.b16 %v918
    %v1170 = vunpack.c.h.b16 %v918
    %v1171 = vunpack.c.l.b16 %v919
    %v1172 = vunpack.c.h.b16 %v919
    %v1173 = vunpack.c.l.b16 %v920
    %v1174 = vunpack.c.h.b16 %v920
    %v1175 = vunpack.c.l.b16 %v921
    %v1176 = vunpack.c.h.b16 %v921
    %v1177 = vunpack.c.l.b16 %v922
    %v1178 = vunpack.c.h.b16 %v922
    %v1179 = vunpack.c.l.b16 %v923
    %v1180 = vunpack.c.h.b16 %v923
    %v1181 = vunpack.c.l.b16 %v924
    %v1182 = vunpack.c.h.b16 %v924
    %v1183 = vunpack.c.l.b16 %v925
    %v1184 = vunpack.c.h.b16 %v925
    %v1185 = vunpack.c.l.b16 %v926
    %v1186 = vunpack.c.h.b16 %v926
    %v1187 = vunpack.c.l.b16 %v927
    %v1188 = vunpack.c.h.b16 %v927
    %v1189 = vunpack.c.l.b16 %v928
    %v1190 = vunpack.c.h.b16 %v928
    %v1191 = vunpack.c.l.b16 %v929
    %v1192 = vunpack.c.h.b16 %v929
    %v1193 = vunpack.c.l.b16 %v930
    %v1194 = vunpack.c.h.b16 %v930
    %v1195 = vunpack.c.l.b16 %v931
    %v1196 = vunpack.c.h.b16 %v931
    %v1197 = vunpack.c.l.b16 %v932
    %v1198 = vunpack.c.h.b16 %v932
    %v1199 = vunpack.c.l.b16 %v933
    %v1200 = vunpack.c.h.b16 %v933
    %v1201 = vunpack.c.l.b16 %v934
    %v1202 = vunpack.c.h.b16 %v934
    %v1203 = vunpack.c.l.b16 %v935
    %v1204 = vunpack.c.h.b16 %v935
    %v1205 = vunpack.c.l.b16 %v936
    %v1206 = vunpack.c.h.b16 %v936
    %v1207 = vunpack.c.l.b16 %v937
    %v1208 = vunpack.c.h.b16 %v937
    %v1209 = vpack.c.b16 %v1085, %v1081
    %v1210 = vpack.c.b16 %v1086, %v1082
    %v1211 = vpack.c.b16 %v1087, %v1083
    %v1212 = vpack.c.b16 %v1088, %v1084
    %v1213 = vpack.c.b16 %v1093, %v1089
    %v1214 = vpack.c.b16 %v1094, %v1090
    %v1215 = vpack.c.b16 %v1095, %v1091
    %v1216 = vpack.c.b16 %v1096, %v1092
    %v1217 = vpack.c.b16 %v1101, %v1097
    %v1218 = vpack.c.b16 %v1102, %v1098
    %v1219 = vpack.c.b16 %v1103, %v1099
    %v1220 = vpack.c.b16 %v1104, %v1100
    %v1221 = vpack.c.b16 %v1109, %v1105
    %v1222 = vpack.c.b16 %v1110, %v1106
    %v1223 = vpack.c.b16 %v1111, %v1107
    %v1224 = vpack.c.b16 %v1112, %v1108
    %v1225 = vpack.c.b16 %v1117, %v1113
    %v1226 = vpack.c.b16 %v1118, %v1114
    %v1227 = vpack.c.b16 %v1119, %v1115
    %v1228 = vpack.c.b16 %v1120, %v1116
    %v1229 = vpack.c.b16 %v1125, %v1121
    %v1230 = vpack.c.b16 %v1126, %v1122
    %v1231 = vpack.c.b16 %v1127, %v1123
    %v1232 = vpack.c.b16 %v1128, %v1124
    %v1233 = vpack.c.b16 %v1133, %v1129
    %v1234 = vpack.c.b16 %v1134, %v1130
    %v1235 = vpack.c.b16 %v1135, %v1131
    %v1236 = vpack.c.b16 %v1136, %v1132
    %v1237 = vpack.c.b16 %v1141, %v1137
    %v1238 = vpack.c.b16 %v1142, %v1138
    %v1239 = vpack.c.b16 %v1143, %v1139
    %v1240 = vpack.c.b16 %v1144, %v1140
    %v1241 = vpack.c.b16 %v1149, %v1145
    %v1242 = vpack.c.b16 %v1150, %v1146
    %v1243 = vpack.c.b16 %v1151, %v1147
    %v1244 = vpack.c.b16 %v1152, %v1148
    %v1245 = vpack.c.b16 %v1157, %v1153
    %v1246 = vpack.c.b16 %v1158, %v1154
    %v1247 = vpack.c.b16 %v1159, %v1155
    %v1248 = vpack.c.b16 %v1160, %v1156
    %v1249 = vpack.c.b16 %v1165, %v1161
    %v1250 = vpack.c.b16 %v1166, %v1162
    %v1251 = vpack.c.b16 %v1167, %v1163
    %v1252 = vpack.c.b16 %v1168, %v1164
    %v1253 = vpack.c.b16 %v1173, %v1169
    %v1254 = vpack.c.b16 %v1174, %v1170
    %v1255 = vpack.c.b16 %v1175, %v1171
    %v1256 = vpack.c.b16 %v1176, %v1172
    %v1257 = vpack.c.b16 %v1181, %v1177
    %v1258 = vpack.c.b16 %v1182, %v1178
    %v1259 = vpack.c.b16 %v1183, %v1179
    %v1260 = vpack.c.b16 %v1184, %v1180
    %v1261 = vpack.c.b16 %v1189, %v1185
    %v1262 = vpack.c.b16 %v1190, %v1186
    %v1263 = vpack.c.b16 %v1191, %v1187
    %v1264 = vpack.c.b16 %v1192, %v1188
    %v1265 = vpack.c.b16 %v1197, %v1193
    %v1266 = vpack.c.b16 %v1198, %v1194
    %v1267 = vpack.c.b16 %v1199, %v1195
    %v1268 = vpack.c.b16 %v1200, %v1196
    %v1269 = vpack.c.b16 %v1205, %v1201
    %v1270 = vpack.c.b16 %v1206, %v1202
    %v1271 = vpack.c.b16 %v1207, %v1203
    %v1272 = vpack.c.b16 %v1208, %v1204
    %1337 = vmatprep.subr.bf16.mxu0 %v1210
    %1338 = vmatpush1.bf16.msra.mxu0 %v1209
    %1339 = vmatprep.subr.bf16.mxu0 %v1214
    %1340 = vmatpush1.bf16.msra.mxu0 %v1213
    %1341 = vmatprep.subr.bf16.mxu0 %v1218
    %1342 = vmatpush1.bf16.msra.mxu0 %v1217
    %1343 = vmatprep.subr.bf16.mxu0 %v1222
    %1344 = vmatpush1.bf16.msra.mxu0 %v1221
    %1345 = vmatprep.subr.bf16.mxu0 %v1226
    %1346 = vmatpush1.bf16.msra.mxu0 %v1225
    %1347 = vmatprep.subr.bf16.mxu0 %v1230
    %1348 = vmatpush1.bf16.msra.mxu0 %v1229
    %1349 = vmatprep.subr.bf16.mxu0 %v1234
    %1350 = vmatpush1.bf16.msra.mxu0 %v1233
    %1351 = vmatprep.subr.bf16.mxu0 %v1238
    %1352 = vmatpush1.bf16.msra.mxu0 %v1237
    %1353 = vmatprep.subr.bf16.mxu0 %v1242
    %1354 = vmatpush1.bf16.msra.mxu0 %v1241
    %1355 = vmatprep.subr.bf16.mxu0 %v1246
    %1356 = vmatpush1.bf16.msra.mxu0 %v1245
    %1357 = vmatprep.subr.bf16.mxu0 %v1250
    %1358 = vmatpush1.bf16.msra.mxu0 %v1249
    %1359 = vmatprep.subr.bf16.mxu0 %v1254
    %1360 = vmatpush1.bf16.msra.mxu0 %v1253
    %1361 = vmatprep.subr.bf16.mxu0 %v1258
    %1362 = vmatpush1.bf16.msra.mxu0 %v1257
    %1363 = vmatprep.subr.bf16.mxu0 %v1262
    %1364 = vmatpush1.bf16.msra.mxu0 %v1261
    %1365 = vmatprep.subr.bf16.mxu0 %v1266
    %1366 = vmatpush1.bf16.msra.mxu0 %v1265
    %1367 = vmatprep.subr.bf16.mxu0 %v1270
    %1368 = vmatpush1.bf16.msra.mxu0 %v1269
    %1369 = vmatprep.mubr.bf16.mxu0 %v1014
    %1370 = vmatmul.mubr.bf16.gmra.mrb[0].mxu0 %v1013
    %v1371 = vpop.f32.mrb[0].mxu0
    %v1372 = vadd.f32 %v943, %v1371
    %v1373 = vpop.f32.mrb[0].mxu0
    %v1374 = vadd.f32 %v947, %v1373
    %v1375 = vpop.f32.mrb[0].mxu0
    %v1376 = vpop.f32.mrb[0].mxu0
    %1377 = vdwg.mxu0
    %1378 = vmatprep.subr.bf16.mxu0 %v1212
    %1379 = vmatpush1.bf16.msra.mxu0 %v1211
    %1380 = vmatprep.subr.bf16.mxu0 %v1216
    %1381 = vmatpush1.bf16.msra.mxu0 %v1215
    %1382 = vmatprep.subr.bf16.mxu0 %v1220
    %1383 = vmatpush1.bf16.msra.mxu0 %v1219
    %1384 = vmatprep.subr.bf16.mxu0 %v1224
    %1385 = vmatpush1.bf16.msra.mxu0 %v1223
    %1386 = vmatprep.subr.bf16.mxu0 %v1228
    %1387 = vmatpush1.bf16.msra.mxu0 %v1227
    %1388 = vmatprep.subr.bf16.mxu0 %v1232
    %1389 = vmatpush1.bf16.msra.mxu0 %v1231
    %1390 = vmatprep.subr.bf16.mxu0 %v1236
    %1391 = vmatpush1.bf16.msra.mxu0 %v1235
    %1392 = vmatprep.subr.bf16.mxu0 %v1240
    %1393 = vmatpush1.bf16.msra.mxu0 %v1239
    %1394 = vmatprep.subr.bf16.mxu0 %v1244
    %1395 = vmatpush1.bf16.msra.mxu0 %v1243
    %1396 = vmatprep.subr.bf16.mxu0 %v1248
    %1397 = vmatpush1.bf16.msra.mxu0 %v1247
    %1398 = vmatprep.subr.bf16.mxu0 %v1252
    %1399 = vmatpush1.bf16.msra.mxu0 %v1251
    %1400 = vmatprep.subr.bf16.mxu0 %v1256
    %1401 = vmatpush1.bf16.msra.mxu0 %v1255
    %1402 = vmatprep.subr.bf16.mxu0 %v1260
    %1403 = vmatpush1.bf16.msra.mxu0 %v1259
    %1404 = vmatprep.subr.bf16.mxu0 %v1264
    %1405 = vmatpush1.bf16.msra.mxu0 %v1263
    %1406 = vmatprep.subr.bf16.mxu0 %v1268
    %1407 = vmatpush1.bf16.msra.mxu0 %v1267
    %1408 = vmatprep.subr.bf16.mxu0 %v1272
    %1409 = vmatpush1.bf16.msra.mxu0 %v1271
    %1410 = vmatprep.mubr.bf16.mxu0 %v1014
    %1411 = vmatmul.mubr.bf16.gmra.mrb[0].mxu0 %v1013
    %v1412 = vpop.f32.mrb[0].mxu0
    %v1413 = vadd.f32 %v951, %v1412
    %v1414 = vpop.f32.mrb[0].mxu0
    %v1415 = vadd.f32 %v955, %v1414
    %v1416 = vpop.f32.mrb[0].mxu0
    %v1417 = vpop.f32.mrb[0].mxu0
    %1418 = vdwg.mxu0
    %v1419 = vld [vmem:[#allocation7] sm:$0xff]
    %v1420 = vld [vmem:[#allocation7 + $0x8] sm:$0xff]
    %v1421 = vld [vmem:[#allocation7 + $0x10] sm:$0xff]
    %v1422 = vld [vmem:[#allocation7 + $0x18] sm:$0xff]
    %v1423 = vld [vmem:[#allocation7 + $0x20] sm:$0xff]
    %v1424 = vld [vmem:[#allocation7 + $0x28] sm:$0xff]
    %v1425 = vld [vmem:[#allocation7 + $0x30] sm:$0xff]
    %v1426 = vld [vmem:[#allocation7 + $0x38] sm:$0xff]
    %v1427 = vld [vmem:[#allocation7 + $0x40] sm:$0xff]
    %v1428 = vld [vmem:[#allocation7 + $0x48] sm:$0xff]
    %v1429 = vld [vmem:[#allocation7 + $0x50] sm:$0xff]
    %v1430 = vld [vmem:[#allocation7 + $0x58] sm:$0xff]
    %v1431 = vld [vmem:[#allocation7 + $0x60] sm:$0xff]
    %v1432 = vld [vmem:[#allocation7 + $0x68] sm:$0xff]
    %v1433 = vld [vmem:[#allocation7 + $0x70] sm:$0xff]
    %v1434 = vld [vmem:[#allocation7 + $0x78] sm:$0xff]
    %v1435 = vld [vmem:[#allocation7 + $0x80] sm:$0xff]
    %v1436 = vld [vmem:[#allocation7 + $0x88] sm:$0xff]
    %v1437 = vld [vmem:[#allocation7 + $0x90] sm:$0xff]
    %v1438 = vld [vmem:[#allocation7 + $0x98] sm:$0xff]
    %v1439 = vld [vmem:[#allocation7 + $0xa0] sm:$0xff]
    %v1440 = vld [vmem:[#allocation7 + $0xa8] sm:$0xff]
    %v1441 = vld [vmem:[#allocation7 + $0xb0] sm:$0xff]
    %v1442 = vld [vmem:[#allocation7 + $0xb8] sm:$0xff]
    %v1443 = vld [vmem:[#allocation7 + $0xc0] sm:$0xff]
    %v1444 = vld [vmem:[#allocation7 + $0xc8] sm:$0xff]
    %v1445 = vld [vmem:[#allocation7 + $0xd0] sm:$0xff]
    %v1446 = vld [vmem:[#allocation7 + $0xd8] sm:$0xff]
    %v1447 = vld [vmem:[#allocation7 + $0xe0] sm:$0xff]
    %v1448 = vld [vmem:[#allocation7 + $0xe8] sm:$0xff]
    %v1449 = vld [vmem:[#allocation7 + $0xf0] sm:$0xff]
    %v1450 = vld [vmem:[#allocation7 + $0xf8] sm:$0xff]
    %v1451 = vld [vmem:[#allocation7 + $0x100] sm:$0xff]
    %v1452 = vld [vmem:[#allocation7 + $0x108] sm:$0xff]
    %v1453 = vld [vmem:[#allocation7 + $0x110] sm:$0xff]
    %v1454 = vld [vmem:[#allocation7 + $0x118] sm:$0xff]
    %v1455 = vld [vmem:[#allocation7 + $0x120] sm:$0xff]
    %v1456 = vld [vmem:[#allocation7 + $0x128] sm:$0xff]
    %v1457 = vld [vmem:[#allocation7 + $0x130] sm:$0xff]
    %v1458 = vld [vmem:[#allocation7 + $0x138] sm:$0xff]
    %v1459 = vld [vmem:[#allocation7 + $0x140] sm:$0xff]
    %v1460 = vld [vmem:[#allocation7 + $0x148] sm:$0xff]
    %v1461 = vld [vmem:[#allocation7 + $0x150] sm:$0xff]
    %v1462 = vld [vmem:[#allocation7 + $0x158] sm:$0xff]
    %v1463 = vld [vmem:[#allocation7 + $0x160] sm:$0xff]
    %v1464 = vld [vmem:[#allocation7 + $0x168] sm:$0xff]
    %v1465 = vld [vmem:[#allocation7 + $0x170] sm:$0xff]
    %v1466 = vld [vmem:[#allocation7 + $0x178] sm:$0xff]
    %v1467 = vld [vmem:[#allocation7 + $0x180] sm:$0xff]
    %v1468 = vld [vmem:[#allocation7 + $0x188] sm:$0xff]
    %v1469 = vld [vmem:[#allocation7 + $0x190] sm:$0xff]
    %v1470 = vld [vmem:[#allocation7 + $0x198] sm:$0xff]
    %v1471 = vld [vmem:[#allocation7 + $0x1a0] sm:$0xff]
    %v1472 = vld [vmem:[#allocation7 + $0x1a8] sm:$0xff]
    %v1473 = vld [vmem:[#allocation7 + $0x1b0] sm:$0xff]
    %v1474 = vld [vmem:[#allocation7 + $0x1b8] sm:$0xff]
    %v1475 = vld [vmem:[#allocation7 + $0x1c0] sm:$0xff]
    %v1476 = vld [vmem:[#allocation7 + $0x1c8] sm:$0xff]
    %v1477 = vld [vmem:[#allocation7 + $0x1d0] sm:$0xff]
    %v1478 = vld [vmem:[#allocation7 + $0x1d8] sm:$0xff]
    %v1479 = vld [vmem:[#allocation7 + $0x1e0] sm:$0xff]
    %v1480 = vld [vmem:[#allocation7 + $0x1e8] sm:$0xff]
    %v1481 = vld [vmem:[#allocation7 + $0x1f0] sm:$0xff]
    %v1482 = vld [vmem:[#allocation7 + $0x1f8] sm:$0xff]
    %v1547 = vunpack.c.l.b16 %v1419
    %v1548 = vunpack.c.h.b16 %v1419
    %v1549 = vunpack.c.l.b16 %v1420
    %v1550 = vunpack.c.h.b16 %v1420
    %v1551 = vunpack.c.l.b16 %v1421
    %v1552 = vunpack.c.h.b16 %v1421
    %v1553 = vunpack.c.l.b16 %v1422
    %v1554 = vunpack.c.h.b16 %v1422
    %v1555 = vunpack.c.l.b16 %v1423
    %v1556 = vunpack.c.h.b16 %v1423
    %v1557 = vunpack.c.l.b16 %v1424
    %v1558 = vunpack.c.h.b16 %v1424
    %v1559 = vunpack.c.l.b16 %v1425
    %v1560 = vunpack.c.h.b16 %v1425
    %v1561 = vunpack.c.l.b16 %v1426
    %v1562 = vunpack.c.h.b16 %v1426
    %v1563 = vunpack.c.l.b16 %v1427
    %v1564 = vunpack.c.h.b16 %v1427
    %v1565 = vunpack.c.l.b16 %v1428
    %v1566 = vunpack.c.h.b16 %v1428
    %v1567 = vunpack.c.l.b16 %v1429
    %v1568 = vunpack.c.h.b16 %v1429
    %v1569 = vunpack.c.l.b16 %v1430
    %v1570 = vunpack.c.h.b16 %v1430
    %v1571 = vunpack.c.l.b16 %v1431
    %v1572 = vunpack.c.h.b16 %v1431
    %v1573 = vunpack.c.l.b16 %v1432
    %v1574 = vunpack.c.h.b16 %v1432
    %v1575 = vunpack.c.l.b16 %v1433
    %v1576 = vunpack.c.h.b16 %v1433
    %v1577 = vunpack.c.l.b16 %v1434
    %v1578 = vunpack.c.h.b16 %v1434
    %v1579 = vunpack.c.l.b16 %v1435
    %v1580 = vunpack.c.h.b16 %v1435
    %v1581 = vunpack.c.l.b16 %v1436
    %v1582 = vunpack.c.h.b16 %v1436
    %v1583 = vunpack.c.l.b16 %v1437
    %v1584 = vunpack.c.h.b16 %v1437
    %v1585 = vunpack.c.l.b16 %v1438
    %v1586 = vunpack.c.h.b16 %v1438
    %v1587 = vunpack.c.l.b16 %v1439
    %v1588 = vunpack.c.h.b16 %v1439
    %v1589 = vunpack.c.l.b16 %v1440
    %v1590 = vunpack.c.h.b16 %v1440
    %v1591 = vunpack.c.l.b16 %v1441
    %v1592 = vunpack.c.h.b16 %v1441
    %v1593 = vunpack.c.l.b16 %v1442
    %v1594 = vunpack.c.h.b16 %v1442
    %v1595 = vunpack.c.l.b16 %v1443
    %v1596 = vunpack.c.h.b16 %v1443
    %v1597 = vunpack.c.l.b16 %v1444
    %v1598 = vunpack.c.h.b16 %v1444
    %v1599 = vunpack.c.l.b16 %v1445
    %v1600 = vunpack.c.h.b16 %v1445
    %v1601 = vunpack.c.l.b16 %v1446
    %v1602 = vunpack.c.h.b16 %v1446
    %v1603 = vunpack.c.l.b16 %v1447
    %v1604 = vunpack.c.h.b16 %v1447
    %v1605 = vunpack.c.l.b16 %v1448
    %v1606 = vunpack.c.h.b16 %v1448
    %v1607 = vunpack.c.l.b16 %v1449
    %v1608 = vunpack.c.h.b16 %v1449
    %v1609 = vunpack.c.l.b16 %v1450
    %v1610 = vunpack.c.h.b16 %v1450
    %v1611 = vunpack.c.l.b16 %v1451
    %v1612 = vunpack.c.h.b16 %v1451
    %v1613 = vunpack.c.l.b16 %v1452
    %v1614 = vunpack.c.h.b16 %v1452
    %v1615 = vunpack.c.l.b16 %v1453
    %v1616 = vunpack.c.h.b16 %v1453
    %v1617 = vunpack.c.l.b16 %v1454
    %v1618 = vunpack.c.h.b16 %v1454
    %v1619 = vunpack.c.l.b16 %v1455
    %v1620 = vunpack.c.h.b16 %v1455
    %v1621 = vunpack.c.l.b16 %v1456
    %v1622 = vunpack.c.h.b16 %v1456
    %v1623 = vunpack.c.l.b16 %v1457
    %v1624 = vunpack.c.h.b16 %v1457
    %v1625 = vunpack.c.l.b16 %v1458
    %v1626 = vunpack.c.h.b16 %v1458
    %v1627 = vunpack.c.l.b16 %v1459
    %v1628 = vunpack.c.h.b16 %v1459
    %v1629 = vunpack.c.l.b16 %v1460
    %v1630 = vunpack.c.h.b16 %v1460
    %v1631 = vunpack.c.l.b16 %v1461
    %v1632 = vunpack.c.h.b16 %v1461
    %v1633 = vunpack.c.l.b16 %v1462
    %v1634 = vunpack.c.h.b16 %v1462
    %v1635 = vunpack.c.l.b16 %v1463
    %v1636 = vunpack.c.h.b16 %v1463
    %v1637 = vunpack.c.l.b16 %v1464
    %v1638 = vunpack.c.h.b16 %v1464
    %v1639 = vunpack.c.l.b16 %v1465
    %v1640 = vunpack.c.h.b16 %v1465
    %v1641 = vunpack.c.l.b16 %v1466
    %v1642 = vunpack.c.h.b16 %v1466
    %v1643 = vunpack.c.l.b16 %v1467
    %v1644 = vunpack.c.h.b16 %v1467
    %v1645 = vunpack.c.l.b16 %v1468
    %v1646 = vunpack.c.h.b16 %v1468
    %v1647 = vunpack.c.l.b16 %v1469
    %v1648 = vunpack.c.h.b16 %v1469
    %v1649 = vunpack.c.l.b16 %v1470
    %v1650 = vunpack.c.h.b16 %v1470
    %v1651 = vunpack.c.l.b16 %v1471
    %v1652 = vunpack.c.h.b16 %v1471
    %v1653 = vunpack.c.l.b16 %v1472
    %v1654 = vunpack.c.h.b16 %v1472
    %v1655 = vunpack.c.l.b16 %v1473
    %v1656 = vunpack.c.h.b16 %v1473
    %v1657 = vunpack.c.l.b16 %v1474
    %v1658 = vunpack.c.h.b16 %v1474
    %v1659 = vunpack.c.l.b16 %v1475
    %v1660 = vunpack.c.h.b16 %v1475
    %v1661 = vunpack.c.l.b16 %v1476
    %v1662 = vunpack.c.h.b16 %v1476
    %v1663 = vunpack.c.l.b16 %v1477
    %v1664 = vunpack.c.h.b16 %v1477
    %v1665 = vunpack.c.l.b16 %v1478
    %v1666 = vunpack.c.h.b16 %v1478
    %v1667 = vunpack.c.l.b16 %v1479
    %v1668 = vunpack.c.h.b16 %v1479
    %v1669 = vunpack.c.l.b16 %v1480
    %v1670 = vunpack.c.h.b16 %v1480
    %v1671 = vunpack.c.l.b16 %v1481
    %v1672 = vunpack.c.h.b16 %v1481
    %v1673 = vunpack.c.l.b16 %v1482
    %v1674 = vunpack.c.h.b16 %v1482
    %v1675 = vpack.c.b16 %v1551, %v1547
    %v1676 = vpack.c.b16 %v1552, %v1548
    %v1677 = vpack.c.b16 %v1553, %v1549
    %v1678 = vpack.c.b16 %v1554, %v1550
    %v1679 = vpack.c.b16 %v1559, %v1555
    %v1680 = vpack.c.b16 %v1560, %v1556
    %v1681 = vpack.c.b16 %v1561, %v1557
    %v1682 = vpack.c.b16 %v1562, %v1558
    %v1683 = vpack.c.b16 %v1567, %v1563
    %v1684 = vpack.c.b16 %v1568, %v1564
    %v1685 = vpack.c.b16 %v1569, %v1565
    %v1686 = vpack.c.b16 %v1570, %v1566
    %v1687 = vpack.c.b16 %v1575, %v1571
    %v1688 = vpack.c.b16 %v1576, %v1572
    %v1689 = vpack.c.b16 %v1577, %v1573
    %v1690 = vpack.c.b16 %v1578, %v1574
    %v1691 = vpack.c.b16 %v1583, %v1579
    %v1692 = vpack.c.b16 %v1584, %v1580
    %v1693 = vpack.c.b16 %v1585, %v1581
    %v1694 = vpack.c.b16 %v1586, %v1582
    %v1695 = vpack.c.b16 %v1591, %v1587
    %v1696 = vpack.c.b16 %v1592, %v1588
    %v1697 = vpack.c.b16 %v1593, %v1589
    %v1698 = vpack.c.b16 %v1594, %v1590
    %v1699 = vpack.c.b16 %v1599, %v1595
    %v1700 = vpack.c.b16 %v1600, %v1596
    %v1701 = vpack.c.b16 %v1601, %v1597
    %v1702 = vpack.c.b16 %v1602, %v1598
    %v1703 = vpack.c.b16 %v1607, %v1603
    %v1704 = vpack.c.b16 %v1608, %v1604
    %v1705 = vpack.c.b16 %v1609, %v1605
    %v1706 = vpack.c.b16 %v1610, %v1606
    %v1707 = vpack.c.b16 %v1615, %v1611
    %v1708 = vpack.c.b16 %v1616, %v1612
    %v1709 = vpack.c.b16 %v1617, %v1613
    %v1710 = vpack.c.b16 %v1618, %v1614
    %v1711 = vpack.c.b16 %v1623, %v1619
    %v1712 = vpack.c.b16 %v1624, %v1620
    %v1713 = vpack.c.b16 %v1625, %v1621
    %v1714 = vpack.c.b16 %v1626, %v1622
    %v1715 = vpack.c.b16 %v1631, %v1627
    %v1716 = vpack.c.b16 %v1632, %v1628
    %v1717 = vpack.c.b16 %v1633, %v1629
    %v1718 = vpack.c.b16 %v1634, %v1630
    %v1719 = vpack.c.b16 %v1639, %v1635
    %v1720 = vpack.c.b16 %v1640, %v1636
    %v1721 = vpack.c.b16 %v1641, %v1637
    %v1722 = vpack.c.b16 %v1642, %v1638
    %v1723 = vpack.c.b16 %v1647, %v1643
    %v1724 = vpack.c.b16 %v1648, %v1644
    %v1725 = vpack.c.b16 %v1649, %v1645
    %v1726 = vpack.c.b16 %v1650, %v1646
    %v1727 = vpack.c.b16 %v1655, %v1651
    %v1728 = vpack.c.b16 %v1656, %v1652
    %v1729 = vpack.c.b16 %v1657, %v1653
    %v1730 = vpack.c.b16 %v1658, %v1654
    %v1731 = vpack.c.b16 %v1663, %v1659
    %v1732 = vpack.c.b16 %v1664, %v1660
    %v1733 = vpack.c.b16 %v1665, %v1661
    %v1734 = vpack.c.b16 %v1666, %v1662
    %v1735 = vpack.c.b16 %v1671, %v1667
    %v1736 = vpack.c.b16 %v1672, %v1668
    %v1737 = vpack.c.b16 %v1673, %v1669
    %v1738 = vpack.c.b16 %v1674, %v1670
    %1803 = vmatprep.subr.bf16.mxu0 %v1676
    %1804 = vmatpush1.bf16.msra.mxu0 %v1675
    %1805 = vmatprep.subr.bf16.mxu0 %v1680
    %1806 = vmatpush1.bf16.msra.mxu0 %v1679
    %1807 = vmatprep.subr.bf16.mxu0 %v1684
    %1808 = vmatpush1.bf16.msra.mxu0 %v1683
    %1809 = vmatprep.subr.bf16.mxu0 %v1688
    %1810 = vmatpush1.bf16.msra.mxu0 %v1687
    %1811 = vmatprep.subr.bf16.mxu0 %v1692
    %1812 = vmatpush1.bf16.msra.mxu0 %v1691
    %1813 = vmatprep.subr.bf16.mxu0 %v1696
    %1814 = vmatpush1.bf16.msra.mxu0 %v1695
    %1815 = vmatprep.subr.bf16.mxu0 %v1700
    %1816 = vmatpush1.bf16.msra.mxu0 %v1699
    %1817 = vmatprep.subr.bf16.mxu0 %v1704
    %1818 = vmatpush1.bf16.msra.mxu0 %v1703
    %1819 = vmatprep.subr.bf16.mxu0 %v1708
    %1820 = vmatpush1.bf16.msra.mxu0 %v1707
    %1821 = vmatprep.subr.bf16.mxu0 %v1712
    %1822 = vmatpush1.bf16.msra.mxu0 %v1711
    %1823 = vmatprep.subr.bf16.mxu0 %v1716
    %1824 = vmatpush1.bf16.msra.mxu0 %v1715
    %1825 = vmatprep.subr.bf16.mxu0 %v1720
    %1826 = vmatpush1.bf16.msra.mxu0 %v1719
    %1827 = vmatprep.subr.bf16.mxu0 %v1724
    %1828 = vmatpush1.bf16.msra.mxu0 %v1723
    %1829 = vmatprep.subr.bf16.mxu0 %v1728
    %1830 = vmatpush1.bf16.msra.mxu0 %v1727
    %1831 = vmatprep.subr.bf16.mxu0 %v1732
    %1832 = vmatpush1.bf16.msra.mxu0 %v1731
    %1833 = vmatprep.subr.bf16.mxu0 %v1736
    %1834 = vmatpush1.bf16.msra.mxu0 %v1735
    %1835 = vmatprep.mubr.bf16.mxu0 %v827
    %1836 = vmatmul.mubr.bf16.gmra.mrb[0].mxu0 %v826
    %v1837 = vpop.f32.mrb[0].mxu0
    %v1838 = vadd.f32 0.0, %v1837
    %v1839 = vpop.f32.mrb[0].mxu0
    %v1840 = vadd.f32 0.0, %v1839
    %v1841 = vpop.f32.mrb[0].mxu0
    %v1842 = vadd.f32 0.0, %v1841
    %v1843 = vpop.f32.mrb[0].mxu0
    %v1844 = vadd.f32 0.0, %v1843
    %1845 = vmatprep.mubr.bf16.mxu0 %v829
    %1846 = vmatmul.mubr.bf16.gmra.mrb[0].mxu0 %v828
    %v1847 = vpop.f32.mrb[0].mxu0
    %v1848 = vadd.f32 0.0, %v1847
    %v1849 = vpop.f32.mrb[0].mxu0
    %v1850 = vadd.f32 0.0, %v1849
    %v1851 = vpop.f32.mrb[0].mxu0
    %v1852 = vadd.f32 0.0, %v1851
    %v1853 = vpop.f32.mrb[0].mxu0
    %v1854 = vadd.f32 0.0, %v1853
    %1855 = vmatprep.mubr.bf16.mxu0 %v831
    %1856 = vmatmul.mubr.bf16.gmra.mrb[0].mxu0 %v830
    %v1857 = vpop.f32.mrb[0].mxu0
    %v1858 = vadd.f32 0.0, %v1857
    %v1859 = vpop.f32.mrb[0].mxu0
    %v1860 = vadd.f32 0.0, %v1859
    %v1861 = vpop.f32.mrb[0].mxu0
    %v1862 = vadd.f32 0.0, %v1861
    %v1863 = vpop.f32.mrb[0].mxu0
    %v1864 = vadd.f32 0.0, %v1863
    %1865 = vmatprep.mubr.bf16.mxu0 %v833
    %1866 = vmatmul.mubr.bf16.gmra.mrb[0].mxu0 %v832
    %v1867 = vpop.f32.mrb[0].mxu0
    %v1868 = vadd.f32 0.0, %v1867
    %v1869 = vpop.f32.mrb[0].mxu0
    %v1870 = vadd.f32 0.0, %v1869
    %v1871 = vpop.f32.mrb[0].mxu0
    %v1872 = vadd.f32 0.0, %v1871
    %v1873 = vpop.f32.mrb[0].mxu0
    %v1874 = vadd.f32 0.0, %v1873
    %1875 = vmatprep.mubr.bf16.mxu0 %v835
    %1876 = vmatmul.mubr.bf16.gmra.mrb[0].mxu0 %v834
    %v1877 = vpop.f32.mrb[0].mxu0
    %v1878 = vadd.f32 0.0, %v1877
    %v1879 = vpop.f32.mrb[0].mxu0
    %v1880 = vadd.f32 0.0, %v1879
    %v1881 = vpop.f32.mrb[0].mxu0
    %v1882 = vadd.f32 0.0, %v1881
    %v1883 = vpop.f32.mrb[0].mxu0
    %v1884 = vadd.f32 0.0, %v1883
    %1885 = vmatprep.mubr.bf16.mxu0 %v837
    %1886 = vmatmul.mubr.bf16.gmra.mrb[0].mxu0 %v836
    %v1887 = vpop.f32.mrb[0].mxu0
    %v1888 = vadd.f32 0.0, %v1887
    %v1889 = vpop.f32.mrb[0].mxu0
    %v1890 = vadd.f32 0.0, %v1889
    %v1891 = vpop.f32.mrb[0].mxu0
    %v1892 = vadd.f32 0.0, %v1891
    %v1893 = vpop.f32.mrb[0].mxu0
    %v1894 = vadd.f32 0.0, %v1893
    %1895 = vmatprep.mubr.bf16.mxu0 %v839
    %1896 = vmatmul.mubr.bf16.gmra.mrb[0].mxu0 %v838
    %v1897 = vpop.f32.mrb[0].mxu0
    %v1898 = vadd.f32 0.0, %v1897
    %v1899 = vpop.f32.mrb[0].mxu0
    %v1900 = vadd.f32 0.0, %v1899
    %v1901 = vpop.f32.mrb[0].mxu0
    %v1902 = vadd.f32 0.0, %v1901
    %v1903 = vpop.f32.mrb[0].mxu0
    %v1904 = vadd.f32 0.0, %v1903
    %1905 = vmatprep.mubr.bf16.mxu0 %v841
    %1906 = vmatmul.mubr.bf16.gmra.mrb[0].mxu0 %v840
    %v1907 = vpop.f32.mrb[0].mxu0
    %v1908 = vadd.f32 0.0, %v1907
    %v1909 = vpop.f32.mrb[0].mxu0
    %v1910 = vadd.f32 0.0, %v1909
    %v1911 = vpop.f32.mrb[0].mxu0
    %v1912 = vadd.f32 0.0, %v1911
    %v1913 = vpop.f32.mrb[0].mxu0
    %v1914 = vadd.f32 0.0, %v1913
    %1915 = vmatprep.mubr.bf16.mxu0 %v843
    %1916 = vmatmul.mubr.bf16.gmra.mrb[0].mxu0 %v842
    %v1917 = vpop.f32.mrb[0].mxu0
    %v1918 = vadd.f32 0.0, %v1917
    %v1919 = vpop.f32.mrb[0].mxu0
    %v1920 = vadd.f32 0.0, %v1919
    %v1921 = vpop.f32.mrb[0].mxu0
    %v1922 = vadd.f32 0.0, %v1921
    %v1923 = vpop.f32.mrb[0].mxu0
    %v1924 = vadd.f32 0.0, %v1923
    %1925 = vmatprep.mubr.bf16.mxu0 %v845
    %1926 = vmatmul.mubr.bf16.gmra.mrb[0].mxu0 %v844
    %v1927 = vpop.f32.mrb[0].mxu0
    %v1928 = vadd.f32 0.0, %v1927
    %v1929 = vpop.f32.mrb[0].mxu0
    %v1930 = vadd.f32 0.0, %v1929
    %v1931 = vpop.f32.mrb[0].mxu0
    %v1932 = vadd.f32 0.0, %v1931
    %v1933 = vpop.f32.mrb[0].mxu0
    %v1934 = vadd.f32 0.0, %v1933
    %1935 = vmatprep.mubr.bf16.mxu0 %v847
    %1936 = vmatmul.mubr.bf16.gmra.mrb[0].mxu0 %v846
    %v1937 = vpop.f32.mrb[0].mxu0
    %v1938 = vadd.f32 0.0, %v1937
    %v1939 = vpop.f32.mrb[0].mxu0
    %v1940 = vadd.f32 0.0, %v1939
    %v1941 = vpop.f32.mrb[0].mxu0
    %v1942 = vadd.f32 0.0, %v1941
    %v1943 = vpop.f32.mrb[0].mxu0
    %v1944 = vadd.f32 0.0, %v1943
    %1945 = vmatprep.mubr.bf16.mxu0 %v849
    %1946 = vmatmul.mubr.bf16.gmra.mrb[0].mxu0 %v848
    %v1947 = vpop.f32.mrb[0].mxu0
    %v1948 = vadd.f32 0.0, %v1947
    %v1949 = vpop.f32.mrb[0].mxu0
    %v1950 = vadd.f32 0.0, %v1949
    %v1951 = vpop.f32.mrb[0].mxu0
    %v1952 = vadd.f32 0.0, %v1951
    %v1953 = vpop.f32.mrb[0].mxu0
    %v1954 = vadd.f32 0.0, %v1953
    %1955 = vmatprep.mubr.bf16.mxu0 %v851
    %1956 = vmatmul.mubr.bf16.gmra.mrb[0].mxu0 %v850
    %v1957 = vpop.f32.mrb[0].mxu0
    %v1958 = vadd.f32 0.0, %v1957
    %v1959 = vpop.f32.mrb[0].mxu0
    %v1960 = vadd.f32 0.0, %v1959
    %v1961 = vpop.f32.mrb[0].mxu0
    %v1962 = vadd.f32 0.0, %v1961
    %v1963 = vpop.f32.mrb[0].mxu0
    %v1964 = vadd.f32 0.0, %v1963
    %1965 = vmatprep.mubr.bf16.mxu0 %v853
    %1966 = vmatmul.mubr.bf16.gmra.mrb[0].mxu0 %v852
    %v1967 = vpop.f32.mrb[0].mxu0
    %v1968 = vadd.f32 0.0, %v1967
    %v1969 = vpop.f32.mrb[0].mxu0
    %v1970 = vadd.f32 0.0, %v1969
    %v1971 = vpop.f32.mrb[0].mxu0
    %v1972 = vadd.f32 0.0, %v1971
    %v1973 = vpop.f32.mrb[0].mxu0
    %v1974 = vadd.f32 0.0, %v1973
    %1975 = vmatprep.mubr.bf16.mxu0 %v855
    %1976 = vmatmul.mubr.bf16.gmra.mrb[0].mxu0 %v854
    %v1977 = vpop.f32.mrb[0].mxu0
    %v1978 = vadd.f32 0.0, %v1977
    %v1979 = vpop.f32.mrb[0].mxu0
    %v1980 = vadd.f32 0.0, %v1979
    %v1981 = vpop.f32.mrb[0].mxu0
    %v1982 = vadd.f32 0.0, %v1981
    %v1983 = vpop.f32.mrb[0].mxu0
    %v1984 = vadd.f32 0.0, %v1983
    %1985 = vmatprep.mubr.bf16.mxu0 %v857
    %1986 = vmatmul.mubr.bf16.gmra.mrb[0].mxu0 %v856
    %v1987 = vpop.f32.mrb[0].mxu0
    %v1988 = vadd.f32 0.0, %v1987
    %v1989 = vpop.f32.mrb[0].mxu0
    %v1990 = vadd.f32 0.0, %v1989
    %v1991 = vpop.f32.mrb[0].mxu0
    %v1992 = vadd.f32 0.0, %v1991
    %v1993 = vpop.f32.mrb[0].mxu0
    %v1994 = vadd.f32 0.0, %v1993
    %1995 = vdwg.mxu0
    %1996 = vmatprep.subr.bf16.mxu0 %v1678
    %1997 = vmatpush1.bf16.msra.mxu0 %v1677
    %1998 = vmatprep.subr.bf16.mxu0 %v1682
    %1999 = vmatpush1.bf16.msra.mxu0 %v1681
    %2000 = vmatprep.subr.bf16.mxu0 %v1686
    %2001 = vmatpush1.bf16.msra.mxu0 %v1685
    %2002 = vmatprep.subr.bf16.mxu0 %v1690
    %2003 = vmatpush1.bf16.msra.mxu0 %v1689
    %2004 = vmatprep.subr.bf16.mxu0 %v1694
    %2005 = vmatpush1.bf16.msra.mxu0 %v1693
    %2006 = vmatprep.subr.bf16.mxu0 %v1698
    %2007 = vmatpush1.bf16.msra.mxu0 %v1697
    %2008 = vmatprep.subr.bf16.mxu0 %v1702
    %2009 = vmatpush1.bf16.msra.mxu0 %v1701
    %2010 = vmatprep.subr.bf16.mxu0 %v1706
    %2011 = vmatpush1.bf16.msra.mxu0 %v1705
    %2012 = vmatprep.subr.bf16.mxu0 %v1710
    %2013 = vmatpush1.bf16.msra.mxu0 %v1709
    %2014 = vmatprep.subr.bf16.mxu0 %v1714
    %2015 = vmatpush1.bf16.msra.mxu0 %v1713
    %2016 = vmatprep.subr.bf16.mxu0 %v1718
    %2017 = vmatpush1.bf16.msra.mxu0 %v1717
    %2018 = vmatprep.subr.bf16.mxu0 %v1722
    %2019 = vmatpush1.bf16.msra.mxu0 %v1721
    %2020 = vmatprep.subr.bf16.mxu0 %v1726
    %2021 = vmatpush1.bf16.msra.mxu0 %v1725
    %2022 = vmatprep.subr.bf16.mxu0 %v1730
    %2023 = vmatpush1.bf16.msra.mxu0 %v1729
    %2024 = vmatprep.subr.bf16.mxu0 %v1734
    %2025 = vmatpush1.bf16.msra.mxu0 %v1733
    %2026 = vmatprep.subr.bf16.mxu0 %v1738
    %2027 = vmatpush1.bf16.msra.mxu0 %v1737
    %2028 = vmatprep.mubr.bf16.mxu0 %v827
    %2029 = vmatmul.mubr.bf16.gmra.mrb[0].mxu0 %v826
    %v2030 = vpop.f32.mrb[0].mxu0
    %v2031 = vadd.f32 0.0, %v2030
    %v2032 = vpop.f32.mrb[0].mxu0
    %v2033 = vadd.f32 0.0, %v2032
    %v2034 = vpop.f32.mrb[0].mxu0
    %v2035 = vadd.f32 0.0, %v2034
    %v2036 = vpop.f32.mrb[0].mxu0
    %v2037 = vadd.f32 0.0, %v2036
    %2038 = vmatprep.mubr.bf16.mxu0 %v829
    %2039 = vmatmul.mubr.bf16.gmra.mrb[0].mxu0 %v828
    %v2040 = vpop.f32.mrb[0].mxu0
    %v2041 = vadd.f32 0.0, %v2040
    %v2042 = vpop.f32.mrb[0].mxu0
    %v2043 = vadd.f32 0.0, %v2042
    %v2044 = vpop.f32.mrb[0].mxu0
    %v2045 = vadd.f32 0.0, %v2044
    %v2046 = vpop.f32.mrb[0].mxu0
    %v2047 = vadd.f32 0.0, %v2046
    %2048 = vmatprep.mubr.bf16.mxu0 %v831
    %2049 = vmatmul.mubr.bf16.gmra.mrb[0].mxu0 %v830
    %v2050 = vpop.f32.mrb[0].mxu0
    %v2051 = vadd.f32 0.0, %v2050
    %v2052 = vpop.f32.mrb[0].mxu0
    %v2053 = vadd.f32 0.0, %v2052
    %v2054 = vpop.f32.mrb[0].mxu0
    %v2055 = vadd.f32 0.0, %v2054
    %v2056 = vpop.f32.mrb[0].mxu0
    %v2057 = vadd.f32 0.0, %v2056
    %2058 = vmatprep.mubr.bf16.mxu0 %v833
    %2059 = vmatmul.mubr.bf16.gmra.mrb[0].mxu0 %v832
    %v2060 = vpop.f32.mrb[0].mxu0
    %v2061 = vadd.f32 0.0, %v2060
    %v2062 = vpop.f32.mrb[0].mxu0
    %v2063 = vadd.f32 0.0, %v2062
    %v2064 = vpop.f32.mrb[0].mxu0
    %v2065 = vadd.f32 0.0, %v2064
    %v2066 = vpop.f32.mrb[0].mxu0
    %v2067 = vadd.f32 0.0, %v2066
    %2068 = vmatprep.mubr.bf16.mxu0 %v835
    %2069 = vmatmul.mubr.bf16.gmra.mrb[0].mxu0 %v834
    %v2070 = vpop.f32.mrb[0].mxu0
    %v2071 = vadd.f32 0.0, %v2070
    %v2072 = vpop.f32.mrb[0].mxu0
    %v2073 = vadd.f32 0.0, %v2072
    %v2074 = vpop.f32.mrb[0].mxu0
    %v2075 = vadd.f32 0.0, %v2074
    %v2076 = vpop.f32.mrb[0].mxu0
    %v2077 = vadd.f32 0.0, %v2076
    %2078 = vmatprep.mubr.bf16.mxu0 %v837
    %2079 = vmatmul.mubr.bf16.gmra.mrb[0].mxu0 %v836
    %v2080 = vpop.f32.mrb[0].mxu0
    %v2081 = vadd.f32 0.0, %v2080
    %v2082 = vpop.f32.mrb[0].mxu0
    %v2083 = vadd.f32 0.0, %v2082
    %v2084 = vpop.f32.mrb[0].mxu0
    %v2085 = vadd.f32 0.0, %v2084
    %v2086 = vpop.f32.mrb[0].mxu0
    %v2087 = vadd.f32 0.0, %v2086
    %2088 = vmatprep.mubr.bf16.mxu0 %v839
    %2089 = vmatmul.mubr.bf16.gmra.mrb[0].mxu0 %v838
    %v2090 = vpop.f32.mrb[0].mxu0
    %v2091 = vadd.f32 0.0, %v2090
    %v2092 = vpop.f32.mrb[0].mxu0
    %v2093 = vadd.f32 0.0, %v2092
    %v2094 = vpop.f32.mrb[0].mxu0
    %v2095 = vadd.f32 0.0, %v2094
    %v2096 = vpop.f32.mrb[0].mxu0
    %v2097 = vadd.f32 0.0, %v2096
    %2098 = vmatprep.mubr.bf16.mxu0 %v841
    %2099 = vmatmul.mubr.bf16.gmra.mrb[0].mxu0 %v840
    %v2100 = vpop.f32.mrb[0].mxu0
    %v2101 = vadd.f32 0.0, %v2100
    %v2102 = vpop.f32.mrb[0].mxu0
    %v2103 = vadd.f32 0.0, %v2102
    %v2104 = vpop.f32.mrb[0].mxu0
    %v2105 = vadd.f32 0.0, %v2104
    %v2106 = vpop.f32.mrb[0].mxu0
    %v2107 = vadd.f32 0.0, %v2106
    %2108 = vmatprep.mubr.bf16.mxu0 %v843
    %2109 = vmatmul.mubr.bf16.gmra.mrb[0].mxu0 %v842
    %v2110 = vpop.f32.mrb[0].mxu0
    %v2111 = vadd.f32 0.0, %v2110
    %v2112 = vpop.f32.mrb[0].mxu0
    %v2113 = vadd.f32 0.0, %v2112
    %v2114 = vpop.f32.mrb[0].mxu0
    %v2115 = vadd.f32 0.0, %v2114
    %v2116 = vpop.f32.mrb[0].mxu0
    %v2117 = vadd.f32 0.0, %v2116
    %2118 = vmatprep.mubr.bf16.mxu0 %v845
    %2119 = vmatmul.mubr.bf16.gmra.mrb[0].mxu0 %v844
    %v2120 = vpop.f32.mrb[0].mxu0
    %v2121 = vadd.f32 0.0, %v2120
    %v2122 = vpop.f32.mrb[0].mxu0
    %v2123 = vadd.f32 0.0, %v2122
    %v2124 = vpop.f32.mrb[0].mxu0
    %v2125 = vadd.f32 0.0, %v2124
    %v2126 = vpop.f32.mrb[0].mxu0
    %v2127 = vadd.f32 0.0, %v2126
    %2128 = vmatprep.mubr.bf16.mxu0 %v847
    %2129 = vmatmul.mubr.bf16.gmra.mrb[0].mxu0 %v846
    %v2130 = vpop.f32.mrb[0].mxu0
    %v2131 = vadd.f32 0.0, %v2130
    %v2132 = vpop.f32.mrb[0].mxu0
    %v2133 = vadd.f32 0.0, %v2132
    %v2134 = vpop.f32.mrb[0].mxu0
    %v2135 = vadd.f32 0.0, %v2134
    %v2136 = vpop.f32.mrb[0].mxu0
    %v2137 = vadd.f32 0.0, %v2136
    %2138 = vmatprep.mubr.bf16.mxu0 %v849
    %2139 = vmatmul.mubr.bf16.gmra.mrb[0].mxu0 %v848
    %v2140 = vpop.f32.mrb[0].mxu0
    %v2141 = vadd.f32 0.0, %v2140
    %v2142 = vpop.f32.mrb[0].mxu0
    %v2143 = vadd.f32 0.0, %v2142
    %v2144 = vpop.f32.mrb[0].mxu0
    %v2145 = vadd.f32 0.0, %v2144
    %v2146 = vpop.f32.mrb[0].mxu0
    %v2147 = vadd.f32 0.0, %v2146
    %2148 = vmatprep.mubr.bf16.mxu0 %v851
    %2149 = vmatmul.mubr.bf16.gmra.mrb[0].mxu0 %v850
    %v2150 = vpop.f32.mrb[0].mxu0
    %v2151 = vadd.f32 0.0, %v2150
    %v2152 = vpop.f32.mrb[0].mxu0
    %v2153 = vadd.f32 0.0, %v2152
    %v2154 = vpop.f32.mrb[0].mxu0
    %v2155 = vadd.f32 0.0, %v2154
    %v2156 = vpop.f32.mrb[0].mxu0
    %v2157 = vadd.f32 0.0, %v2156
    %2158 = vmatprep.mubr.bf16.mxu0 %v853
    %2159 = vmatmul.mubr.bf16.gmra.mrb[0].mxu0 %v852
    %v2160 = vpop.f32.mrb[0].mxu0
    %v2161 = vadd.f32 0.0, %v2160
    %v2162 = vpop.f32.mrb[0].mxu0
    %v2163 = vadd.f32 0.0, %v2162
    %v2164 = vpop.f32.mrb[0].mxu0
    %v2165 = vadd.f32 0.0, %v2164
    %v2166 = vpop.f32.mrb[0].mxu0
    %v2167 = vadd.f32 0.0, %v2166
    %2168 = vmatprep.mubr.bf16.mxu0 %v855
    %2169 = vmatmul.mubr.bf16.gmra.mrb[0].mxu0 %v854
    %v2170 = vpop.f32.mrb[0].mxu0
    %v2171 = vadd.f32 0.0, %v2170
    %v2172 = vpop.f32.mrb[0].mxu0
    %v2173 = vadd.f32 0.0, %v2172
    %v2174 = vpop.f32.mrb[0].mxu0
    %v2175 = vadd.f32 0.0, %v2174
    %v2176 = vpop.f32.mrb[0].mxu0
    %v2177 = vadd.f32 0.0, %v2176
    %2178 = vmatprep.mubr.bf16.mxu0 %v857
    %2179 = vmatmul.mubr.bf16.gmra.mrb[0].mxu0 %v856
    %v2180 = vpop.f32.mrb[0].mxu0
    %v2181 = vadd.f32 0.0, %v2180
    %v2182 = vpop.f32.mrb[0].mxu0
    %v2183 = vadd.f32 0.0, %v2182
    %v2184 = vpop.f32.mrb[0].mxu0
    %v2185 = vadd.f32 0.0, %v2184
    %v2186 = vpop.f32.mrb[0].mxu0
    %v2187 = vadd.f32 0.0, %v2186
    %2188 = vdwg.mxu0
    %v2193 = vcombine.low %v1372, %v1374
    %v2194 = vcombine.high %v1372, %v1374
    %v2195 = vcombine.low %v1413, %v1415
    %v2196 = vcombine.high %v1413, %v1415
    %v2198 = vunpack.c.l.s4 1966171168
    %v2199 = vunpack.c.0.s8 %v2198
    %v2200 = vlaneseq
    %v2201 = vshrl.u32 %v2200, 7
    %v2202 = vsub.s32 %v2199, %v2201
    %v2203 = vrot.slane %v2193, %v2202
    %v2205 = vunpack.c.l.s4 1966171168
    %v2206 = vunpack.c.0.s8 %v2205
    %v2207 = vlaneseq
    %v2208 = vshrl.u32 %v2207, 7
    %v2209 = vsub.s32 %v2206, %v2208
    %v2210 = vrot.slane %v2194, %v2209
    %v2212 = vunpack.c.l.s4 1966171168
    %v2213 = vunpack.c.0.s8 %v2212
    %v2214 = vlaneseq
    %v2215 = vshrl.u32 %v2214, 7
    %v2216 = vsub.s32 %v2213, %v2215
    %v2217 = vrot.slane %v2195, %v2216
    %v2219 = vunpack.c.l.s4 1966171168
    %v2220 = vunpack.c.0.s8 %v2219
    %v2221 = vlaneseq
    %v2222 = vshrl.u32 %v2221, 7
    %v2223 = vsub.s32 %v2220, %v2222
    %v2224 = vrot.slane %v2196, %v2223
    %v2225 = vcombine.low %v2203, %v2217
    %v2226 = vcombine.high %v2203, %v2217
    %v2227 = vcombine.low %v2210, %v2224
    %v2228 = vcombine.high %v2210, %v2224
    %v2230 = vunpack.c.l.s4 1966171168
    %v2231 = vunpack.c.0.s8 %v2230
    %v2232 = vlaneseq
    %v2233 = vshrl.u32 %v2232, 7
    %v2234 = vsub.s32 %v2231, %v2233
    %v2235 = vrot.slane %v2225, %v2234
    %v2237 = vunpack.c.l.s4 1966171168
    %v2238 = vunpack.c.0.s8 %v2237
    %v2239 = vlaneseq
    %v2240 = vshrl.u32 %v2239, 7
    %v2241 = vsub.s32 %v2238, %v2240
    %v2242 = vrot.slane %v2227, %v2241
    %v2244 = vunpack.c.l.s4 1966171168
    %v2245 = vunpack.c.0.s8 %v2244
    %v2246 = vlaneseq
    %v2247 = vshrl.u32 %v2246, 7
    %v2248 = vsub.s32 %v2245, %v2247
    %v2249 = vrot.slane %v2226, %v2248
    %v2251 = vunpack.c.l.s4 1966171168
    %v2252 = vunpack.c.0.s8 %v2251
    %v2253 = vlaneseq
    %v2254 = vshrl.u32 %v2253, 7
    %v2255 = vsub.s32 %v2252, %v2254
    %v2256 = vrot.slane %v2228, %v2255
    %v2257 = vcombine.high %v2235, %v2235
    %v2258 = vcombine.high %v2242, %v2242
    %v2259 = vcombine.high %v2249, %v2249
    %v2260 = vcombine.high %v2256, %v2256
    %v2261 = vlaneseq
    %v2262 = vshrl.u32 %v2261, 7
    %v2263 = vsub.s32 0, %v2262
    %v2264 = vrot.slane %v2235, %v2263
    %v2265 = vlaneseq
    %v2266 = vshrl.u32 %v2265, 7
    %v2267 = vsub.s32 1, %v2266
    %v2268 = vrot.slane %v2235, %v2267
    %v2269 = vlaneseq
    %v2270 = vshrl.u32 %v2269, 7
    %v2271 = vsub.s32 2, %v2270
    %v2272 = vrot.slane %v2235, %v2271
    %v2273 = vlaneseq
    %v2274 = vshrl.u32 %v2273, 7
    %v2275 = vsub.s32 3, %v2274
    %v2276 = vrot.slane %v2235, %v2275
    %v2277 = vlaneseq
    %v2278 = vshrl.u32 %v2277, 7
    %v2279 = vsub.s32 0, %v2278
    %v2280 = vrot.slane %v2249, %v2279
    %v2281 = vlaneseq
    %v2282 = vshrl.u32 %v2281, 7
    %v2283 = vsub.s32 1, %v2282
    %v2284 = vrot.slane %v2249, %v2283
    %v2285 = vlaneseq
    %v2286 = vshrl.u32 %v2285, 7
    %v2287 = vsub.s32 2, %v2286
    %v2288 = vrot.slane %v2249, %v2287
    %v2289 = vlaneseq
    %v2290 = vshrl.u32 %v2289, 7
    %v2291 = vsub.s32 3, %v2290
    %v2292 = vrot.slane %v2249, %v2291
    %v2293 = vlaneseq
    %v2294 = vshrl.u32 %v2293, 7
    %v2295 = vsub.s32 0, %v2294
    %v2296 = vrot.slane %v2257, %v2295
    %v2297 = vlaneseq
    %v2298 = vshrl.u32 %v2297, 7
    %v2299 = vsub.s32 1, %v2298
    %v2300 = vrot.slane %v2257, %v2299
    %v2301 = vlaneseq
    %v2302 = vshrl.u32 %v2301, 7
    %v2303 = vsub.s32 2, %v2302
    %v2304 = vrot.slane %v2257, %v2303
    %v2305 = vlaneseq
    %v2306 = vshrl.u32 %v2305, 7
    %v2307 = vsub.s32 3, %v2306
    %v2308 = vrot.slane %v2257, %v2307
    %v2309 = vlaneseq
    %v2310 = vshrl.u32 %v2309, 7
    %v2311 = vsub.s32 0, %v2310
    %v2312 = vrot.slane %v2259, %v2311
    %v2313 = vlaneseq
    %v2314 = vshrl.u32 %v2313, 7
    %v2315 = vsub.s32 1, %v2314
    %v2316 = vrot.slane %v2259, %v2315
    %v2317 = vlaneseq
    %v2318 = vshrl.u32 %v2317, 7
    %v2319 = vsub.s32 2, %v2318
    %v2320 = vrot.slane %v2259, %v2319
    %v2321 = vlaneseq
    %v2322 = vshrl.u32 %v2321, 7
    %v2323 = vsub.s32 3, %v2322
    %v2324 = vrot.slane %v2259, %v2323
    %v2325 = vlaneseq
    %v2326 = vshrl.u32 %v2325, 7
    %v2327 = vsub.s32 0, %v2326
    %v2328 = vrot.slane %v2242, %v2327
    %v2329 = vlaneseq
    %v2330 = vshrl.u32 %v2329, 7
    %v2331 = vsub.s32 1, %v2330
    %v2332 = vrot.slane %v2242, %v2331
    %v2333 = vlaneseq
    %v2334 = vshrl.u32 %v2333, 7
    %v2335 = vsub.s32 2, %v2334
    %v2336 = vrot.slane %v2242, %v2335
    %v2337 = vlaneseq
    %v2338 = vshrl.u32 %v2337, 7
    %v2339 = vsub.s32 3, %v2338
    %v2340 = vrot.slane %v2242, %v2339
    %v2341 = vlaneseq
    %v2342 = vshrl.u32 %v2341, 7
    %v2343 = vsub.s32 0, %v2342
    %v2344 = vrot.slane %v2256, %v2343
    %v2345 = vlaneseq
    %v2346 = vshrl.u32 %v2345, 7
    %v2347 = vsub.s32 1, %v2346
    %v2348 = vrot.slane %v2256, %v2347
    %v2349 = vlaneseq
    %v2350 = vshrl.u32 %v2349, 7
    %v2351 = vsub.s32 2, %v2350
    %v2352 = vrot.slane %v2256, %v2351
    %v2353 = vlaneseq
    %v2354 = vshrl.u32 %v2353, 7
    %v2355 = vsub.s32 3, %v2354
    %v2356 = vrot.slane %v2256, %v2355
    %v2357 = vlaneseq
    %v2358 = vshrl.u32 %v2357, 7
    %v2359 = vsub.s32 0, %v2358
    %v2360 = vrot.slane %v2258, %v2359
    %v2361 = vlaneseq
    %v2362 = vshrl.u32 %v2361, 7
    %v2363 = vsub.s32 1, %v2362
    %v2364 = vrot.slane %v2258, %v2363
    %v2365 = vlaneseq
    %v2366 = vshrl.u32 %v2365, 7
    %v2367 = vsub.s32 2, %v2366
    %v2368 = vrot.slane %v2258, %v2367
    %v2369 = vlaneseq
    %v2370 = vshrl.u32 %v2369, 7
    %v2371 = vsub.s32 3, %v2370
    %v2372 = vrot.slane %v2258, %v2371
    %v2373 = vlaneseq
    %v2374 = vshrl.u32 %v2373, 7
    %v2375 = vsub.s32 0, %v2374
    %v2376 = vrot.slane %v2260, %v2375
    %v2377 = vlaneseq
    %v2378 = vshrl.u32 %v2377, 7
    %v2379 = vsub.s32 1, %v2378
    %v2380 = vrot.slane %v2260, %v2379
    %v2381 = vlaneseq
    %v2382 = vshrl.u32 %v2381, 7
    %v2383 = vsub.s32 2, %v2382
    %v2384 = vrot.slane %v2260, %v2383
    %v2385 = vlaneseq
    %v2386 = vshrl.u32 %v2385, 7
    %v2387 = vsub.s32 3, %v2386
    %v2388 = vrot.slane %v2260, %v2387
    %v2421 = vadd.f32 %v1838, %v2264
    %v2422 = vadd.f32 %v1840, %v2268
    %v2423 = vadd.f32 %v2031, %v2272
    %v2424 = vadd.f32 %v2033, %v2276
    %v2425 = vadd.f32 %v1842, %v2264
    %v2426 = vadd.f32 %v1844, %v2268
    %v2427 = vadd.f32 %v2035, %v2272
    %v2428 = vadd.f32 %v2037, %v2276
    %v2429 = vadd.f32 %v1848, %v2264
    %v2430 = vadd.f32 %v1850, %v2268
    %v2431 = vadd.f32 %v2041, %v2272
    %v2432 = vadd.f32 %v2043, %v2276
    %v2433 = vadd.f32 %v1852, %v2264
    %v2434 = vadd.f32 %v1854, %v2268
    %v2435 = vadd.f32 %v2045, %v2272
    %v2436 = vadd.f32 %v2047, %v2276
    %v2437 = vadd.f32 %v1858, %v2280
    %v2438 = vadd.f32 %v1860, %v2284
    %v2439 = vadd.f32 %v2051, %v2288
    %v2440 = vadd.f32 %v2053, %v2292
    %v2441 = vadd.f32 %v1862, %v2280
    %v2442 = vadd.f32 %v1864, %v2284
    %v2443 = vadd.f32 %v2055, %v2288
    %v2444 = vadd.f32 %v2057, %v2292
    %v2445 = vadd.f32 %v1868, %v2280
    %v2446 = vadd.f32 %v1870, %v2284
    %v2447 = vadd.f32 %v2061, %v2288
    %v2448 = vadd.f32 %v2063, %v2292
    %v2449 = vadd.f32 %v1872, %v2280
    %v2450 = vadd.f32 %v1874, %v2284
    %v2451 = vadd.f32 %v2065, %v2288
    %v2452 = vadd.f32 %v2067, %v2292
    %v2453 = vadd.f32 %v1878, %v2296
    %v2454 = vadd.f32 %v1880, %v2300
    %v2455 = vadd.f32 %v2071, %v2304
    %v2456 = vadd.f32 %v2073, %v2308
    %v2457 = vadd.f32 %v1882, %v2296
    %v2458 = vadd.f32 %v1884, %v2300
    %v2459 = vadd.f32 %v2075, %v2304
    %v2460 = vadd.f32 %v2077, %v2308
    %v2461 = vadd.f32 %v1888, %v2296
    %v2462 = vadd.f32 %v1890, %v2300
    %v2463 = vadd.f32 %v2081, %v2304
    %v2464 = vadd.f32 %v2083, %v2308
    %v2465 = vadd.f32 %v1892, %v2296
    %v2466 = vadd.f32 %v1894, %v2300
    %v2467 = vadd.f32 %v2085, %v2304
    %v2468 = vadd.f32 %v2087, %v2308
    %v2469 = vadd.f32 %v1898, %v2312
    %v2470 = vadd.f32 %v1900, %v2316
    %v2471 = vadd.f32 %v2091, %v2320
    %v2472 = vadd.f32 %v2093, %v2324
    %v2473 = vadd.f32 %v1902, %v2312
    %v2474 = vadd.f32 %v1904, %v2316
    %v2475 = vadd.f32 %v2095, %v2320
    %v2476 = vadd.f32 %v2097, %v2324
    %v2477 = vadd.f32 %v1908, %v2312
    %v2478 = vadd.f32 %v1910, %v2316
    %v2479 = vadd.f32 %v2101, %v2320
    %v2480 = vadd.f32 %v2103, %v2324
    %v2481 = vadd.f32 %v1912, %v2312
    %v2482 = vadd.f32 %v1914, %v2316
    %v2483 = vadd.f32 %v2105, %v2320
    %v2484 = vadd.f32 %v2107, %v2324
    %v2485 = vadd.f32 %v1918, %v2328
    %v2486 = vadd.f32 %v1920, %v2332
    %v2487 = vadd.f32 %v2111, %v2336
    %v2488 = vadd.f32 %v2113, %v2340
    %v2489 = vadd.f32 %v1922, %v2328
    %v2490 = vadd.f32 %v1924, %v2332
    %v2491 = vadd.f32 %v2115, %v2336
    %v2492 = vadd.f32 %v2117, %v2340
    %v2493 = vadd.f32 %v1928, %v2328
    %v2494 = vadd.f32 %v1930, %v2332
    %v2495 = vadd.f32 %v2121, %v2336
    %v2496 = vadd.f32 %v2123, %v2340
    %v2497 = vadd.f32 %v1932, %v2328
    %v2498 = vadd.f32 %v1934, %v2332
    %v2499 = vadd.f32 %v2125, %v2336
    %v2500 = vadd.f32 %v2127, %v2340
    %v2501 = vadd.f32 %v1938, %v2344
    %v2502 = vadd.f32 %v1940, %v2348
    %v2503 = vadd.f32 %v2131, %v2352
    %v2504 = vadd.f32 %v2133, %v2356
    %v2505 = vadd.f32 %v1942, %v2344
    %v2506 = vadd.f32 %v1944, %v2348
    %v2507 = vadd.f32 %v2135, %v2352
    %v2508 = vadd.f32 %v2137, %v2356
    %v2509 = vadd.f32 %v1948, %v2344
    %v2510 = vadd.f32 %v1950, %v2348
    %v2511 = vadd.f32 %v2141, %v2352
    %v2512 = vadd.f32 %v2143, %v2356
    %v2513 = vadd.f32 %v1952, %v2344
    %v2514 = vadd.f32 %v1954, %v2348
    %v2515 = vadd.f32 %v2145, %v2352
    %v2516 = vadd.f32 %v2147, %v2356
    %v2517 = vadd.f32 %v1958, %v2360
    %v2518 = vadd.f32 %v1960, %v2364
    %v2519 = vadd.f32 %v2151, %v2368
    %v2520 = vadd.f32 %v2153, %v2372
    %v2521 = vadd.f32 %v1962, %v2360
    %v2522 = vadd.f32 %v1964, %v2364
    %v2523 = vadd.f32 %v2155, %v2368
    %v2524 = vadd.f32 %v2157, %v2372
    %v2525 = vadd.f32 %v1968, %v2360
    %v2526 = vadd.f32 %v1970, %v2364
    %v2527 = vadd.f32 %v2161, %v2368
    %v2528 = vadd.f32 %v2163, %v2372
    %v2529 = vadd.f32 %v1972, %v2360
    %v2530 = vadd.f32 %v1974, %v2364
    %v2531 = vadd.f32 %v2165, %v2368
    %v2532 = vadd.f32 %v2167, %v2372
    %v2533 = vadd.f32 %v1978, %v2376
    %v2534 = vadd.f32 %v1980, %v2380
    %v2535 = vadd.f32 %v2171, %v2384
    %v2536 = vadd.f32 %v2173, %v2388
    %v2537 = vadd.f32 %v1982, %v2376
    %v2538 = vadd.f32 %v1984, %v2380
    %v2539 = vadd.f32 %v2175, %v2384
    %v2540 = vadd.f32 %v2177, %v2388
    %v2541 = vadd.f32 %v1988, %v2376
    %v2542 = vadd.f32 %v1990, %v2380
    %v2543 = vadd.f32 %v2181, %v2384
    %v2544 = vadd.f32 %v2183, %v2388
    %v2545 = vadd.f32 %v1992, %v2376
    %v2546 = vadd.f32 %v1994, %v2380
    %v2547 = vadd.f32 %v2185, %v2384
    %v2548 = vadd.f32 %v2187, %v2388
    %v2549 = vmax.f32 %v2421, 0.0
    %v2550 = vmax.f32 %v2422, 0.0
    %v2551 = vmax.f32 %v2423, 0.0
    %v2552 = vmax.f32 %v2424, 0.0
    %v2553 = vmax.f32 %v2425, 0.0
    %v2554 = vmax.f32 %v2426, 0.0
    %v2555 = vmax.f32 %v2427, 0.0
    %v2556 = vmax.f32 %v2428, 0.0
    %v2557 = vmax.f32 %v2429, 0.0
    %v2558 = vmax.f32 %v2430, 0.0
    %v2559 = vmax.f32 %v2431, 0.0
    %v2560 = vmax.f32 %v2432, 0.0
    %v2561 = vmax.f32 %v2433, 0.0
    %v2562 = vmax.f32 %v2434, 0.0
    %v2563 = vmax.f32 %v2435, 0.0
    %v2564 = vmax.f32 %v2436, 0.0
    %v2565 = vmax.f32 %v2437, 0.0
    %v2566 = vmax.f32 %v2438, 0.0
    %v2567 = vmax.f32 %v2439, 0.0
    %v2568 = vmax.f32 %v2440, 0.0
    %v2569 = vmax.f32 %v2441, 0.0
    %v2570 = vmax.f32 %v2442, 0.0
    %v2571 = vmax.f32 %v2443, 0.0
    %v2572 = vmax.f32 %v2444, 0.0
    %v2573 = vmax.f32 %v2445, 0.0
    %v2574 = vmax.f32 %v2446, 0.0
    %v2575 = vmax.f32 %v2447, 0.0
    %v2576 = vmax.f32 %v2448, 0.0
    %v2577 = vmax.f32 %v2449, 0.0
    %v2578 = vmax.f32 %v2450, 0.0
    %v2579 = vmax.f32 %v2451, 0.0
    %v2580 = vmax.f32 %v2452, 0.0
    %v2581 = vmax.f32 %v2453, 0.0
    %v2582 = vmax.f32 %v2454, 0.0
    %v2583 = vmax.f32 %v2455, 0.0
    %v2584 = vmax.f32 %v2456, 0.0
    %v2585 = vmax.f32 %v2457, 0.0
    %v2586 = vmax.f32 %v2458, 0.0
    %v2587 = vmax.f32 %v2459, 0.0
    %v2588 = vmax.f32 %v2460, 0.0
    %v2589 = vmax.f32 %v2461, 0.0
    %v2590 = vmax.f32 %v2462, 0.0
    %v2591 = vmax.f32 %v2463, 0.0
    %v2592 = vmax.f32 %v2464, 0.0
    %v2593 = vmax.f32 %v2465, 0.0
    %v2594 = vmax.f32 %v2466, 0.0
    %v2595 = vmax.f32 %v2467, 0.0
    %v2596 = vmax.f32 %v2468, 0.0
    %v2597 = vmax.f32 %v2469, 0.0
    %v2598 = vmax.f32 %v2470, 0.0
    %v2599 = vmax.f32 %v2471, 0.0
    %v2600 = vmax.f32 %v2472, 0.0
    %v2601 = vmax.f32 %v2473, 0.0
    %v2602 = vmax.f32 %v2474, 0.0
    %v2603 = vmax.f32 %v2475, 0.0
    %v2604 = vmax.f32 %v2476, 0.0
    %v2605 = vmax.f32 %v2477, 0.0
    %v2606 = vmax.f32 %v2478, 0.0
    %v2607 = vmax.f32 %v2479, 0.0
    %v2608 = vmax.f32 %v2480, 0.0
    %v2609 = vmax.f32 %v2481, 0.0
    %v2610 = vmax.f32 %v2482, 0.0
    %v2611 = vmax.f32 %v2483, 0.0
    %v2612 = vmax.f32 %v2484, 0.0
    %v2613 = vmax.f32 %v2485, 0.0
    %v2614 = vmax.f32 %v2486, 0.0
    %v2615 = vmax.f32 %v2487, 0.0
    %v2616 = vmax.f32 %v2488, 0.0
    %v2617 = vmax.f32 %v2489, 0.0
    %v2618 = vmax.f32 %v2490, 0.0
    %v2619 = vmax.f32 %v2491, 0.0
    %v2620 = vmax.f32 %v2492, 0.0
    %v2621 = vmax.f32 %v2493, 0.0
    %v2622 = vmax.f32 %v2494, 0.0
    %v2623 = vmax.f32 %v2495, 0.0
    %v2624 = vmax.f32 %v2496, 0.0
    %v2625 = vmax.f32 %v2497, 0.0
    %v2626 = vmax.f32 %v2498, 0.0
    %v2627 = vmax.f32 %v2499, 0.0
    %v2628 = vmax.f32 %v2500, 0.0
    %v2629 = vmax.f32 %v2501, 0.0
    %v2630 = vmax.f32 %v2502, 0.0
    %v2631 = vmax.f32 %v2503, 0.0
    %v2632 = vmax.f32 %v2504, 0.0
    %v2633 = vmax.f32 %v2505, 0.0
    %v2634 = vmax.f32 %v2506, 0.0
    %v2635 = vmax.f32 %v2507, 0.0
    %v2636 = vmax.f32 %v2508, 0.0
    %v2637 = vmax.f32 %v2509, 0.0
    %v2638 = vmax.f32 %v2510, 0.0
    %v2639 = vmax.f32 %v2511, 0.0
    %v2640 = vmax.f32 %v2512, 0.0
    %v2641 = vmax.f32 %v2513, 0.0
    %v2642 = vmax.f32 %v2514, 0.0
    %v2643 = vmax.f32 %v2515, 0.0
    %v2644 = vmax.f32 %v2516, 0.0
    %v2645 = vmax.f32 %v2517, 0.0
    %v2646 = vmax.f32 %v2518, 0.0
    %v2647 = vmax.f32 %v2519, 0.0
    %v2648 = vmax.f32 %v2520, 0.0
    %v2649 = vmax.f32 %v2521, 0.0
    %v2650 = vmax.f32 %v2522, 0.0
    %v2651 = vmax.f32 %v2523, 0.0
    %v2652 = vmax.f32 %v2524, 0.0
    %v2653 = vmax.f32 %v2525, 0.0
    %v2654 = vmax.f32 %v2526, 0.0
    %v2655 = vmax.f32 %v2527, 0.0
    %v2656 = vmax.f32 %v2528, 0.0
    %v2657 = vmax.f32 %v2529, 0.0
    %v2658 = vmax.f32 %v2530, 0.0
    %v2659 = vmax.f32 %v2531, 0.0
    %v2660 = vmax.f32 %v2532, 0.0
    %v2661 = vmax.f32 %v2533, 0.0
    %v2662 = vmax.f32 %v2534, 0.0
    %v2663 = vmax.f32 %v2535, 0.0
    %v2664 = vmax.f32 %v2536, 0.0
    %v2665 = vmax.f32 %v2537, 0.0
    %v2666 = vmax.f32 %v2538, 0.0
    %v2667 = vmax.f32 %v2539, 0.0
    %v2668 = vmax.f32 %v2540, 0.0
    %v2669 = vmax.f32 %v2541, 0.0
    %v2670 = vmax.f32 %v2542, 0.0
    %v2671 = vmax.f32 %v2543, 0.0
    %v2672 = vmax.f32 %v2544, 0.0
    %v2673 = vmax.f32 %v2545, 0.0
    %v2674 = vmax.f32 %v2546, 0.0
    %v2675 = vmax.f32 %v2547, 0.0
    %v2676 = vmax.f32 %v2548, 0.0
    %v2677 = vpack.c.bf16 %v2553, %v2549
    %v2678 = vpack.c.bf16 %v2554, %v2550
    %v2679 = vpack.c.bf16 %v2555, %v2551
    %v2680 = vpack.c.bf16 %v2556, %v2552
    %v2681 = vpack.c.bf16 %v2561, %v2557
    %v2682 = vpack.c.bf16 %v2562, %v2558
    %v2683 = vpack.c.bf16 %v2563, %v2559
    %v2684 = vpack.c.bf16 %v2564, %v2560
    %v2685 = vpack.c.bf16 %v2569, %v2565
    %v2686 = vpack.c.bf16 %v2570, %v2566
    %v2687 = vpack.c.bf16 %v2571, %v2567
    %v2688 = vpack.c.bf16 %v2572, %v2568
    %v2689 = vpack.c.bf16 %v2577, %v2573
    %v2690 = vpack.c.bf16 %v2578, %v2574
    %v2691 = vpack.c.bf16 %v2579, %v2575
    %v2692 = vpack.c.bf16 %v2580, %v2576
    %v2693 = vpack.c.bf16 %v2585, %v2581
    %v2694 = vpack.c.bf16 %v2586, %v2582
    %v2695 = vpack.c.bf16 %v2587, %v2583
    %v2696 = vpack.c.bf16 %v2588, %v2584
    %v2697 = vpack.c.bf16 %v2593, %v2589
    %v2698 = vpack.c.bf16 %v2594, %v2590
    %v2699 = vpack.c.bf16 %v2595, %v2591
    %v2700 = vpack.c.bf16 %v2596, %v2592
    %v2701 = vpack.c.bf16 %v2601, %v2597
    %v2702 = vpack.c.bf16 %v2602, %v2598
    %v2703 = vpack.c.bf16 %v2603, %v2599
    %v2704 = vpack.c.bf16 %v2604, %v2600
    %v2705 = vpack.c.bf16 %v2609, %v2605
    %v2706 = vpack.c.bf16 %v2610, %v2606
    %v2707 = vpack.c.bf16 %v2611, %v2607
    %v2708 = vpack.c.bf16 %v2612, %v2608
    %v2709 = vpack.c.bf16 %v2617, %v2613
    %v2710 = vpack.c.bf16 %v2618, %v2614
    %v2711 = vpack.c.bf16 %v2619, %v2615
    %v2712 = vpack.c.bf16 %v2620, %v2616
    %v2713 = vpack.c.bf16 %v2625, %v2621
    %v2714 = vpack.c.bf16 %v2626, %v2622
    %v2715 = vpack.c.bf16 %v2627, %v2623
    %v2716 = vpack.c.bf16 %v2628, %v2624
    %v2717 = vpack.c.bf16 %v2633, %v2629
    %v2718 = vpack.c.bf16 %v2634, %v2630
    %v2719 = vpack.c.bf16 %v2635, %v2631
    %v2720 = vpack.c.bf16 %v2636, %v2632
    %v2721 = vpack.c.bf16 %v2641, %v2637
    %v2722 = vpack.c.bf16 %v2642, %v2638
    %v2723 = vpack.c.bf16 %v2643, %v2639
    %v2724 = vpack.c.bf16 %v2644, %v2640
    %v2725 = vpack.c.bf16 %v2649, %v2645
    %v2726 = vpack.c.bf16 %v2650, %v2646
    %v2727 = vpack.c.bf16 %v2651, %v2647
    %v2728 = vpack.c.bf16 %v2652, %v2648
    %v2729 = vpack.c.bf16 %v2657, %v2653
    %v2730 = vpack.c.bf16 %v2658, %v2654
    %v2731 = vpack.c.bf16 %v2659, %v2655
    %v2732 = vpack.c.bf16 %v2660, %v2656
    %v2733 = vpack.c.bf16 %v2665, %v2661
    %v2734 = vpack.c.bf16 %v2666, %v2662
    %v2735 = vpack.c.bf16 %v2667, %v2663
    %v2736 = vpack.c.bf16 %v2668, %v2664
    %v2737 = vpack.c.bf16 %v2673, %v2669
    %v2738 = vpack.c.bf16 %v2674, %v2670
    %v2739 = vpack.c.bf16 %v2675, %v2671
    %v2740 = vpack.c.bf16 %v2676, %v2672
    %v2741 = vld [vmem:[%s7] sm:$0xf]
    %v2742 = vld [vmem:[%s7 + $0x4] sm:$0xf]
    %v2743 = vld [vmem:[%s7 + $0x8] sm:$0xf]
    %v2744 = vld [vmem:[%s7 + $0xc] sm:$0xf]
    %v2745 = vld [vmem:[%s7 + $0x10] sm:$0xf]
    %v2746 = vld [vmem:[%s7 + $0x14] sm:$0xf]
    %v2747 = vld [vmem:[%s7 + $0x18] sm:$0xf]
    %v2748 = vld [vmem:[%s7 + $0x1c] sm:$0xf]
    %v2749 = vld [vmem:[%s7 + $0x20] sm:$0xf]
    %v2750 = vld [vmem:[%s7 + $0x24] sm:$0xf]
    %v2751 = vld [vmem:[%s7 + $0x28] sm:$0xf]
    %v2752 = vld [vmem:[%s7 + $0x2c] sm:$0xf]
    %v2753 = vld [vmem:[%s7 + $0x30] sm:$0xf]
    %v2754 = vld [vmem:[%s7 + $0x34] sm:$0xf]
    %v2755 = vld [vmem:[%s7 + $0x38] sm:$0xf]
    %v2756 = vld [vmem:[%s7 + $0x3c] sm:$0xf]
    %v2757 = vld [vmem:[%s7 + $0x40] sm:$0xf]
    %v2758 = vld [vmem:[%s7 + $0x44] sm:$0xf]
    %v2759 = vld [vmem:[%s7 + $0x48] sm:$0xf]
    %v2760 = vld [vmem:[%s7 + $0x4c] sm:$0xf]
    %v2761 = vld [vmem:[%s7 + $0x50] sm:$0xf]
    %v2762 = vld [vmem:[%s7 + $0x54] sm:$0xf]
    %v2763 = vld [vmem:[%s7 + $0x58] sm:$0xf]
    %v2764 = vld [vmem:[%s7 + $0x5c] sm:$0xf]
    %v2765 = vld [vmem:[%s7 + $0x60] sm:$0xf]
    %v2766 = vld [vmem:[%s7 + $0x64] sm:$0xf]
    %v2767 = vld [vmem:[%s7 + $0x68] sm:$0xf]
    %v2768 = vld [vmem:[%s7 + $0x6c] sm:$0xf]
    %v2769 = vld [vmem:[%s7 + $0x70] sm:$0xf]
    %v2770 = vld [vmem:[%s7 + $0x74] sm:$0xf]
    %v2771 = vld [vmem:[%s7 + $0x78] sm:$0xf]
    %v2772 = vld [vmem:[%s7 + $0x7c] sm:$0xf]
    %v2773 = vld [vmem:[%s7 + $0x80] sm:$0xf]
    %v2774 = vld [vmem:[%s7 + $0x84] sm:$0xf]
    %v2775 = vld [vmem:[%s7 + $0x88] sm:$0xf]
    %v2776 = vld [vmem:[%s7 + $0x8c] sm:$0xf]
    %v2777 = vld [vmem:[%s7 + $0x90] sm:$0xf]
    %v2778 = vld [vmem:[%s7 + $0x94] sm:$0xf]
    %v2779 = vld [vmem:[%s7 + $0x98] sm:$0xf]
    %v2780 = vld [vmem:[%s7 + $0x9c] sm:$0xf]
    %v2781 = vld [vmem:[%s7 + $0xa0] sm:$0xf]
    %v2782 = vld [vmem:[%s7 + $0xa4] sm:$0xf]
    %v2783 = vld [vmem:[%s7 + $0xa8] sm:$0xf]
    %v2784 = vld [vmem:[%s7 + $0xac] sm:$0xf]
    %v2785 = vld [vmem:[%s7 + $0xb0] sm:$0xf]
    %v2786 = vld [vmem:[%s7 + $0xb4] sm:$0xf]
    %v2787 = vld [vmem:[%s7 + $0xb8] sm:$0xf]
    %v2788 = vld [vmem:[%s7 + $0xbc] sm:$0xf]
    %v2789 = vld [vmem:[%s7 + $0xc0] sm:$0xf]
    %v2790 = vld [vmem:[%s7 + $0xc4] sm:$0xf]
    %v2791 = vld [vmem:[%s7 + $0xc8] sm:$0xf]
    %v2792 = vld [vmem:[%s7 + $0xcc] sm:$0xf]
    %v2793 = vld [vmem:[%s7 + $0xd0] sm:$0xf]
    %v2794 = vld [vmem:[%s7 + $0xd4] sm:$0xf]
    %v2795 = vld [vmem:[%s7 + $0xd8] sm:$0xf]
    %v2796 = vld [vmem:[%s7 + $0xdc] sm:$0xf]
    %v2797 = vld [vmem:[%s7 + $0xe0] sm:$0xf]
    %v2798 = vld [vmem:[%s7 + $0xe4] sm:$0xf]
    %v2799 = vld [vmem:[%s7 + $0xe8] sm:$0xf]
    %v2800 = vld [vmem:[%s7 + $0xec] sm:$0xf]
    %v2801 = vld [vmem:[%s7 + $0xf0] sm:$0xf]
    %v2802 = vld [vmem:[%s7 + $0xf4] sm:$0xf]
    %v2803 = vld [vmem:[%s7 + $0xf8] sm:$0xf]
    %v2804 = vld [vmem:[%s7 + $0xfc] sm:$0xf]
    %v2869 = vunpack.c.l.b16 %v2741
    %v2870 = vunpack.c.l.b16 %v2742
    %v2871 = vunpack.c.l.b16 %v2743
    %v2872 = vunpack.c.l.b16 %v2744
    %v2873 = vunpack.c.l.b16 %v2745
    %v2874 = vunpack.c.l.b16 %v2746
    %v2875 = vunpack.c.l.b16 %v2747
    %v2876 = vunpack.c.l.b16 %v2748
    %v2877 = vunpack.c.l.b16 %v2749
    %v2878 = vunpack.c.l.b16 %v2750
    %v2879 = vunpack.c.l.b16 %v2751
    %v2880 = vunpack.c.l.b16 %v2752
    %v2881 = vunpack.c.l.b16 %v2753
    %v2882 = vunpack.c.l.b16 %v2754
    %v2883 = vunpack.c.l.b16 %v2755
    %v2884 = vunpack.c.l.b16 %v2756
    %v2885 = vunpack.c.l.b16 %v2757
    %v2886 = vunpack.c.l.b16 %v2758
    %v2887 = vunpack.c.l.b16 %v2759
    %v2888 = vunpack.c.l.b16 %v2760
    %v2889 = vunpack.c.l.b16 %v2761
    %v2890 = vunpack.c.l.b16 %v2762
    %v2891 = vunpack.c.l.b16 %v2763
    %v2892 = vunpack.c.l.b16 %v2764
    %v2893 = vunpack.c.l.b16 %v2765
    %v2894 = vunpack.c.l.b16 %v2766
    %v2895 = vunpack.c.l.b16 %v2767
    %v2896 = vunpack.c.l.b16 %v2768
    %v2897 = vunpack.c.l.b16 %v2769
    %v2898 = vunpack.c.l.b16 %v2770
    %v2899 = vunpack.c.l.b16 %v2771
    %v2900 = vunpack.c.l.b16 %v2772
    %v2901 = vunpack.c.l.b16 %v2773
    %v2902 = vunpack.c.l.b16 %v2774
    %v2903 = vunpack.c.l.b16 %v2775
    %v2904 = vunpack.c.l.b16 %v2776
    %v2905 = vunpack.c.l.b16 %v2777
    %v2906 = vunpack.c.l.b16 %v2778
    %v2907 = vunpack.c.l.b16 %v2779
    %v2908 = vunpack.c.l.b16 %v2780
    %v2909 = vunpack.c.l.b16 %v2781
    %v2910 = vunpack.c.l.b16 %v2782
    %v2911 = vunpack.c.l.b16 %v2783
    %v2912 = vunpack.c.l.b16 %v2784
    %v2913 = vunpack.c.l.b16 %v2785
    %v2914 = vunpack.c.l.b16 %v2786
    %v2915 = vunpack.c.l.b16 %v2787
    %v2916 = vunpack.c.l.b16 %v2788
    %v2917 = vunpack.c.l.b16 %v2789
    %v2918 = vunpack.c.l.b16 %v2790
    %v2919 = vunpack.c.l.b16 %v2791
    %v2920 = vunpack.c.l.b16 %v2792
    %v2921 = vunpack.c.l.b16 %v2793
    %v2922 = vunpack.c.l.b16 %v2794
    %v2923 = vunpack.c.l.b16 %v2795
    %v2924 = vunpack.c.l.b16 %v2796
    %v2925 = vunpack.c.l.b16 %v2797
    %v2926 = vunpack.c.l.b16 %v2798
    %v2927 = vunpack.c.l.b16 %v2799
    %v2928 = vunpack.c.l.b16 %v2800
    %v2929 = vunpack.c.l.b16 %v2801
    %v2930 = vunpack.c.l.b16 %v2802
    %v2931 = vunpack.c.l.b16 %v2803
    %v2932 = vunpack.c.l.b16 %v2804
    %v2933 = vpack.c.b16 %v2870, %v2869
    %v2934 = vpack.c.b16 %v2872, %v2871
    %v2935 = vpack.c.b16 %v2874, %v2873
    %v2936 = vpack.c.b16 %v2876, %v2875
    %v2937 = vpack.c.b16 %v2878, %v2877
    %v2938 = vpack.c.b16 %v2880, %v2879
    %v2939 = vpack.c.b16 %v2882, %v2881
    %v2940 = vpack.c.b16 %v2884, %v2883
    %v2941 = vpack.c.b16 %v2886, %v2885
    %v2942 = vpack.c.b16 %v2888, %v2887
    %v2943 = vpack.c.b16 %v2890, %v2889
    %v2944 = vpack.c.b16 %v2892, %v2891
    %v2945 = vpack.c.b16 %v2894, %v2893
    %v2946 = vpack.c.b16 %v2896, %v2895
    %v2947 = vpack.c.b16 %v2898, %v2897
    %v2948 = vpack.c.b16 %v2900, %v2899
    %v2949 = vpack.c.b16 %v2902, %v2901
    %v2950 = vpack.c.b16 %v2904, %v2903
    %v2951 = vpack.c.b16 %v2906, %v2905
    %v2952 = vpack.c.b16 %v2908, %v2907
    %v2953 = vpack.c.b16 %v2910, %v2909
    %v2954 = vpack.c.b16 %v2912, %v2911
    %v2955 = vpack.c.b16 %v2914, %v2913
    %v2956 = vpack.c.b16 %v2916, %v2915
    %v2957 = vpack.c.b16 %v2918, %v2917
    %v2958 = vpack.c.b16 %v2920, %v2919
    %v2959 = vpack.c.b16 %v2922, %v2921
    %v2960 = vpack.c.b16 %v2924, %v2923
    %v2961 = vpack.c.b16 %v2926, %v2925
    %v2962 = vpack.c.b16 %v2928, %v2927
    %v2963 = vpack.c.b16 %v2930, %v2929
    %v2964 = vpack.c.b16 %v2932, %v2931
    %2997 = vmatprep.subr.bf16.mxu0 0
    %2998 = vmatpush1.bf16.msra.mxu0 %v2933
    %2999 = vmatprep.subr.bf16.mxu0 0
    %3000 = vmatpush1.bf16.msra.mxu0 %v2934
    %3001 = vmatprep.subr.bf16.mxu0 0
    %3002 = vmatpush1.bf16.msra.mxu0 %v2935
    %3003 = vmatprep.subr.bf16.mxu0 0
    %3004 = vmatpush1.bf16.msra.mxu0 %v2936
    %3005 = vmatprep.subr.bf16.mxu0 0
    %3006 = vmatpush1.bf16.msra.mxu0 %v2937
    %3007 = vmatprep.subr.bf16.mxu0 0
    %3008 = vmatpush1.bf16.msra.mxu0 %v2938
    %3009 = vmatprep.subr.bf16.mxu0 0
    %3010 = vmatpush1.bf16.msra.mxu0 %v2939
    %3011 = vmatprep.subr.bf16.mxu0 0
    %3012 = vmatpush1.bf16.msra.mxu0 %v2940
    %3013 = vmatprep.subr.bf16.mxu0 0
    %3014 = vmatpush1.bf16.msra.mxu0 %v2941
    %3015 = vmatprep.subr.bf16.mxu0 0
    %3016 = vmatpush1.bf16.msra.mxu0 %v2942
    %3017 = vmatprep.subr.bf16.mxu0 0
    %3018 = vmatpush1.bf16.msra.mxu0 %v2943
    %3019 = vmatprep.subr.bf16.mxu0 0
    %3020 = vmatpush1.bf16.msra.mxu0 %v2944
    %3021 = vmatprep.subr.bf16.mxu0 0
    %3022 = vmatpush1.bf16.msra.mxu0 %v2945
    %3023 = vmatprep.subr.bf16.mxu0 0
    %3024 = vmatpush1.bf16.msra.mxu0 %v2946
    %3025 = vmatprep.subr.bf16.mxu0 0
    %3026 = vmatpush1.bf16.msra.mxu0 %v2947
    %3027 = vmatprep.subr.bf16.mxu0 0
    %3028 = vmatpush1.bf16.msra.mxu0 %v2948
    %3029 = vmatprep.mubr.bf16.mxu0 %v2678
    %3030 = vmatmul.mubr.bf16.gmra.mrb[0].mxu0 %v2677
    %v3031 = vpop.f32.mrb[0].mxu0
    %v3032 = vadd.f32 0.0, %v3031
    %v3033 = vpop.f32.mrb[0].mxu0
    %v3034 = vpop.f32.mrb[0].mxu0
    %v3035 = vadd.f32 0.0, %v3034
    %v3036 = vpop.f32.mrb[0].mxu0
    %3037 = vmatprep.mubr.bf16.mxu0 %v2682
    %3038 = vmatmul.mubr.bf16.gmra.mrb[0].mxu0 %v2681
    %v3039 = vpop.f32.mrb[0].mxu0
    %v3040 = vadd.f32 0.0, %v3039
    %v3041 = vpop.f32.mrb[0].mxu0
    %v3042 = vpop.f32.mrb[0].mxu0
    %v3043 = vadd.f32 0.0, %v3042
    %v3044 = vpop.f32.mrb[0].mxu0
    %3045 = vmatprep.mubr.bf16.mxu0 %v2686
    %3046 = vmatmul.mubr.bf16.gmra.mrb[0].mxu0 %v2685
    %v3047 = vpop.f32.mrb[0].mxu0
    %v3048 = vadd.f32 0.0, %v3047
    %v3049 = vpop.f32.mrb[0].mxu0
    %v3050 = vpop.f32.mrb[0].mxu0
    %v3051 = vadd.f32 0.0, %v3050
    %v3052 = vpop.f32.mrb[0].mxu0
    %3053 = vmatprep.mubr.bf16.mxu0 %v2690
    %3054 = vmatmul.mubr.bf16.gmra.mrb[0].mxu0 %v2689
    %v3055 = vpop.f32.mrb[0].mxu0
    %v3056 = vadd.f32 0.0, %v3055
    %v3057 = vpop.f32.mrb[0].mxu0
    %v3058 = vpop.f32.mrb[0].mxu0
    %v3059 = vadd.f32 0.0, %v3058
    %v3060 = vpop.f32.mrb[0].mxu0
    %3061 = vmatprep.mubr.bf16.mxu0 %v2694
    %3062 = vmatmul.mubr.bf16.gmra.mrb[0].mxu0 %v2693
    %v3063 = vpop.f32.mrb[0].mxu0
    %v3064 = vadd.f32 0.0, %v3063
    %v3065 = vpop.f32.mrb[0].mxu0
    %v3066 = vpop.f32.mrb[0].mxu0
    %v3067 = vadd.f32 0.0, %v3066
    %v3068 = vpop.f32.mrb[0].mxu0
    %3069 = vmatprep.mubr.bf16.mxu0 %v2698
    %3070 = vmatmul.mubr.bf16.gmra.mrb[0].mxu0 %v2697
    %v3071 = vpop.f32.mrb[0].mxu0
    %v3072 = vadd.f32 0.0, %v3071
    %v3073 = vpop.f32.mrb[0].mxu0
    %v3074 = vpop.f32.mrb[0].mxu0
    %v3075 = vadd.f32 0.0, %v3074
    %v3076 = vpop.f32.mrb[0].mxu0
    %3077 = vmatprep.mubr.bf16.mxu0 %v2702
    %3078 = vmatmul.mubr.bf16.gmra.mrb[0].mxu0 %v2701
    %v3079 = vpop.f32.mrb[0].mxu0
    %v3080 = vadd.f32 0.0, %v3079
    %v3081 = vpop.f32.mrb[0].mxu0
    %v3082 = vpop.f32.mrb[0].mxu0
    %v3083 = vadd.f32 0.0, %v3082
    %v3084 = vpop.f32.mrb[0].mxu0
    %3085 = vmatprep.mubr.bf16.mxu0 %v2706
    %3086 = vmatmul.mubr.bf16.gmra.mrb[0].mxu0 %v2705
    %v3087 = vpop.f32.mrb[0].mxu0
    %v3088 = vadd.f32 0.0, %v3087
    %v3089 = vpop.f32.mrb[0].mxu0
    %v3090 = vpop.f32.mrb[0].mxu0
    %v3091 = vadd.f32 0.0, %v3090
    %v3092 = vpop.f32.mrb[0].mxu0
    %3093 = vmatprep.mubr.bf16.mxu0 %v2710
    %3094 = vmatmul.mubr.bf16.gmra.mrb[0].mxu0 %v2709
    %v3095 = vpop.f32.mrb[0].mxu0
    %v3096 = vadd.f32 0.0, %v3095
    %v3097 = vpop.f32.mrb[0].mxu0
    %v3098 = vpop.f32.mrb[0].mxu0
    %v3099 = vadd.f32 0.0, %v3098
    %v3100 = vpop.f32.mrb[0].mxu0
    %3101 = vmatprep.mubr.bf16.mxu0 %v2714
    %3102 = vmatmul.mubr.bf16.gmra.mrb[0].mxu0 %v2713
    %v3103 = vpop.f32.mrb[0].mxu0
    %v3104 = vadd.f32 0.0, %v3103
    %v3105 = vpop.f32.mrb[0].mxu0
    %v3106 = vpop.f32.mrb[0].mxu0
    %v3107 = vadd.f32 0.0, %v3106
    %v3108 = vpop.f32.mrb[0].mxu0
    %3109 = vmatprep.mubr.bf16.mxu0 %v2718
    %3110 = vmatmul.mubr.bf16.gmra.mrb[0].mxu0 %v2717
    %v3111 = vpop.f32.mrb[0].mxu0
    %v3112 = vadd.f32 0.0, %v3111
    %v3113 = vpop.f32.mrb[0].mxu0
    %v3114 = vpop.f32.mrb[0].mxu0
    %v3115 = vadd.f32 0.0, %v3114
    %v3116 = vpop.f32.mrb[0].mxu0
    %3117 = vmatprep.mubr.bf16.mxu0 %v2722
    %3118 = vmatmul.mubr.bf16.gmra.mrb[0].mxu0 %v2721
    %v3119 = vpop.f32.mrb[0].mxu0
    %v3120 = vadd.f32 0.0, %v3119
    %v3121 = vpop.f32.mrb[0].mxu0
    %v3122 = vpop.f32.mrb[0].mxu0
    %v3123 = vadd.f32 0.0, %v3122
    %v3124 = vpop.f32.mrb[0].mxu0
    %3125 = vmatprep.mubr.bf16.mxu0 %v2726
    %3126 = vmatmul.mubr.bf16.gmra.mrb[0].mxu0 %v2725
    %v3127 = vpop.f32.mrb[0].mxu0
    %v3128 = vadd.f32 0.0, %v3127
    %v3129 = vpop.f32.mrb[0].mxu0
    %v3130 = vpop.f32.mrb[0].mxu0
    %v3131 = vadd.f32 0.0, %v3130
    %v3132 = vpop.f32.mrb[0].mxu0
    %3133 = vmatprep.mubr.bf16.mxu0 %v2730
    %3134 = vmatmul.mubr.bf16.gmra.mrb[0].mxu0 %v2729
    %v3135 = vpop.f32.mrb[0].mxu0
    %v3136 = vadd.f32 0.0, %v3135
    %v3137 = vpop.f32.mrb[0].mxu0
    %v3138 = vpop.f32.mrb[0].mxu0
    %v3139 = vadd.f32 0.0, %v3138
    %v3140 = vpop.f32.mrb[0].mxu0
    %3141 = vmatprep.mubr.bf16.mxu0 %v2734
    %3142 = vmatmul.mubr.bf16.gmra.mrb[0].mxu0 %v2733
    %v3143 = vpop.f32.mrb[0].mxu0
    %v3144 = vadd.f32 0.0, %v3143
    %v3145 = vpop.f32.mrb[0].mxu0
    %v3146 = vpop.f32.mrb[0].mxu0
    %v3147 = vadd.f32 0.0, %v3146
    %v3148 = vpop.f32.mrb[0].mxu0
    %3149 = vmatprep.mubr.bf16.mxu0 %v2738
    %3150 = vmatmul.mubr.bf16.gmra.mrb[0].mxu0 %v2737
    %v3151 = vpop.f32.mrb[0].mxu0
    %v3152 = vadd.f32 0.0, %v3151
    %v3153 = vpop.f32.mrb[0].mxu0
    %v3154 = vpop.f32.mrb[0].mxu0
    %v3155 = vadd.f32 0.0, %v3154
    %v3156 = vpop.f32.mrb[0].mxu0
    %3157 = vdwg.mxu0
    %3158 = vmatprep.subr.bf16.mxu0 0
    %3159 = vmatpush1.bf16.msra.mxu0 %v2949
    %3160 = vmatprep.subr.bf16.mxu0 0
    %3161 = vmatpush1.bf16.msra.mxu0 %v2950
    %3162 = vmatprep.subr.bf16.mxu0 0
    %3163 = vmatpush1.bf16.msra.mxu0 %v2951
    %3164 = vmatprep.subr.bf16.mxu0 0
    %3165 = vmatpush1.bf16.msra.mxu0 %v2952
    %3166 = vmatprep.subr.bf16.mxu0 0
    %3167 = vmatpush1.bf16.msra.mxu0 %v2953
    %3168 = vmatprep.subr.bf16.mxu0 0
    %3169 = vmatpush1.bf16.msra.mxu0 %v2954
    %3170 = vmatprep.subr.bf16.mxu0 0
    %3171 = vmatpush1.bf16.msra.mxu0 %v2955
    %3172 = vmatprep.subr.bf16.mxu0 0
    %3173 = vmatpush1.bf16.msra.mxu0 %v2956
    %3174 = vmatprep.subr.bf16.mxu0 0
    %3175 = vmatpush1.bf16.msra.mxu0 %v2957
    %3176 = vmatprep.subr.bf16.mxu0 0
    %3177 = vmatpush1.bf16.msra.mxu0 %v2958
    %3178 = vmatprep.subr.bf16.mxu0 0
    %3179 = vmatpush1.bf16.msra.mxu0 %v2959
    %3180 = vmatprep.subr.bf16.mxu0 0
    %3181 = vmatpush1.bf16.msra.mxu0 %v2960
    %3182 = vmatprep.subr.bf16.mxu0 0
    %3183 = vmatpush1.bf16.msra.mxu0 %v2961
    %3184 = vmatprep.subr.bf16.mxu0 0
    %3185 = vmatpush1.bf16.msra.mxu0 %v2962
    %3186 = vmatprep.subr.bf16.mxu0 0
    %3187 = vmatpush1.bf16.msra.mxu0 %v2963
    %3188 = vmatprep.subr.bf16.mxu0 0
    %3189 = vmatpush1.bf16.msra.mxu0 %v2964
    %3190 = vmatprep.mubr.bf16.mxu0 %v2680
    %3191 = vmatmul.mubr.bf16.gmra.mrb[0].mxu0 %v2679
    %v3192 = vpop.f32.mrb[0].mxu0
    %v3193 = vadd.f32 %v3032, %v3192
    %v3194 = vpop.f32.mrb[0].mxu0
    %v3195 = vpop.f32.mrb[0].mxu0
    %v3196 = vadd.f32 %v3035, %v3195
    %v3197 = vpop.f32.mrb[0].mxu0
    %3198 = vmatprep.mubr.bf16.mxu0 %v2684
    %3199 = vmatmul.mubr.bf16.gmra.mrb[0].mxu0 %v2683
    %v3200 = vpop.f32.mrb[0].mxu0
    %v3201 = vadd.f32 %v3040, %v3200
    %v3202 = vpop.f32.mrb[0].mxu0
    %v3203 = vpop.f32.mrb[0].mxu0
    %v3204 = vadd.f32 %v3043, %v3203
    %v3205 = vpop.f32.mrb[0].mxu0
    %3206 = vmatprep.mubr.bf16.mxu0 %v2688
    %3207 = vmatmul.mubr.bf16.gmra.mrb[0].mxu0 %v2687
    %v3208 = vpop.f32.mrb[0].mxu0
    %v3209 = vadd.f32 %v3048, %v3208
    %v3210 = vpop.f32.mrb[0].mxu0
    %v3211 = vpop.f32.mrb[0].mxu0
    %v3212 = vadd.f32 %v3051, %v3211
    %v3213 = vpop.f32.mrb[0].mxu0
    %3214 = vmatprep.mubr.bf16.mxu0 %v2692
    %3215 = vmatmul.mubr.bf16.gmra.mrb[0].mxu0 %v2691
    %v3216 = vpop.f32.mrb[0].mxu0
    %v3217 = vadd.f32 %v3056, %v3216
    %v3218 = vpop.f32.mrb[0].mxu0
    %v3219 = vpop.f32.mrb[0].mxu0
    %v3220 = vadd.f32 %v3059, %v3219
    %v3221 = vpop.f32.mrb[0].mxu0
    %3222 = vmatprep.mubr.bf16.mxu0 %v2696
    %3223 = vmatmul.mubr.bf16.gmra.mrb[0].mxu0 %v2695
    %v3224 = vpop.f32.mrb[0].mxu0
    %v3225 = vadd.f32 %v3064, %v3224
    %v3226 = vpop.f32.mrb[0].mxu0
    %v3227 = vpop.f32.mrb[0].mxu0
    %v3228 = vadd.f32 %v3067, %v3227
    %v3229 = vpop.f32.mrb[0].mxu0
    %3230 = vmatprep.mubr.bf16.mxu0 %v2700
    %3231 = vmatmul.mubr.bf16.gmra.mrb[0].mxu0 %v2699
    %v3232 = vpop.f32.mrb[0].mxu0
    %v3233 = vadd.f32 %v3072, %v3232
    %v3234 = vpop.f32.mrb[0].mxu0
    %v3235 = vpop.f32.mrb[0].mxu0
    %v3236 = vadd.f32 %v3075, %v3235
    %v3237 = vpop.f32.mrb[0].mxu0
    %3238 = vmatprep.mubr.bf16.mxu0 %v2704
    %3239 = vmatmul.mubr.bf16.gmra.mrb[0].mxu0 %v2703
    %v3240 = vpop.f32.mrb[0].mxu0
    %v3241 = vadd.f32 %v3080, %v3240
    %v3242 = vpop.f32.mrb[0].mxu0
    %v3243 = vpop.f32.mrb[0].mxu0
    %v3244 = vadd.f32 %v3083, %v3243
    %v3245 = vpop.f32.mrb[0].mxu0
    %3246 = vmatprep.mubr.bf16.mxu0 %v2708
    %3247 = vmatmul.mubr.bf16.gmra.mrb[0].mxu0 %v2707
    %v3248 = vpop.f32.mrb[0].mxu0
    %v3249 = vadd.f32 %v3088, %v3248
    %v3250 = vpop.f32.mrb[0].mxu0
    %v3251 = vpop.f32.mrb[0].mxu0
    %v3252 = vadd.f32 %v3091, %v3251
    %v3253 = vpop.f32.mrb[0].mxu0
    %3254 = vmatprep.mubr.bf16.mxu0 %v2712
    %3255 = vmatmul.mubr.bf16.gmra.mrb[0].mxu0 %v2711
    %v3256 = vpop.f32.mrb[0].mxu0
    %v3257 = vadd.f32 %v3096, %v3256
    %v3258 = vpop.f32.mrb[0].mxu0
    %v3259 = vpop.f32.mrb[0].mxu0
    %v3260 = vadd.f32 %v3099, %v3259
    %v3261 = vpop.f32.mrb[0].mxu0
    %3262 = vmatprep.mubr.bf16.mxu0 %v2716
    %3263 = vmatmul.mubr.bf16.gmra.mrb[0].mxu0 %v2715
    %v3264 = vpop.f32.mrb[0].mxu0
    %v3265 = vadd.f32 %v3104, %v3264
    %v3266 = vpop.f32.mrb[0].mxu0
    %v3267 = vpop.f32.mrb[0].mxu0
    %v3268 = vadd.f32 %v3107, %v3267
    %v3269 = vpop.f32.mrb[0].mxu0
    %3270 = vmatprep.mubr.bf16.mxu0 %v2720
    %3271 = vmatmul.mubr.bf16.gmra.mrb[0].mxu0 %v2719
    %v3272 = vpop.f32.mrb[0].mxu0
    %v3273 = vadd.f32 %v3112, %v3272
    %v3274 = vpop.f32.mrb[0].mxu0
    %v3275 = vpop.f32.mrb[0].mxu0
    %v3276 = vadd.f32 %v3115, %v3275
    %v3277 = vpop.f32.mrb[0].mxu0
    %3278 = vmatprep.mubr.bf16.mxu0 %v2724
    %3279 = vmatmul.mubr.bf16.gmra.mrb[0].mxu0 %v2723
    %v3280 = vpop.f32.mrb[0].mxu0
    %v3281 = vadd.f32 %v3120, %v3280
    %v3282 = vpop.f32.mrb[0].mxu0
    %v3283 = vpop.f32.mrb[0].mxu0
    %v3284 = vadd.f32 %v3123, %v3283
    %v3285 = vpop.f32.mrb[0].mxu0
    %3286 = vmatprep.mubr.bf16.mxu0 %v2728
    %3287 = vmatmul.mubr.bf16.gmra.mrb[0].mxu0 %v2727
    %v3288 = vpop.f32.mrb[0].mxu0
    %v3289 = vadd.f32 %v3128, %v3288
    %v3290 = vpop.f32.mrb[0].mxu0
    %v3291 = vpop.f32.mrb[0].mxu0
    %v3292 = vadd.f32 %v3131, %v3291
    %v3293 = vpop.f32.mrb[0].mxu0
    %3294 = vmatprep.mubr.bf16.mxu0 %v2732
    %3295 = vmatmul.mubr.bf16.gmra.mrb[0].mxu0 %v2731
    %v3296 = vpop.f32.mrb[0].mxu0
    %v3297 = vadd.f32 %v3136, %v3296
    %v3298 = vpop.f32.mrb[0].mxu0
    %v3299 = vpop.f32.mrb[0].mxu0
    %v3300 = vadd.f32 %v3139, %v3299
    %v3301 = vpop.f32.mrb[0].mxu0
    %3302 = vmatprep.mubr.bf16.mxu0 %v2736
    %3303 = vmatmul.mubr.bf16.gmra.mrb[0].mxu0 %v2735
    %v3304 = vpop.f32.mrb[0].mxu0
    %v3305 = vadd.f32 %v3144, %v3304
    %v3306 = vpop.f32.mrb[0].mxu0
    %v3307 = vpop.f32.mrb[0].mxu0
    %v3308 = vadd.f32 %v3147, %v3307
    %v3309 = vpop.f32.mrb[0].mxu0
    %3310 = vmatprep.mubr.bf16.mxu0 %v2740
    %3311 = vmatmul.mubr.bf16.gmra.mrb[0].mxu0 %v2739
    %v3312 = vpop.f32.mrb[0].mxu0
    %v3313 = vadd.f32 %v3152, %v3312
    %v3314 = vpop.f32.mrb[0].mxu0
    %v3315 = vpop.f32.mrb[0].mxu0
    %v3316 = vadd.f32 %v3155, %v3315
    %v3317 = vpop.f32.mrb[0].mxu0
    %3318 = vdwg.mxu0
    %v3319 = vmax.f32 %v3193, %v3196
    %v3320 = vmax.f32 %v3319, %v3201
    %v3321 = vmax.f32 %v3320, %v3204
    %v3322 = vrot.slane %v3321, 4
    %v3323 = vmax.f32 %v3321, %v3322
    %v3324 = vrot.slane %v3323, 2
    %v3325 = vmax.f32 %v3323, %v3324
    %v3326 = vrot.slane %v3325, 1
    %v3327 = vmax.f32 %v3325, %v3326
    %v3328 = vmax.f32 %v3209, %v3212
    %v3329 = vmax.f32 %v3328, %v3217
    %v3330 = vmax.f32 %v3329, %v3220
    %v3331 = vrot.slane %v3330, 4
    %v3332 = vmax.f32 %v3330, %v3331
    %v3333 = vrot.slane %v3332, 2
    %v3334 = vmax.f32 %v3332, %v3333
    %v3335 = vrot.slane %v3334, 1
    %v3336 = vmax.f32 %v3334, %v3335
    %v3337 = vmax.f32 %v3225, %v3228
    %v3338 = vmax.f32 %v3337, %v3233
    %v3339 = vmax.f32 %v3338, %v3236
    %v3340 = vrot.slane %v3339, 4
    %v3341 = vmax.f32 %v3339, %v3340
    %v3342 = vrot.slane %v3341, 2
    %v3343 = vmax.f32 %v3341, %v3342
    %v3344 = vrot.slane %v3343, 1
    %v3345 = vmax.f32 %v3343, %v3344
    %v3346 = vmax.f32 %v3241, %v3244
    %v3347 = vmax.f32 %v3346, %v3249
    %v3348 = vmax.f32 %v3347, %v3252
    %v3349 = vrot.slane %v3348, 4
    %v3350 = vmax.f32 %v3348, %v3349
    %v3351 = vrot.slane %v3350, 2
    %v3352 = vmax.f32 %v3350, %v3351
    %v3353 = vrot.slane %v3352, 1
    %v3354 = vmax.f32 %v3352, %v3353
    %v3355 = vmax.f32 %v3257, %v3260
    %v3356 = vmax.f32 %v3355, %v3265
    %v3357 = vmax.f32 %v3356, %v3268
    %v3358 = vrot.slane %v3357, 4
    %v3359 = vmax.f32 %v3357, %v3358
    %v3360 = vrot.slane %v3359, 2
    %v3361 = vmax.f32 %v3359, %v3360
    %v3362 = vrot.slane %v3361, 1
    %v3363 = vmax.f32 %v3361, %v3362
    %v3364 = vmax.f32 %v3273, %v3276
    %v3365 = vmax.f32 %v3364, %v3281
    %v3366 = vmax.f32 %v3365, %v3284
    %v3367 = vrot.slane %v3366, 4
    %v3368 = vmax.f32 %v3366, %v3367
    %v3369 = vrot.slane %v3368, 2
    %v3370 = vmax.f32 %v3368, %v3369
    %v3371 = vrot.slane %v3370, 1
    %v3372 = vmax.f32 %v3370, %v3371
    %v3373 = vmax.f32 %v3289, %v3292
    %v3374 = vmax.f32 %v3373, %v3297
    %v3375 = vmax.f32 %v3374, %v3300
    %v3376 = vrot.slane %v3375, 4
    %v3377 = vmax.f32 %v3375, %v3376
    %v3378 = vrot.slane %v3377, 2
    %v3379 = vmax.f32 %v3377, %v3378
    %v3380 = vrot.slane %v3379, 1
    %v3381 = vmax.f32 %v3379, %v3380
    %v3382 = vmax.f32 %v3305, %v3308
    %v3383 = vmax.f32 %v3382, %v3313
    %v3384 = vmax.f32 %v3383, %v3316
    %v3385 = vrot.slane %v3384, 4
    %v3386 = vmax.f32 %v3384, %v3385
    %v3387 = vrot.slane %v3386, 2
    %v3388 = vmax.f32 %v3386, %v3387
    %v3389 = vrot.slane %v3388, 1
    %v3390 = vmax.f32 %v3388, %v3389
    %v3391 = vld [vmem:[%s8] sm:$0x1]
    %v3393 = vlaneseq
    %v3394 = vshrl.u32 %v3393, 7
    %v3395 = vsub.s32 0, %v3394
    %v3396 = vrot.slane %v3391, %v3395
    %v3398 = vadd.f32 %v3327, %v3396
    %v3399 = vadd.f32 %v3336, %v3396
    %v3400 = vadd.f32 %v3345, %v3396
    %v3401 = vadd.f32 %v3354, %v3396
    %v3402 = vadd.f32 %v3363, %v3396
    %v3403 = vadd.f32 %v3372, %v3396
    %v3404 = vadd.f32 %v3381, %v3396
    %v3405 = vadd.f32 %v3390, %v3396
    %v3414 = vrot.slane %v3399, 7
    %v3415 = vsel %vm992, %v3414, %v3398
    %v3416 = vrot.slane %v3400, 6
    %v3417 = vsel %vm994, %v3416, %v3415
    %v3418 = vrot.slane %v3401, 5
    %v3419 = vsel %vm996, %v3418, %v3417
    %v3420 = vrot.slane %v3402, 4
    %v3421 = vsel %vm998, %v3420, %v3419
    %v3422 = vrot.slane %v3403, 3
    %v3423 = vsel %vm1000, %v3422, %v3421
    %v3424 = vrot.slane %v3404, 2
    %v3425 = vsel %vm1002, %v3424, %v3423
    %v3426 = vrot.slane %v3405, 1
    %v3427 = vsel %vm1004, %v3426, %v3425
    %3429 = vst [vmem:[#allocation8] sm:$0xff] %v3427
    // Predicated region
    $region50: #{tpu_custom_call.1} parent=1 // pred_check
      _
    $region51: #{tpu_custom_call.1} parent=1 // pred_check_branch
      %3431 = sbr.rel (0) target = $region53
    $region52: #{tpu_custom_call.1} parent=1 // pred_region
      %s3433 = ssub.s32 128, 128
      %3434 = vsyncadd [#allocation4], %s3433
      %s3436 = sshll.u32 [#allocation8], 4
      %s3437 = int_to_ptr.vmem [resolvable:$true] %s3436
      %3439 = dma.vmem_to_hbm [thread:$0]  %s3437, 128, %s9, [#allocation4]
    $region53: #{tpu_custom_call.1} parent=1 // pred_fallthru
      _
    // Predicated region
    $region54: #{tpu_custom_call.1} parent=1 // pred_check
      _
    $region55: #{tpu_custom_call.1} parent=1 // pred_check_branch
      %3441 = sbr.rel (0) target = $region57
    $region56: #{tpu_custom_call.1} parent=1 // pred_region
      %3442 = dma.done [#allocation4], 128
    $region57: #{tpu_custom_call.1} parent=1 // pred_fallthru
      _
    %3443 = vsyncpa [#allocation3], 1
    %3444 = vsyncpa [#allocation6], 1
    %3445 = vsyncpa [#allocation4], 1

</llo_original>
